<compile_context>
chip_gen: v7x
topology: tpu7x:2x2x1
jax: 0.10.0
libtpu: 0.0.40
codegen_flags: <defaults>
</compile_context>

<pallas_src>
import math

import jax
import jax.numpy as jnp
from jax.experimental import pallas as pl
from jax.experimental.pallas import tpu as pltpu

QUANTILE_WIDTH = 0.3
QUANTILES = (0.5 - QUANTILE_WIDTH / 2.0, 0.5 + QUANTILE_WIDTH / 2.0)  # (0.35, 0.65)

_LANE = 128
_SUBLANE = 8
_INT32_MSB = -2147483648      # 0x80000000 bit pattern as int32
_INT32_LOW31 = 0x7FFFFFFF


def _bit_mask(bit):
    # int32 constant with only `bit` set (bit 31 == INT32_MIN bit pattern).
    return jnp.int32(_INT32_MSB) if bit == 31 else jnp.int32(1 << bit)


def _make_kernel(interp_specs, unique_ks):
    """Build the kernel with the static rank targets baked in.

    interp_specs: per quantile (q, k_lo, k_hi, frac) as Python numbers.
    unique_ks:    sorted tuple of distinct 0-indexed ranks to select.
    """

    def kernel(theta_ref, pred_ref, out_ref):
        t = theta_ref[...]                                  # (R, 128) f32, lane-dense
        bits = pltpu.bitcast(t, jnp.int32)                  # same-width reinterpret
        # Monotone int32 key: signed order of `keys` == float order of `t`.
        keys = jnp.where(bits >= 0, bits, bits ^ jnp.int32(_INT32_LOW31))

        msb = jnp.int32(_INT32_MSB)

        # Radix-select (bisection over key bits) for every needed rank, fused
        # so each bit step is one cheap O(N) count per rank target (int32).
        uresults = {k: jnp.int32(0) for k in unique_ks}
        for bit in range(31, -1, -1):
            mask = _bit_mask(bit)
            for k in unique_ks:
                ucand = uresults[k] | mask
                cand = ucand ^ msb                          # back to signed-compare domain
                cnt = jnp.sum((keys < cand).astype(jnp.int32))
                uresults[k] = jnp.where(cnt <= k, ucand, uresults[k])

        # Recover the float value of each selected order statistic via a masked
        # max (every element matching the key has the identical float value).
        neg_inf = jnp.float32(-jnp.inf)
        kth_value = {}
        for k in unique_ks:
            key_k = uresults[k] ^ msb
            kth_value[k] = jnp.max(jnp.where(keys == key_k, t, neg_inf))

        # Pinball-loss epilogue.
        pred = pred_ref[...]                                # (b, 2)
        total = jnp.float32(0.0)
        for qi, (q, k_lo, k_hi, frac) in enumerate(interp_specs):
            v_lo = kth_value[k_lo]
            v_hi = kth_value[k_hi]
            theta_q = v_lo + jnp.float32(frac) * (v_hi - v_lo)   # torch linear interp
            err = theta_q - pred[:, qi:qi + 1]                   # (b, 1)
            pinball = jnp.maximum(jnp.float32(q) * err,
                                  jnp.float32(q - 1.0) * err)
            total = total + jnp.mean(pinball)                    # mean over batch
        out_ref[...] = jnp.full((1, 1), total, dtype=jnp.float32)

    return kernel


def quantile_loss(predicted_quantiles, thetas):
    """Pallas equivalent of LossFunctionQuantiles.forward."""
    predicted_quantiles = predicted_quantiles.astype(jnp.float32)
    thetas = thetas.astype(jnp.float32)
    b, n = thetas.shape
    n_real = b * n

    # Static rank targets for torch.quantile's linear interpolation.
    interp_specs = []
    ks = set()
    for q in QUANTILES:
        pos = q * (n_real - 1)
        k_lo = int(math.floor(pos))
        k_hi = int(math.ceil(pos))
        frac = float(pos - k_lo)
        interp_specs.append((float(q), k_lo, k_hi, frac))
        ks.add(k_lo)
        ks.add(k_hi)
    unique_ks = tuple(sorted(ks))

    # Lane-dense slab: pad flat thetas to a multiple of 8*128 with float32 max
    # (padding sorts last, so order statistics for k < n_real are unaffected).
    chunk = _LANE * _SUBLANE
    n_pad = -(-n_real // chunk) * chunk
    flat = thetas.reshape(-1)
    if n_pad > n_real:
        flat = jnp.pad(flat, (0, n_pad - n_real),
                       constant_values=float(jnp.finfo(jnp.float32).max))
    slab = flat.reshape(n_pad // _LANE, _LANE)

    slab_bytes = n_pad * 4
    vmem_limit = int(min(64 * 1024 * 1024, max(16 * 1024 * 1024, 10 * slab_bytes)))

    kernel = _make_kernel(tuple(interp_specs), unique_ks)
    out = pl.pallas_call(
        kernel,
        out_shape=jax.ShapeDtypeStruct((1, 1), jnp.float32),
        in_specs=[
            pl.BlockSpec(memory_space=pltpu.MemorySpace.VMEM),
            pl.BlockSpec(memory_space=pltpu.MemorySpace.VMEM),
        ],
        out_specs=pl.BlockSpec(memory_space=pltpu.MemorySpace.VMEM),
        compiler_params=pltpu.CompilerParams(vmem_limit_bytes=vmem_limit),
    )(slab, predicted_quantiles)
    return out[0, 0]


def quantile_loss_ref(predicted_quantiles, thetas):
    """Pure-JAX reference mirroring the PyTorch module."""
    qs = jnp.array(QUANTILES, dtype=jnp.float32)                         # (2,)
    theta_q = jnp.quantile(thetas.reshape(-1).astype(jnp.float32), qs)   # (2,)
    err = theta_q[None, :] - predicted_quantiles.astype(jnp.float32)     # (b, 2)
    pin = jnp.maximum(qs * err, (qs - 1.0) * err)                        # (b, 2)
    return jnp.sum(jnp.mean(pin, axis=0))


if __name__ == "__main__":
    key = jax.random.PRNGKey(0)
    k1, k2 = jax.random.split(key)
    b, n = 2, 8
    thetas = jax.random.normal(k1, (b, n), dtype=jnp.float32)
    predicted_quantiles = jax.random.normal(k2, (b, 2), dtype=jnp.float32)

    loss = quantile_loss(predicted_quantiles, thetas)
    jax.block_until_ready(loss)

    ref = quantile_loss_ref(predicted_quantiles, thetas)
    assert jnp.allclose(loss, ref, atol=1e-5, rtol=1e-5), (loss, ref)

    print("KERNEL_OK")
</pallas_src>

<mosaic_0001>
module attributes {stable_mosaic.version = 11 : i64} {
  func.func @kernel(%arg0: memref<8x128xf32, #tpu.memory_space<vmem>>, %arg1: memref<2x2xf32, #tpu.memory_space<vmem>>, %arg2: memref<1x1xf32, #tpu.memory_space<vmem>>) attributes {dimension_semantics = [], scalar_prefetch = 0 : i64, scratch_operands = 0 : i64, tpu.core_type = #tpu.core_type<tc>} {
    %c0 = arith.constant 0 : index
    %c0_0 = arith.constant 0 : index
    %0 = vector.load %arg0[%c0, %c0_0] : memref<8x128xf32, #tpu.memory_space<vmem>>, vector<8x128xf32>
    %1 = tpu.bitcast %0 : vector<8x128xf32> -> vector<8x128xi32>
    %c0_i32 = arith.constant 0 : i32
    %2 = vector.broadcast %c0_i32 : i32 to vector<8x128xi32>
    %3 = arith.cmpi sge, %1, %2 : vector<8x128xi32>
    %c2147483647_i32 = arith.constant 2147483647 : i32
    %4 = vector.broadcast %c2147483647_i32 : i32 to vector<8x128xi32>
    %5 = arith.xori %1, %4 : vector<8x128xi32>
    %6 = arith.select %3, %1, %5 : vector<8x128xi1>, vector<8x128xi32>
    %c0_i32_1 = arith.constant 0 : i32
    %c-2147483648_i32 = arith.constant -2147483648 : i32
    %7 = arith.ori %c0_i32_1, %c-2147483648_i32 : i32
    %c-2147483648_i32_2 = arith.constant -2147483648 : i32
    %8 = arith.xori %7, %c-2147483648_i32_2 : i32
    %9 = vector.broadcast %8 : i32 to vector<8x128xi32>
    %10 = arith.cmpi slt, %6, %9 : vector<8x128xi32>
    %11 = arith.extui %10 : vector<8x128xi1> to vector<8x128xi32>
    %12 = vector.shape_cast %11 : vector<8x128xi32> to vector<1x8x128xi32>
    %cst = arith.constant dense<0> : vector<1xi32>
    %13 = vector.multi_reduction <add>, %12, %cst [1, 2] : vector<1x8x128xi32> to vector<1xi32>
    %14 = vector.shape_cast %13 : vector<1xi32> to vector<1x1x1xi32>
    %15 = vector.extract %14[0, 0, 0] : i32 from vector<1x1x1xi32>
    %c5_i32 = arith.constant 5 : i32
    %16 = arith.cmpi sle, %15, %c5_i32 : i32
    %c0_i32_3 = arith.constant 0 : i32
    %17 = arith.select %16, %7, %c0_i32_3 : i32
    %c0_i32_4 = arith.constant 0 : i32
    %c-2147483648_i32_5 = arith.constant -2147483648 : i32
    %18 = arith.ori %c0_i32_4, %c-2147483648_i32_5 : i32
    %c-2147483648_i32_6 = arith.constant -2147483648 : i32
    %19 = arith.xori %18, %c-2147483648_i32_6 : i32
    %20 = vector.broadcast %19 : i32 to vector<8x128xi32>
    %21 = arith.cmpi slt, %6, %20 : vector<8x128xi32>
    %22 = arith.extui %21 : vector<8x128xi1> to vector<8x128xi32>
    %23 = vector.shape_cast %22 : vector<8x128xi32> to vector<1x8x128xi32>
    %cst_7 = arith.constant dense<0> : vector<1xi32>
    %24 = vector.multi_reduction <add>, %23, %cst_7 [1, 2] : vector<1x8x128xi32> to vector<1xi32>
    %25 = vector.shape_cast %24 : vector<1xi32> to vector<1x1x1xi32>
    %26 = vector.extract %25[0, 0, 0] : i32 from vector<1x1x1xi32>
    %c6_i32 = arith.constant 6 : i32
    %27 = arith.cmpi sle, %26, %c6_i32 : i32
    %c0_i32_8 = arith.constant 0 : i32
    %28 = arith.select %27, %18, %c0_i32_8 : i32
    %c0_i32_9 = arith.constant 0 : i32
    %c-2147483648_i32_10 = arith.constant -2147483648 : i32
    %29 = arith.ori %c0_i32_9, %c-2147483648_i32_10 : i32
    %c-2147483648_i32_11 = arith.constant -2147483648 : i32
    %30 = arith.xori %29, %c-2147483648_i32_11 : i32
    %31 = vector.broadcast %30 : i32 to vector<8x128xi32>
    %32 = arith.cmpi slt, %6, %31 : vector<8x128xi32>
    %33 = arith.extui %32 : vector<8x128xi1> to vector<8x128xi32>
    %34 = vector.shape_cast %33 : vector<8x128xi32> to vector<1x8x128xi32>
    %cst_12 = arith.constant dense<0> : vector<1xi32>
    %35 = vector.multi_reduction <add>, %34, %cst_12 [1, 2] : vector<1x8x128xi32> to vector<1xi32>
    %36 = vector.shape_cast %35 : vector<1xi32> to vector<1x1x1xi32>
    %37 = vector.extract %36[0, 0, 0] : i32 from vector<1x1x1xi32>
    %c9_i32 = arith.constant 9 : i32
    %38 = arith.cmpi sle, %37, %c9_i32 : i32
    %c0_i32_13 = arith.constant 0 : i32
    %39 = arith.select %38, %29, %c0_i32_13 : i32
    %c0_i32_14 = arith.constant 0 : i32
    %c-2147483648_i32_15 = arith.constant -2147483648 : i32
    %40 = arith.ori %c0_i32_14, %c-2147483648_i32_15 : i32
    %c-2147483648_i32_16 = arith.constant -2147483648 : i32
    %41 = arith.xori %40, %c-2147483648_i32_16 : i32
    %42 = vector.broadcast %41 : i32 to vector<8x128xi32>
    %43 = arith.cmpi slt, %6, %42 : vector<8x128xi32>
    %44 = arith.extui %43 : vector<8x128xi1> to vector<8x128xi32>
    %45 = vector.shape_cast %44 : vector<8x128xi32> to vector<1x8x128xi32>
    %cst_17 = arith.constant dense<0> : vector<1xi32>
    %46 = vector.multi_reduction <add>, %45, %cst_17 [1, 2] : vector<1x8x128xi32> to vector<1xi32>
    %47 = vector.shape_cast %46 : vector<1xi32> to vector<1x1x1xi32>
    %48 = vector.extract %47[0, 0, 0] : i32 from vector<1x1x1xi32>
    %c10_i32 = arith.constant 10 : i32
    %49 = arith.cmpi sle, %48, %c10_i32 : i32
    %c0_i32_18 = arith.constant 0 : i32
    %50 = arith.select %49, %40, %c0_i32_18 : i32
    %c1073741824_i32 = arith.constant 1073741824 : i32
    %51 = arith.ori %17, %c1073741824_i32 : i32
    %c-2147483648_i32_19 = arith.constant -2147483648 : i32
    %52 = arith.xori %51, %c-2147483648_i32_19 : i32
    %53 = vector.broadcast %52 : i32 to vector<8x128xi32>
    %54 = arith.cmpi slt, %6, %53 : vector<8x128xi32>
    %55 = arith.extui %54 : vector<8x128xi1> to vector<8x128xi32>
    %56 = vector.shape_cast %55 : vector<8x128xi32> to vector<1x8x128xi32>
    %cst_20 = arith.constant dense<0> : vector<1xi32>
    %57 = vector.multi_reduction <add>, %56, %cst_20 [1, 2] : vector<1x8x128xi32> to vector<1xi32>
    %58 = vector.shape_cast %57 : vector<1xi32> to vector<1x1x1xi32>
    %59 = vector.extract %58[0, 0, 0] : i32 from vector<1x1x1xi32>
    %c5_i32_21 = arith.constant 5 : i32
    %60 = arith.cmpi sle, %59, %c5_i32_21 : i32
    %61 = arith.select %60, %51, %17 : i32
    %c1073741824_i32_22 = arith.constant 1073741824 : i32
    %62 = arith.ori %28, %c1073741824_i32_22 : i32
    %c-2147483648_i32_23 = arith.constant -2147483648 : i32
    %63 = arith.xori %62, %c-2147483648_i32_23 : i32
    %64 = vector.broadcast %63 : i32 to vector<8x128xi32>
    %65 = arith.cmpi slt, %6, %64 : vector<8x128xi32>
    %66 = arith.extui %65 : vector<8x128xi1> to vector<8x128xi32>
    %67 = vector.shape_cast %66 : vector<8x128xi32> to vector<1x8x128xi32>
    %cst_24 = arith.constant dense<0> : vector<1xi32>
    %68 = vector.multi_reduction <add>, %67, %cst_24 [1, 2] : vector<1x8x128xi32> to vector<1xi32>
    %69 = vector.shape_cast %68 : vector<1xi32> to vector<1x1x1xi32>
    %70 = vector.extract %69[0, 0, 0] : i32 from vector<1x1x1xi32>
    %c6_i32_25 = arith.constant 6 : i32
    %71 = arith.cmpi sle, %70, %c6_i32_25 : i32
    %72 = arith.select %71, %62, %28 : i32
    %c1073741824_i32_26 = arith.constant 1073741824 : i32
    %73 = arith.ori %39, %c1073741824_i32_26 : i32
    %c-2147483648_i32_27 = arith.constant -2147483648 : i32
    %74 = arith.xori %73, %c-2147483648_i32_27 : i32
    %75 = vector.broadcast %74 : i32 to vector<8x128xi32>
    %76 = arith.cmpi slt, %6, %75 : vector<8x128xi32>
    %77 = arith.extui %76 : vector<8x128xi1> to vector<8x128xi32>
    %78 = vector.shape_cast %77 : vector<8x128xi32> to vector<1x8x128xi32>
    %cst_28 = arith.constant dense<0> : vector<1xi32>
    %79 = vector.multi_reduction <add>, %78, %cst_28 [1, 2] : vector<1x8x128xi32> to vector<1xi32>
    %80 = vector.shape_cast %79 : vector<1xi32> to vector<1x1x1xi32>
    %81 = vector.extract %80[0, 0, 0] : i32 from vector<1x1x1xi32>
    %c9_i32_29 = arith.constant 9 : i32
    %82 = arith.cmpi sle, %81, %c9_i32_29 : i32
    %83 = arith.select %82, %73, %39 : i32
    %c1073741824_i32_30 = arith.constant 1073741824 : i32
    %84 = arith.ori %50, %c1073741824_i32_30 : i32
    %c-2147483648_i32_31 = arith.constant -2147483648 : i32
    %85 = arith.xori %84, %c-2147483648_i32_31 : i32
    %86 = vector.broadcast %85 : i32 to vector<8x128xi32>
    %87 = arith.cmpi slt, %6, %86 : vector<8x128xi32>
    %88 = arith.extui %87 : vector<8x128xi1> to vector<8x128xi32>
    %89 = vector.shape_cast %88 : vector<8x128xi32> to vector<1x8x128xi32>
    %cst_32 = arith.constant dense<0> : vector<1xi32>
    %90 = vector.multi_reduction <add>, %89, %cst_32 [1, 2] : vector<1x8x128xi32> to vector<1xi32>
    %91 = vector.shape_cast %90 : vector<1xi32> to vector<1x1x1xi32>
    %92 = vector.extract %91[0, 0, 0] : i32 from vector<1x1x1xi32>
    %c10_i32_33 = arith.constant 10 : i32
    %93 = arith.cmpi sle, %92, %c10_i32_33 : i32
    %94 = arith.select %93, %84, %50 : i32
    %c536870912_i32 = arith.constant 536870912 : i32
    %95 = arith.ori %61, %c536870912_i32 : i32
    %c-2147483648_i32_34 = arith.constant -2147483648 : i32
    %96 = arith.xori %95, %c-2147483648_i32_34 : i32
    %97 = vector.broadcast %96 : i32 to vector<8x128xi32>
    %98 = arith.cmpi slt, %6, %97 : vector<8x128xi32>
    %99 = arith.extui %98 : vector<8x128xi1> to vector<8x128xi32>
    %100 = vector.shape_cast %99 : vector<8x128xi32> to vector<1x8x128xi32>
    %cst_35 = arith.constant dense<0> : vector<1xi32>
    %101 = vector.multi_reduction <add>, %100, %cst_35 [1, 2] : vector<1x8x128xi32> to vector<1xi32>
    %102 = vector.shape_cast %101 : vector<1xi32> to vector<1x1x1xi32>
    %103 = vector.extract %102[0, 0, 0] : i32 from vector<1x1x1xi32>
    %c5_i32_36 = arith.constant 5 : i32
    %104 = arith.cmpi sle, %103, %c5_i32_36 : i32
    %105 = arith.select %104, %95, %61 : i32
    %c536870912_i32_37 = arith.constant 536870912 : i32
    %106 = arith.ori %72, %c536870912_i32_37 : i32
    %c-2147483648_i32_38 = arith.constant -2147483648 : i32
    %107 = arith.xori %106, %c-2147483648_i32_38 : i32
    %108 = vector.broadcast %107 : i32 to vector<8x128xi32>
    %109 = arith.cmpi slt, %6, %108 : vector<8x128xi32>
    %110 = arith.extui %109 : vector<8x128xi1> to vector<8x128xi32>
    %111 = vector.shape_cast %110 : vector<8x128xi32> to vector<1x8x128xi32>
    %cst_39 = arith.constant dense<0> : vector<1xi32>
    %112 = vector.multi_reduction <add>, %111, %cst_39 [1, 2] : vector<1x8x128xi32> to vector<1xi32>
    %113 = vector.shape_cast %112 : vector<1xi32> to vector<1x1x1xi32>
    %114 = vector.extract %113[0, 0, 0] : i32 from vector<1x1x1xi32>
    %c6_i32_40 = arith.constant 6 : i32
    %115 = arith.cmpi sle, %114, %c6_i32_40 : i32
    %116 = arith.select %115, %106, %72 : i32
    %c536870912_i32_41 = arith.constant 536870912 : i32
    %117 = arith.ori %83, %c536870912_i32_41 : i32
    %c-2147483648_i32_42 = arith.constant -2147483648 : i32
    %118 = arith.xori %117, %c-2147483648_i32_42 : i32
    %119 = vector.broadcast %118 : i32 to vector<8x128xi32>
    %120 = arith.cmpi slt, %6, %119 : vector<8x128xi32>
    %121 = arith.extui %120 : vector<8x128xi1> to vector<8x128xi32>
    %122 = vector.shape_cast %121 : vector<8x128xi32> to vector<1x8x128xi32>
    %cst_43 = arith.constant dense<0> : vector<1xi32>
    %123 = vector.multi_reduction <add>, %122, %cst_43 [1, 2] : vector<1x8x128xi32> to vector<1xi32>
    %124 = vector.shape_cast %123 : vector<1xi32> to vector<1x1x1xi32>
    %125 = vector.extract %124[0, 0, 0] : i32 from vector<1x1x1xi32>
    %c9_i32_44 = arith.constant 9 : i32
    %126 = arith.cmpi sle, %125, %c9_i32_44 : i32
    %127 = arith.select %126, %117, %83 : i32
    %c536870912_i32_45 = arith.constant 536870912 : i32
    %128 = arith.ori %94, %c536870912_i32_45 : i32
    %c-2147483648_i32_46 = arith.constant -2147483648 : i32
    %129 = arith.xori %128, %c-2147483648_i32_46 : i32
    %130 = vector.broadcast %129 : i32 to vector<8x128xi32>
    %131 = arith.cmpi slt, %6, %130 : vector<8x128xi32>
    %132 = arith.extui %131 : vector<8x128xi1> to vector<8x128xi32>
    %133 = vector.shape_cast %132 : vector<8x128xi32> to vector<1x8x128xi32>
    %cst_47 = arith.constant dense<0> : vector<1xi32>
    %134 = vector.multi_reduction <add>, %133, %cst_47 [1, 2] : vector<1x8x128xi32> to vector<1xi32>
    %135 = vector.shape_cast %134 : vector<1xi32> to vector<1x1x1xi32>
    %136 = vector.extract %135[0, 0, 0] : i32 from vector<1x1x1xi32>
    %c10_i32_48 = arith.constant 10 : i32
    %137 = arith.cmpi sle, %136, %c10_i32_48 : i32
    %138 = arith.select %137, %128, %94 : i32
    %c268435456_i32 = arith.constant 268435456 : i32
    %139 = arith.ori %105, %c268435456_i32 : i32
    %c-2147483648_i32_49 = arith.constant -2147483648 : i32
    %140 = arith.xori %139, %c-2147483648_i32_49 : i32
    %141 = vector.broadcast %140 : i32 to vector<8x128xi32>
    %142 = arith.cmpi slt, %6, %141 : vector<8x128xi32>
    %143 = arith.extui %142 : vector<8x128xi1> to vector<8x128xi32>
    %144 = vector.shape_cast %143 : vector<8x128xi32> to vector<1x8x128xi32>
    %cst_50 = arith.constant dense<0> : vector<1xi32>
    %145 = vector.multi_reduction <add>, %144, %cst_50 [1, 2] : vector<1x8x128xi32> to vector<1xi32>
    %146 = vector.shape_cast %145 : vector<1xi32> to vector<1x1x1xi32>
    %147 = vector.extract %146[0, 0, 0] : i32 from vector<1x1x1xi32>
    %c5_i32_51 = arith.constant 5 : i32
    %148 = arith.cmpi sle, %147, %c5_i32_51 : i32
    %149 = arith.select %148, %139, %105 : i32
    %c268435456_i32_52 = arith.constant 268435456 : i32
    %150 = arith.ori %116, %c268435456_i32_52 : i32
    %c-2147483648_i32_53 = arith.constant -2147483648 : i32
    %151 = arith.xori %150, %c-2147483648_i32_53 : i32
    %152 = vector.broadcast %151 : i32 to vector<8x128xi32>
    %153 = arith.cmpi slt, %6, %152 : vector<8x128xi32>
    %154 = arith.extui %153 : vector<8x128xi1> to vector<8x128xi32>
    %155 = vector.shape_cast %154 : vector<8x128xi32> to vector<1x8x128xi32>
    %cst_54 = arith.constant dense<0> : vector<1xi32>
    %156 = vector.multi_reduction <add>, %155, %cst_54 [1, 2] : vector<1x8x128xi32> to vector<1xi32>
    %157 = vector.shape_cast %156 : vector<1xi32> to vector<1x1x1xi32>
    %158 = vector.extract %157[0, 0, 0] : i32 from vector<1x1x1xi32>
    %c6_i32_55 = arith.constant 6 : i32
    %159 = arith.cmpi sle, %158, %c6_i32_55 : i32
    %160 = arith.select %159, %150, %116 : i32
    %c268435456_i32_56 = arith.constant 268435456 : i32
    %161 = arith.ori %127, %c268435456_i32_56 : i32
    %c-2147483648_i32_57 = arith.constant -2147483648 : i32
    %162 = arith.xori %161, %c-2147483648_i32_57 : i32
    %163 = vector.broadcast %162 : i32 to vector<8x128xi32>
    %164 = arith.cmpi slt, %6, %163 : vector<8x128xi32>
    %165 = arith.extui %164 : vector<8x128xi1> to vector<8x128xi32>
    %166 = vector.shape_cast %165 : vector<8x128xi32> to vector<1x8x128xi32>
    %cst_58 = arith.constant dense<0> : vector<1xi32>
    %167 = vector.multi_reduction <add>, %166, %cst_58 [1, 2] : vector<1x8x128xi32> to vector<1xi32>
    %168 = vector.shape_cast %167 : vector<1xi32> to vector<1x1x1xi32>
    %169 = vector.extract %168[0, 0, 0] : i32 from vector<1x1x1xi32>
    %c9_i32_59 = arith.constant 9 : i32
    %170 = arith.cmpi sle, %169, %c9_i32_59 : i32
    %171 = arith.select %170, %161, %127 : i32
    %c268435456_i32_60 = arith.constant 268435456 : i32
    %172 = arith.ori %138, %c268435456_i32_60 : i32
    %c-2147483648_i32_61 = arith.constant -2147483648 : i32
    %173 = arith.xori %172, %c-2147483648_i32_61 : i32
    %174 = vector.broadcast %173 : i32 to vector<8x128xi32>
    %175 = arith.cmpi slt, %6, %174 : vector<8x128xi32>
    %176 = arith.extui %175 : vector<8x128xi1> to vector<8x128xi32>
    %177 = vector.shape_cast %176 : vector<8x128xi32> to vector<1x8x128xi32>
    %cst_62 = arith.constant dense<0> : vector<1xi32>
    %178 = vector.multi_reduction <add>, %177, %cst_62 [1, 2] : vector<1x8x128xi32> to vector<1xi32>
    %179 = vector.shape_cast %178 : vector<1xi32> to vector<1x1x1xi32>
    %180 = vector.extract %179[0, 0, 0] : i32 from vector<1x1x1xi32>
    %c10_i32_63 = arith.constant 10 : i32
    %181 = arith.cmpi sle, %180, %c10_i32_63 : i32
    %182 = arith.select %181, %172, %138 : i32
    %c134217728_i32 = arith.constant 134217728 : i32
    %183 = arith.ori %149, %c134217728_i32 : i32
    %c-2147483648_i32_64 = arith.constant -2147483648 : i32
    %184 = arith.xori %183, %c-2147483648_i32_64 : i32
    %185 = vector.broadcast %184 : i32 to vector<8x128xi32>
    %186 = arith.cmpi slt, %6, %185 : vector<8x128xi32>
    %187 = arith.extui %186 : vector<8x128xi1> to vector<8x128xi32>
    %188 = vector.shape_cast %187 : vector<8x128xi32> to vector<1x8x128xi32>
    %cst_65 = arith.constant dense<0> : vector<1xi32>
    %189 = vector.multi_reduction <add>, %188, %cst_65 [1, 2] : vector<1x8x128xi32> to vector<1xi32>
    %190 = vector.shape_cast %189 : vector<1xi32> to vector<1x1x1xi32>
    %191 = vector.extract %190[0, 0, 0] : i32 from vector<1x1x1xi32>
    %c5_i32_66 = arith.constant 5 : i32
    %192 = arith.cmpi sle, %191, %c5_i32_66 : i32
    %193 = arith.select %192, %183, %149 : i32
    %c134217728_i32_67 = arith.constant 134217728 : i32
    %194 = arith.ori %160, %c134217728_i32_67 : i32
    %c-2147483648_i32_68 = arith.constant -2147483648 : i32
    %195 = arith.xori %194, %c-2147483648_i32_68 : i32
    %196 = vector.broadcast %195 : i32 to vector<8x128xi32>
    %197 = arith.cmpi slt, %6, %196 : vector<8x128xi32>
    %198 = arith.extui %197 : vector<8x128xi1> to vector<8x128xi32>
    %199 = vector.shape_cast %198 : vector<8x128xi32> to vector<1x8x128xi32>
    %cst_69 = arith.constant dense<0> : vector<1xi32>
    %200 = vector.multi_reduction <add>, %199, %cst_69 [1, 2] : vector<1x8x128xi32> to vector<1xi32>
    %201 = vector.shape_cast %200 : vector<1xi32> to vector<1x1x1xi32>
    %202 = vector.extract %201[0, 0, 0] : i32 from vector<1x1x1xi32>
    %c6_i32_70 = arith.constant 6 : i32
    %203 = arith.cmpi sle, %202, %c6_i32_70 : i32
    %204 = arith.select %203, %194, %160 : i32
    %c134217728_i32_71 = arith.constant 134217728 : i32
    %205 = arith.ori %171, %c134217728_i32_71 : i32
    %c-2147483648_i32_72 = arith.constant -2147483648 : i32
    %206 = arith.xori %205, %c-2147483648_i32_72 : i32
    %207 = vector.broadcast %206 : i32 to vector<8x128xi32>
    %208 = arith.cmpi slt, %6, %207 : vector<8x128xi32>
    %209 = arith.extui %208 : vector<8x128xi1> to vector<8x128xi32>
    %210 = vector.shape_cast %209 : vector<8x128xi32> to vector<1x8x128xi32>
    %cst_73 = arith.constant dense<0> : vector<1xi32>
    %211 = vector.multi_reduction <add>, %210, %cst_73 [1, 2] : vector<1x8x128xi32> to vector<1xi32>
    %212 = vector.shape_cast %211 : vector<1xi32> to vector<1x1x1xi32>
    %213 = vector.extract %212[0, 0, 0] : i32 from vector<1x1x1xi32>
    %c9_i32_74 = arith.constant 9 : i32
    %214 = arith.cmpi sle, %213, %c9_i32_74 : i32
    %215 = arith.select %214, %205, %171 : i32
    %c134217728_i32_75 = arith.constant 134217728 : i32
    %216 = arith.ori %182, %c134217728_i32_75 : i32
    %c-2147483648_i32_76 = arith.constant -2147483648 : i32
    %217 = arith.xori %216, %c-2147483648_i32_76 : i32
    %218 = vector.broadcast %217 : i32 to vector<8x128xi32>
    %219 = arith.cmpi slt, %6, %218 : vector<8x128xi32>
    %220 = arith.extui %219 : vector<8x128xi1> to vector<8x128xi32>
    %221 = vector.shape_cast %220 : vector<8x128xi32> to vector<1x8x128xi32>
    %cst_77 = arith.constant dense<0> : vector<1xi32>
    %222 = vector.multi_reduction <add>, %221, %cst_77 [1, 2] : vector<1x8x128xi32> to vector<1xi32>
    %223 = vector.shape_cast %222 : vector<1xi32> to vector<1x1x1xi32>
    %224 = vector.extract %223[0, 0, 0] : i32 from vector<1x1x1xi32>
    %c10_i32_78 = arith.constant 10 : i32
    %225 = arith.cmpi sle, %224, %c10_i32_78 : i32
    %226 = arith.select %225, %216, %182 : i32
    %c67108864_i32 = arith.constant 67108864 : i32
    %227 = arith.ori %193, %c67108864_i32 : i32
    %c-2147483648_i32_79 = arith.constant -2147483648 : i32
    %228 = arith.xori %227, %c-2147483648_i32_79 : i32
    %229 = vector.broadcast %228 : i32 to vector<8x128xi32>
    %230 = arith.cmpi slt, %6, %229 : vector<8x128xi32>
    %231 = arith.extui %230 : vector<8x128xi1> to vector<8x128xi32>
    %232 = vector.shape_cast %231 : vector<8x128xi32> to vector<1x8x128xi32>
    %cst_80 = arith.constant dense<0> : vector<1xi32>
    %233 = vector.multi_reduction <add>, %232, %cst_80 [1, 2] : vector<1x8x128xi32> to vector<1xi32>
    %234 = vector.shape_cast %233 : vector<1xi32> to vector<1x1x1xi32>
    %235 = vector.extract %234[0, 0, 0] : i32 from vector<1x1x1xi32>
    %c5_i32_81 = arith.constant 5 : i32
    %236 = arith.cmpi sle, %235, %c5_i32_81 : i32
    %237 = arith.select %236, %227, %193 : i32
    %c67108864_i32_82 = arith.constant 67108864 : i32
    %238 = arith.ori %204, %c67108864_i32_82 : i32
    %c-2147483648_i32_83 = arith.constant -2147483648 : i32
    %239 = arith.xori %238, %c-2147483648_i32_83 : i32
    %240 = vector.broadcast %239 : i32 to vector<8x128xi32>
    %241 = arith.cmpi slt, %6, %240 : vector<8x128xi32>
    %242 = arith.extui %241 : vector<8x128xi1> to vector<8x128xi32>
    %243 = vector.shape_cast %242 : vector<8x128xi32> to vector<1x8x128xi32>
    %cst_84 = arith.constant dense<0> : vector<1xi32>
    %244 = vector.multi_reduction <add>, %243, %cst_84 [1, 2] : vector<1x8x128xi32> to vector<1xi32>
    %245 = vector.shape_cast %244 : vector<1xi32> to vector<1x1x1xi32>
    %246 = vector.extract %245[0, 0, 0] : i32 from vector<1x1x1xi32>
    %c6_i32_85 = arith.constant 6 : i32
    %247 = arith.cmpi sle, %246, %c6_i32_85 : i32
    %248 = arith.select %247, %238, %204 : i32
    %c67108864_i32_86 = arith.constant 67108864 : i32
    %249 = arith.ori %215, %c67108864_i32_86 : i32
    %c-2147483648_i32_87 = arith.constant -2147483648 : i32
    %250 = arith.xori %249, %c-2147483648_i32_87 : i32
    %251 = vector.broadcast %250 : i32 to vector<8x128xi32>
    %252 = arith.cmpi slt, %6, %251 : vector<8x128xi32>
    %253 = arith.extui %252 : vector<8x128xi1> to vector<8x128xi32>
    %254 = vector.shape_cast %253 : vector<8x128xi32> to vector<1x8x128xi32>
    %cst_88 = arith.constant dense<0> : vector<1xi32>
    %255 = vector.multi_reduction <add>, %254, %cst_88 [1, 2] : vector<1x8x128xi32> to vector<1xi32>
    %256 = vector.shape_cast %255 : vector<1xi32> to vector<1x1x1xi32>
    %257 = vector.extract %256[0, 0, 0] : i32 from vector<1x1x1xi32>
    %c9_i32_89 = arith.constant 9 : i32
    %258 = arith.cmpi sle, %257, %c9_i32_89 : i32
    %259 = arith.select %258, %249, %215 : i32
    %c67108864_i32_90 = arith.constant 67108864 : i32
    %260 = arith.ori %226, %c67108864_i32_90 : i32
    %c-2147483648_i32_91 = arith.constant -2147483648 : i32
    %261 = arith.xori %260, %c-2147483648_i32_91 : i32
    %262 = vector.broadcast %261 : i32 to vector<8x128xi32>
    %263 = arith.cmpi slt, %6, %262 : vector<8x128xi32>
    %264 = arith.extui %263 : vector<8x128xi1> to vector<8x128xi32>
    %265 = vector.shape_cast %264 : vector<8x128xi32> to vector<1x8x128xi32>
    %cst_92 = arith.constant dense<0> : vector<1xi32>
    %266 = vector.multi_reduction <add>, %265, %cst_92 [1, 2] : vector<1x8x128xi32> to vector<1xi32>
    %267 = vector.shape_cast %266 : vector<1xi32> to vector<1x1x1xi32>
    %268 = vector.extract %267[0, 0, 0] : i32 from vector<1x1x1xi32>
    %c10_i32_93 = arith.constant 10 : i32
    %269 = arith.cmpi sle, %268, %c10_i32_93 : i32
    %270 = arith.select %269, %260, %226 : i32
    %c33554432_i32 = arith.constant 33554432 : i32
    %271 = arith.ori %237, %c33554432_i32 : i32
    %c-2147483648_i32_94 = arith.constant -2147483648 : i32
    %272 = arith.xori %271, %c-2147483648_i32_94 : i32
    %273 = vector.broadcast %272 : i32 to vector<8x128xi32>
    %274 = arith.cmpi slt, %6, %273 : vector<8x128xi32>
    %275 = arith.extui %274 : vector<8x128xi1> to vector<8x128xi32>
    %276 = vector.shape_cast %275 : vector<8x128xi32> to vector<1x8x128xi32>
    %cst_95 = arith.constant dense<0> : vector<1xi32>
    %277 = vector.multi_reduction <add>, %276, %cst_95 [1, 2] : vector<1x8x128xi32> to vector<1xi32>
    %278 = vector.shape_cast %277 : vector<1xi32> to vector<1x1x1xi32>
    %279 = vector.extract %278[0, 0, 0] : i32 from vector<1x1x1xi32>
    %c5_i32_96 = arith.constant 5 : i32
    %280 = arith.cmpi sle, %279, %c5_i32_96 : i32
    %281 = arith.select %280, %271, %237 : i32
    %c33554432_i32_97 = arith.constant 33554432 : i32
    %282 = arith.ori %248, %c33554432_i32_97 : i32
    %c-2147483648_i32_98 = arith.constant -2147483648 : i32
    %283 = arith.xori %282, %c-2147483648_i32_98 : i32
    %284 = vector.broadcast %283 : i32 to vector<8x128xi32>
    %285 = arith.cmpi slt, %6, %284 : vector<8x128xi32>
    %286 = arith.extui %285 : vector<8x128xi1> to vector<8x128xi32>
    %287 = vector.shape_cast %286 : vector<8x128xi32> to vector<1x8x128xi32>
    %cst_99 = arith.constant dense<0> : vector<1xi32>
    %288 = vector.multi_reduction <add>, %287, %cst_99 [1, 2] : vector<1x8x128xi32> to vector<1xi32>
    %289 = vector.shape_cast %288 : vector<1xi32> to vector<1x1x1xi32>
    %290 = vector.extract %289[0, 0, 0] : i32 from vector<1x1x1xi32>
    %c6_i32_100 = arith.constant 6 : i32
    %291 = arith.cmpi sle, %290, %c6_i32_100 : i32
    %292 = arith.select %291, %282, %248 : i32
    %c33554432_i32_101 = arith.constant 33554432 : i32
    %293 = arith.ori %259, %c33554432_i32_101 : i32
    %c-2147483648_i32_102 = arith.constant -2147483648 : i32
    %294 = arith.xori %293, %c-2147483648_i32_102 : i32
    %295 = vector.broadcast %294 : i32 to vector<8x128xi32>
    %296 = arith.cmpi slt, %6, %295 : vector<8x128xi32>
    %297 = arith.extui %296 : vector<8x128xi1> to vector<8x128xi32>
    %298 = vector.shape_cast %297 : vector<8x128xi32> to vector<1x8x128xi32>
    %cst_103 = arith.constant dense<0> : vector<1xi32>
    %299 = vector.multi_reduction <add>, %298, %cst_103 [1, 2] : vector<1x8x128xi32> to vector<1xi32>
    %300 = vector.shape_cast %299 : vector<1xi32> to vector<1x1x1xi32>
    %301 = vector.extract %300[0, 0, 0] : i32 from vector<1x1x1xi32>
    %c9_i32_104 = arith.constant 9 : i32
    %302 = arith.cmpi sle, %301, %c9_i32_104 : i32
    %303 = arith.select %302, %293, %259 : i32
    %c33554432_i32_105 = arith.constant 33554432 : i32
    %304 = arith.ori %270, %c33554432_i32_105 : i32
    %c-2147483648_i32_106 = arith.constant -2147483648 : i32
    %305 = arith.xori %304, %c-2147483648_i32_106 : i32
    %306 = vector.broadcast %305 : i32 to vector<8x128xi32>
    %307 = arith.cmpi slt, %6, %306 : vector<8x128xi32>
    %308 = arith.extui %307 : vector<8x128xi1> to vector<8x128xi32>
    %309 = vector.shape_cast %308 : vector<8x128xi32> to vector<1x8x128xi32>
    %cst_107 = arith.constant dense<0> : vector<1xi32>
    %310 = vector.multi_reduction <add>, %309, %cst_107 [1, 2] : vector<1x8x128xi32> to vector<1xi32>
    %311 = vector.shape_cast %310 : vector<1xi32> to vector<1x1x1xi32>
    %312 = vector.extract %311[0, 0, 0] : i32 from vector<1x1x1xi32>
    %c10_i32_108 = arith.constant 10 : i32
    %313 = arith.cmpi sle, %312, %c10_i32_108 : i32
    %314 = arith.select %313, %304, %270 : i32
    %c16777216_i32 = arith.constant 16777216 : i32
    %315 = arith.ori %281, %c16777216_i32 : i32
    %c-2147483648_i32_109 = arith.constant -2147483648 : i32
    %316 = arith.xori %315, %c-2147483648_i32_109 : i32
    %317 = vector.broadcast %316 : i32 to vector<8x128xi32>
    %318 = arith.cmpi slt, %6, %317 : vector<8x128xi32>
    %319 = arith.extui %318 : vector<8x128xi1> to vector<8x128xi32>
    %320 = vector.shape_cast %319 : vector<8x128xi32> to vector<1x8x128xi32>
    %cst_110 = arith.constant dense<0> : vector<1xi32>
    %321 = vector.multi_reduction <add>, %320, %cst_110 [1, 2] : vector<1x8x128xi32> to vector<1xi32>
    %322 = vector.shape_cast %321 : vector<1xi32> to vector<1x1x1xi32>
    %323 = vector.extract %322[0, 0, 0] : i32 from vector<1x1x1xi32>
    %c5_i32_111 = arith.constant 5 : i32
    %324 = arith.cmpi sle, %323, %c5_i32_111 : i32
    %325 = arith.select %324, %315, %281 : i32
    %c16777216_i32_112 = arith.constant 16777216 : i32
    %326 = arith.ori %292, %c16777216_i32_112 : i32
    %c-2147483648_i32_113 = arith.constant -2147483648 : i32
    %327 = arith.xori %326, %c-2147483648_i32_113 : i32
    %328 = vector.broadcast %327 : i32 to vector<8x128xi32>
    %329 = arith.cmpi slt, %6, %328 : vector<8x128xi32>
    %330 = arith.extui %329 : vector<8x128xi1> to vector<8x128xi32>
    %331 = vector.shape_cast %330 : vector<8x128xi32> to vector<1x8x128xi32>
    %cst_114 = arith.constant dense<0> : vector<1xi32>
    %332 = vector.multi_reduction <add>, %331, %cst_114 [1, 2] : vector<1x8x128xi32> to vector<1xi32>
    %333 = vector.shape_cast %332 : vector<1xi32> to vector<1x1x1xi32>
    %334 = vector.extract %333[0, 0, 0] : i32 from vector<1x1x1xi32>
    %c6_i32_115 = arith.constant 6 : i32
    %335 = arith.cmpi sle, %334, %c6_i32_115 : i32
    %336 = arith.select %335, %326, %292 : i32
    %c16777216_i32_116 = arith.constant 16777216 : i32
    %337 = arith.ori %303, %c16777216_i32_116 : i32
    %c-2147483648_i32_117 = arith.constant -2147483648 : i32
    %338 = arith.xori %337, %c-2147483648_i32_117 : i32
    %339 = vector.broadcast %338 : i32 to vector<8x128xi32>
    %340 = arith.cmpi slt, %6, %339 : vector<8x128xi32>
    %341 = arith.extui %340 : vector<8x128xi1> to vector<8x128xi32>
    %342 = vector.shape_cast %341 : vector<8x128xi32> to vector<1x8x128xi32>
    %cst_118 = arith.constant dense<0> : vector<1xi32>
    %343 = vector.multi_reduction <add>, %342, %cst_118 [1, 2] : vector<1x8x128xi32> to vector<1xi32>
    %344 = vector.shape_cast %343 : vector<1xi32> to vector<1x1x1xi32>
    %345 = vector.extract %344[0, 0, 0] : i32 from vector<1x1x1xi32>
    %c9_i32_119 = arith.constant 9 : i32
    %346 = arith.cmpi sle, %345, %c9_i32_119 : i32
    %347 = arith.select %346, %337, %303 : i32
    %c16777216_i32_120 = arith.constant 16777216 : i32
    %348 = arith.ori %314, %c16777216_i32_120 : i32
    %c-2147483648_i32_121 = arith.constant -2147483648 : i32
    %349 = arith.xori %348, %c-2147483648_i32_121 : i32
    %350 = vector.broadcast %349 : i32 to vector<8x128xi32>
    %351 = arith.cmpi slt, %6, %350 : vector<8x128xi32>
    %352 = arith.extui %351 : vector<8x128xi1> to vector<8x128xi32>
    %353 = vector.shape_cast %352 : vector<8x128xi32> to vector<1x8x128xi32>
    %cst_122 = arith.constant dense<0> : vector<1xi32>
    %354 = vector.multi_reduction <add>, %353, %cst_122 [1, 2] : vector<1x8x128xi32> to vector<1xi32>
    %355 = vector.shape_cast %354 : vector<1xi32> to vector<1x1x1xi32>
    %356 = vector.extract %355[0, 0, 0] : i32 from vector<1x1x1xi32>
    %c10_i32_123 = arith.constant 10 : i32
    %357 = arith.cmpi sle, %356, %c10_i32_123 : i32
    %358 = arith.select %357, %348, %314 : i32
    %c8388608_i32 = arith.constant 8388608 : i32
    %359 = arith.ori %325, %c8388608_i32 : i32
    %c-2147483648_i32_124 = arith.constant -2147483648 : i32
    %360 = arith.xori %359, %c-2147483648_i32_124 : i32
    %361 = vector.broadcast %360 : i32 to vector<8x128xi32>
    %362 = arith.cmpi slt, %6, %361 : vector<8x128xi32>
    %363 = arith.extui %362 : vector<8x128xi1> to vector<8x128xi32>
    %364 = vector.shape_cast %363 : vector<8x128xi32> to vector<1x8x128xi32>
    %cst_125 = arith.constant dense<0> : vector<1xi32>
    %365 = vector.multi_reduction <add>, %364, %cst_125 [1, 2] : vector<1x8x128xi32> to vector<1xi32>
    %366 = vector.shape_cast %365 : vector<1xi32> to vector<1x1x1xi32>
    %367 = vector.extract %366[0, 0, 0] : i32 from vector<1x1x1xi32>
    %c5_i32_126 = arith.constant 5 : i32
    %368 = arith.cmpi sle, %367, %c5_i32_126 : i32
    %369 = arith.select %368, %359, %325 : i32
    %c8388608_i32_127 = arith.constant 8388608 : i32
    %370 = arith.ori %336, %c8388608_i32_127 : i32
    %c-2147483648_i32_128 = arith.constant -2147483648 : i32
    %371 = arith.xori %370, %c-2147483648_i32_128 : i32
    %372 = vector.broadcast %371 : i32 to vector<8x128xi32>
    %373 = arith.cmpi slt, %6, %372 : vector<8x128xi32>
    %374 = arith.extui %373 : vector<8x128xi1> to vector<8x128xi32>
    %375 = vector.shape_cast %374 : vector<8x128xi32> to vector<1x8x128xi32>
    %cst_129 = arith.constant dense<0> : vector<1xi32>
    %376 = vector.multi_reduction <add>, %375, %cst_129 [1, 2] : vector<1x8x128xi32> to vector<1xi32>
    %377 = vector.shape_cast %376 : vector<1xi32> to vector<1x1x1xi32>
    %378 = vector.extract %377[0, 0, 0] : i32 from vector<1x1x1xi32>
    %c6_i32_130 = arith.constant 6 : i32
    %379 = arith.cmpi sle, %378, %c6_i32_130 : i32
    %380 = arith.select %379, %370, %336 : i32
    %c8388608_i32_131 = arith.constant 8388608 : i32
    %381 = arith.ori %347, %c8388608_i32_131 : i32
    %c-2147483648_i32_132 = arith.constant -2147483648 : i32
    %382 = arith.xori %381, %c-2147483648_i32_132 : i32
    %383 = vector.broadcast %382 : i32 to vector<8x128xi32>
    %384 = arith.cmpi slt, %6, %383 : vector<8x128xi32>
    %385 = arith.extui %384 : vector<8x128xi1> to vector<8x128xi32>
    %386 = vector.shape_cast %385 : vector<8x128xi32> to vector<1x8x128xi32>
    %cst_133 = arith.constant dense<0> : vector<1xi32>
    %387 = vector.multi_reduction <add>, %386, %cst_133 [1, 2] : vector<1x8x128xi32> to vector<1xi32>
    %388 = vector.shape_cast %387 : vector<1xi32> to vector<1x1x1xi32>
    %389 = vector.extract %388[0, 0, 0] : i32 from vector<1x1x1xi32>
    %c9_i32_134 = arith.constant 9 : i32
    %390 = arith.cmpi sle, %389, %c9_i32_134 : i32
    %391 = arith.select %390, %381, %347 : i32
    %c8388608_i32_135 = arith.constant 8388608 : i32
    %392 = arith.ori %358, %c8388608_i32_135 : i32
    %c-2147483648_i32_136 = arith.constant -2147483648 : i32
    %393 = arith.xori %392, %c-2147483648_i32_136 : i32
    %394 = vector.broadcast %393 : i32 to vector<8x128xi32>
    %395 = arith.cmpi slt, %6, %394 : vector<8x128xi32>
    %396 = arith.extui %395 : vector<8x128xi1> to vector<8x128xi32>
    %397 = vector.shape_cast %396 : vector<8x128xi32> to vector<1x8x128xi32>
    %cst_137 = arith.constant dense<0> : vector<1xi32>
    %398 = vector.multi_reduction <add>, %397, %cst_137 [1, 2] : vector<1x8x128xi32> to vector<1xi32>
    %399 = vector.shape_cast %398 : vector<1xi32> to vector<1x1x1xi32>
    %400 = vector.extract %399[0, 0, 0] : i32 from vector<1x1x1xi32>
    %c10_i32_138 = arith.constant 10 : i32
    %401 = arith.cmpi sle, %400, %c10_i32_138 : i32
    %402 = arith.select %401, %392, %358 : i32
    %c4194304_i32 = arith.constant 4194304 : i32
    %403 = arith.ori %369, %c4194304_i32 : i32
    %c-2147483648_i32_139 = arith.constant -2147483648 : i32
    %404 = arith.xori %403, %c-2147483648_i32_139 : i32
    %405 = vector.broadcast %404 : i32 to vector<8x128xi32>
    %406 = arith.cmpi slt, %6, %405 : vector<8x128xi32>
    %407 = arith.extui %406 : vector<8x128xi1> to vector<8x128xi32>
    %408 = vector.shape_cast %407 : vector<8x128xi32> to vector<1x8x128xi32>
    %cst_140 = arith.constant dense<0> : vector<1xi32>
    %409 = vector.multi_reduction <add>, %408, %cst_140 [1, 2] : vector<1x8x128xi32> to vector<1xi32>
    %410 = vector.shape_cast %409 : vector<1xi32> to vector<1x1x1xi32>
    %411 = vector.extract %410[0, 0, 0] : i32 from vector<1x1x1xi32>
    %c5_i32_141 = arith.constant 5 : i32
    %412 = arith.cmpi sle, %411, %c5_i32_141 : i32
    %413 = arith.select %412, %403, %369 : i32
    %c4194304_i32_142 = arith.constant 4194304 : i32
    %414 = arith.ori %380, %c4194304_i32_142 : i32
    %c-2147483648_i32_143 = arith.constant -2147483648 : i32
    %415 = arith.xori %414, %c-2147483648_i32_143 : i32
    %416 = vector.broadcast %415 : i32 to vector<8x128xi32>
    %417 = arith.cmpi slt, %6, %416 : vector<8x128xi32>
    %418 = arith.extui %417 : vector<8x128xi1> to vector<8x128xi32>
    %419 = vector.shape_cast %418 : vector<8x128xi32> to vector<1x8x128xi32>
    %cst_144 = arith.constant dense<0> : vector<1xi32>
    %420 = vector.multi_reduction <add>, %419, %cst_144 [1, 2] : vector<1x8x128xi32> to vector<1xi32>
    %421 = vector.shape_cast %420 : vector<1xi32> to vector<1x1x1xi32>
    %422 = vector.extract %421[0, 0, 0] : i32 from vector<1x1x1xi32>
    %c6_i32_145 = arith.constant 6 : i32
    %423 = arith.cmpi sle, %422, %c6_i32_145 : i32
    %424 = arith.select %423, %414, %380 : i32
    %c4194304_i32_146 = arith.constant 4194304 : i32
    %425 = arith.ori %391, %c4194304_i32_146 : i32
    %c-2147483648_i32_147 = arith.constant -2147483648 : i32
    %426 = arith.xori %425, %c-2147483648_i32_147 : i32
    %427 = vector.broadcast %426 : i32 to vector<8x128xi32>
    %428 = arith.cmpi slt, %6, %427 : vector<8x128xi32>
    %429 = arith.extui %428 : vector<8x128xi1> to vector<8x128xi32>
    %430 = vector.shape_cast %429 : vector<8x128xi32> to vector<1x8x128xi32>
    %cst_148 = arith.constant dense<0> : vector<1xi32>
    %431 = vector.multi_reduction <add>, %430, %cst_148 [1, 2] : vector<1x8x128xi32> to vector<1xi32>
    %432 = vector.shape_cast %431 : vector<1xi32> to vector<1x1x1xi32>
    %433 = vector.extract %432[0, 0, 0] : i32 from vector<1x1x1xi32>
    %c9_i32_149 = arith.constant 9 : i32
    %434 = arith.cmpi sle, %433, %c9_i32_149 : i32
    %435 = arith.select %434, %425, %391 : i32
    %c4194304_i32_150 = arith.constant 4194304 : i32
    %436 = arith.ori %402, %c4194304_i32_150 : i32
    %c-2147483648_i32_151 = arith.constant -2147483648 : i32
    %437 = arith.xori %436, %c-2147483648_i32_151 : i32
    %438 = vector.broadcast %437 : i32 to vector<8x128xi32>
    %439 = arith.cmpi slt, %6, %438 : vector<8x128xi32>
    %440 = arith.extui %439 : vector<8x128xi1> to vector<8x128xi32>
    %441 = vector.shape_cast %440 : vector<8x128xi32> to vector<1x8x128xi32>
    %cst_152 = arith.constant dense<0> : vector<1xi32>
    %442 = vector.multi_reduction <add>, %441, %cst_152 [1, 2] : vector<1x8x128xi32> to vector<1xi32>
    %443 = vector.shape_cast %442 : vector<1xi32> to vector<1x1x1xi32>
    %444 = vector.extract %443[0, 0, 0] : i32 from vector<1x1x1xi32>
    %c10_i32_153 = arith.constant 10 : i32
    %445 = arith.cmpi sle, %444, %c10_i32_153 : i32
    %446 = arith.select %445, %436, %402 : i32
    %c2097152_i32 = arith.constant 2097152 : i32
    %447 = arith.ori %413, %c2097152_i32 : i32
    %c-2147483648_i32_154 = arith.constant -2147483648 : i32
    %448 = arith.xori %447, %c-2147483648_i32_154 : i32
    %449 = vector.broadcast %448 : i32 to vector<8x128xi32>
    %450 = arith.cmpi slt, %6, %449 : vector<8x128xi32>
    %451 = arith.extui %450 : vector<8x128xi1> to vector<8x128xi32>
    %452 = vector.shape_cast %451 : vector<8x128xi32> to vector<1x8x128xi32>
    %cst_155 = arith.constant dense<0> : vector<1xi32>
    %453 = vector.multi_reduction <add>, %452, %cst_155 [1, 2] : vector<1x8x128xi32> to vector<1xi32>
    %454 = vector.shape_cast %453 : vector<1xi32> to vector<1x1x1xi32>
    %455 = vector.extract %454[0, 0, 0] : i32 from vector<1x1x1xi32>
    %c5_i32_156 = arith.constant 5 : i32
    %456 = arith.cmpi sle, %455, %c5_i32_156 : i32
    %457 = arith.select %456, %447, %413 : i32
    %c2097152_i32_157 = arith.constant 2097152 : i32
    %458 = arith.ori %424, %c2097152_i32_157 : i32
    %c-2147483648_i32_158 = arith.constant -2147483648 : i32
    %459 = arith.xori %458, %c-2147483648_i32_158 : i32
    %460 = vector.broadcast %459 : i32 to vector<8x128xi32>
    %461 = arith.cmpi slt, %6, %460 : vector<8x128xi32>
    %462 = arith.extui %461 : vector<8x128xi1> to vector<8x128xi32>
    %463 = vector.shape_cast %462 : vector<8x128xi32> to vector<1x8x128xi32>
    %cst_159 = arith.constant dense<0> : vector<1xi32>
    %464 = vector.multi_reduction <add>, %463, %cst_159 [1, 2] : vector<1x8x128xi32> to vector<1xi32>
    %465 = vector.shape_cast %464 : vector<1xi32> to vector<1x1x1xi32>
    %466 = vector.extract %465[0, 0, 0] : i32 from vector<1x1x1xi32>
    %c6_i32_160 = arith.constant 6 : i32
    %467 = arith.cmpi sle, %466, %c6_i32_160 : i32
    %468 = arith.select %467, %458, %424 : i32
    %c2097152_i32_161 = arith.constant 2097152 : i32
    %469 = arith.ori %435, %c2097152_i32_161 : i32
    %c-2147483648_i32_162 = arith.constant -2147483648 : i32
    %470 = arith.xori %469, %c-2147483648_i32_162 : i32
    %471 = vector.broadcast %470 : i32 to vector<8x128xi32>
    %472 = arith.cmpi slt, %6, %471 : vector<8x128xi32>
    %473 = arith.extui %472 : vector<8x128xi1> to vector<8x128xi32>
    %474 = vector.shape_cast %473 : vector<8x128xi32> to vector<1x8x128xi32>
    %cst_163 = arith.constant dense<0> : vector<1xi32>
    %475 = vector.multi_reduction <add>, %474, %cst_163 [1, 2] : vector<1x8x128xi32> to vector<1xi32>
    %476 = vector.shape_cast %475 : vector<1xi32> to vector<1x1x1xi32>
    %477 = vector.extract %476[0, 0, 0] : i32 from vector<1x1x1xi32>
    %c9_i32_164 = arith.constant 9 : i32
    %478 = arith.cmpi sle, %477, %c9_i32_164 : i32
    %479 = arith.select %478, %469, %435 : i32
    %c2097152_i32_165 = arith.constant 2097152 : i32
    %480 = arith.ori %446, %c2097152_i32_165 : i32
    %c-2147483648_i32_166 = arith.constant -2147483648 : i32
    %481 = arith.xori %480, %c-2147483648_i32_166 : i32
    %482 = vector.broadcast %481 : i32 to vector<8x128xi32>
    %483 = arith.cmpi slt, %6, %482 : vector<8x128xi32>
    %484 = arith.extui %483 : vector<8x128xi1> to vector<8x128xi32>
    %485 = vector.shape_cast %484 : vector<8x128xi32> to vector<1x8x128xi32>
    %cst_167 = arith.constant dense<0> : vector<1xi32>
    %486 = vector.multi_reduction <add>, %485, %cst_167 [1, 2] : vector<1x8x128xi32> to vector<1xi32>
    %487 = vector.shape_cast %486 : vector<1xi32> to vector<1x1x1xi32>
    %488 = vector.extract %487[0, 0, 0] : i32 from vector<1x1x1xi32>
    %c10_i32_168 = arith.constant 10 : i32
    %489 = arith.cmpi sle, %488, %c10_i32_168 : i32
    %490 = arith.select %489, %480, %446 : i32
    %c1048576_i32 = arith.constant 1048576 : i32
    %491 = arith.ori %457, %c1048576_i32 : i32
    %c-2147483648_i32_169 = arith.constant -2147483648 : i32
    %492 = arith.xori %491, %c-2147483648_i32_169 : i32
    %493 = vector.broadcast %492 : i32 to vector<8x128xi32>
    %494 = arith.cmpi slt, %6, %493 : vector<8x128xi32>
    %495 = arith.extui %494 : vector<8x128xi1> to vector<8x128xi32>
    %496 = vector.shape_cast %495 : vector<8x128xi32> to vector<1x8x128xi32>
    %cst_170 = arith.constant dense<0> : vector<1xi32>
    %497 = vector.multi_reduction <add>, %496, %cst_170 [1, 2] : vector<1x8x128xi32> to vector<1xi32>
    %498 = vector.shape_cast %497 : vector<1xi32> to vector<1x1x1xi32>
    %499 = vector.extract %498[0, 0, 0] : i32 from vector<1x1x1xi32>
    %c5_i32_171 = arith.constant 5 : i32
    %500 = arith.cmpi sle, %499, %c5_i32_171 : i32
    %501 = arith.select %500, %491, %457 : i32
    %c1048576_i32_172 = arith.constant 1048576 : i32
    %502 = arith.ori %468, %c1048576_i32_172 : i32
    %c-2147483648_i32_173 = arith.constant -2147483648 : i32
    %503 = arith.xori %502, %c-2147483648_i32_173 : i32
    %504 = vector.broadcast %503 : i32 to vector<8x128xi32>
    %505 = arith.cmpi slt, %6, %504 : vector<8x128xi32>
    %506 = arith.extui %505 : vector<8x128xi1> to vector<8x128xi32>
    %507 = vector.shape_cast %506 : vector<8x128xi32> to vector<1x8x128xi32>
    %cst_174 = arith.constant dense<0> : vector<1xi32>
    %508 = vector.multi_reduction <add>, %507, %cst_174 [1, 2] : vector<1x8x128xi32> to vector<1xi32>
    %509 = vector.shape_cast %508 : vector<1xi32> to vector<1x1x1xi32>
    %510 = vector.extract %509[0, 0, 0] : i32 from vector<1x1x1xi32>
    %c6_i32_175 = arith.constant 6 : i32
    %511 = arith.cmpi sle, %510, %c6_i32_175 : i32
    %512 = arith.select %511, %502, %468 : i32
    %c1048576_i32_176 = arith.constant 1048576 : i32
    %513 = arith.ori %479, %c1048576_i32_176 : i32
    %c-2147483648_i32_177 = arith.constant -2147483648 : i32
    %514 = arith.xori %513, %c-2147483648_i32_177 : i32
    %515 = vector.broadcast %514 : i32 to vector<8x128xi32>
    %516 = arith.cmpi slt, %6, %515 : vector<8x128xi32>
    %517 = arith.extui %516 : vector<8x128xi1> to vector<8x128xi32>
    %518 = vector.shape_cast %517 : vector<8x128xi32> to vector<1x8x128xi32>
    %cst_178 = arith.constant dense<0> : vector<1xi32>
    %519 = vector.multi_reduction <add>, %518, %cst_178 [1, 2] : vector<1x8x128xi32> to vector<1xi32>
    %520 = vector.shape_cast %519 : vector<1xi32> to vector<1x1x1xi32>
    %521 = vector.extract %520[0, 0, 0] : i32 from vector<1x1x1xi32>
    %c9_i32_179 = arith.constant 9 : i32
    %522 = arith.cmpi sle, %521, %c9_i32_179 : i32
    %523 = arith.select %522, %513, %479 : i32
    %c1048576_i32_180 = arith.constant 1048576 : i32
    %524 = arith.ori %490, %c1048576_i32_180 : i32
    %c-2147483648_i32_181 = arith.constant -2147483648 : i32
    %525 = arith.xori %524, %c-2147483648_i32_181 : i32
    %526 = vector.broadcast %525 : i32 to vector<8x128xi32>
    %527 = arith.cmpi slt, %6, %526 : vector<8x128xi32>
    %528 = arith.extui %527 : vector<8x128xi1> to vector<8x128xi32>
    %529 = vector.shape_cast %528 : vector<8x128xi32> to vector<1x8x128xi32>
    %cst_182 = arith.constant dense<0> : vector<1xi32>
    %530 = vector.multi_reduction <add>, %529, %cst_182 [1, 2] : vector<1x8x128xi32> to vector<1xi32>
    %531 = vector.shape_cast %530 : vector<1xi32> to vector<1x1x1xi32>
    %532 = vector.extract %531[0, 0, 0] : i32 from vector<1x1x1xi32>
    %c10_i32_183 = arith.constant 10 : i32
    %533 = arith.cmpi sle, %532, %c10_i32_183 : i32
    %534 = arith.select %533, %524, %490 : i32
    %c524288_i32 = arith.constant 524288 : i32
    %535 = arith.ori %501, %c524288_i32 : i32
    %c-2147483648_i32_184 = arith.constant -2147483648 : i32
    %536 = arith.xori %535, %c-2147483648_i32_184 : i32
    %537 = vector.broadcast %536 : i32 to vector<8x128xi32>
    %538 = arith.cmpi slt, %6, %537 : vector<8x128xi32>
    %539 = arith.extui %538 : vector<8x128xi1> to vector<8x128xi32>
    %540 = vector.shape_cast %539 : vector<8x128xi32> to vector<1x8x128xi32>
    %cst_185 = arith.constant dense<0> : vector<1xi32>
    %541 = vector.multi_reduction <add>, %540, %cst_185 [1, 2] : vector<1x8x128xi32> to vector<1xi32>
    %542 = vector.shape_cast %541 : vector<1xi32> to vector<1x1x1xi32>
    %543 = vector.extract %542[0, 0, 0] : i32 from vector<1x1x1xi32>
    %c5_i32_186 = arith.constant 5 : i32
    %544 = arith.cmpi sle, %543, %c5_i32_186 : i32
    %545 = arith.select %544, %535, %501 : i32
    %c524288_i32_187 = arith.constant 524288 : i32
    %546 = arith.ori %512, %c524288_i32_187 : i32
    %c-2147483648_i32_188 = arith.constant -2147483648 : i32
    %547 = arith.xori %546, %c-2147483648_i32_188 : i32
    %548 = vector.broadcast %547 : i32 to vector<8x128xi32>
    %549 = arith.cmpi slt, %6, %548 : vector<8x128xi32>
    %550 = arith.extui %549 : vector<8x128xi1> to vector<8x128xi32>
    %551 = vector.shape_cast %550 : vector<8x128xi32> to vector<1x8x128xi32>
    %cst_189 = arith.constant dense<0> : vector<1xi32>
    %552 = vector.multi_reduction <add>, %551, %cst_189 [1, 2] : vector<1x8x128xi32> to vector<1xi32>
    %553 = vector.shape_cast %552 : vector<1xi32> to vector<1x1x1xi32>
    %554 = vector.extract %553[0, 0, 0] : i32 from vector<1x1x1xi32>
    %c6_i32_190 = arith.constant 6 : i32
    %555 = arith.cmpi sle, %554, %c6_i32_190 : i32
    %556 = arith.select %555, %546, %512 : i32
    %c524288_i32_191 = arith.constant 524288 : i32
    %557 = arith.ori %523, %c524288_i32_191 : i32
    %c-2147483648_i32_192 = arith.constant -2147483648 : i32
    %558 = arith.xori %557, %c-2147483648_i32_192 : i32
    %559 = vector.broadcast %558 : i32 to vector<8x128xi32>
    %560 = arith.cmpi slt, %6, %559 : vector<8x128xi32>
    %561 = arith.extui %560 : vector<8x128xi1> to vector<8x128xi32>
    %562 = vector.shape_cast %561 : vector<8x128xi32> to vector<1x8x128xi32>
    %cst_193 = arith.constant dense<0> : vector<1xi32>
    %563 = vector.multi_reduction <add>, %562, %cst_193 [1, 2] : vector<1x8x128xi32> to vector<1xi32>
    %564 = vector.shape_cast %563 : vector<1xi32> to vector<1x1x1xi32>
    %565 = vector.extract %564[0, 0, 0] : i32 from vector<1x1x1xi32>
    %c9_i32_194 = arith.constant 9 : i32
    %566 = arith.cmpi sle, %565, %c9_i32_194 : i32
    %567 = arith.select %566, %557, %523 : i32
    %c524288_i32_195 = arith.constant 524288 : i32
    %568 = arith.ori %534, %c524288_i32_195 : i32
    %c-2147483648_i32_196 = arith.constant -2147483648 : i32
    %569 = arith.xori %568, %c-2147483648_i32_196 : i32
    %570 = vector.broadcast %569 : i32 to vector<8x128xi32>
    %571 = arith.cmpi slt, %6, %570 : vector<8x128xi32>
    %572 = arith.extui %571 : vector<8x128xi1> to vector<8x128xi32>
    %573 = vector.shape_cast %572 : vector<8x128xi32> to vector<1x8x128xi32>
    %cst_197 = arith.constant dense<0> : vector<1xi32>
    %574 = vector.multi_reduction <add>, %573, %cst_197 [1, 2] : vector<1x8x128xi32> to vector<1xi32>
    %575 = vector.shape_cast %574 : vector<1xi32> to vector<1x1x1xi32>
    %576 = vector.extract %575[0, 0, 0] : i32 from vector<1x1x1xi32>
    %c10_i32_198 = arith.constant 10 : i32
    %577 = arith.cmpi sle, %576, %c10_i32_198 : i32
    %578 = arith.select %577, %568, %534 : i32
    %c262144_i32 = arith.constant 262144 : i32
    %579 = arith.ori %545, %c262144_i32 : i32
    %c-2147483648_i32_199 = arith.constant -2147483648 : i32
    %580 = arith.xori %579, %c-2147483648_i32_199 : i32
    %581 = vector.broadcast %580 : i32 to vector<8x128xi32>
    %582 = arith.cmpi slt, %6, %581 : vector<8x128xi32>
    %583 = arith.extui %582 : vector<8x128xi1> to vector<8x128xi32>
    %584 = vector.shape_cast %583 : vector<8x128xi32> to vector<1x8x128xi32>
    %cst_200 = arith.constant dense<0> : vector<1xi32>
    %585 = vector.multi_reduction <add>, %584, %cst_200 [1, 2] : vector<1x8x128xi32> to vector<1xi32>
    %586 = vector.shape_cast %585 : vector<1xi32> to vector<1x1x1xi32>
    %587 = vector.extract %586[0, 0, 0] : i32 from vector<1x1x1xi32>
    %c5_i32_201 = arith.constant 5 : i32
    %588 = arith.cmpi sle, %587, %c5_i32_201 : i32
    %589 = arith.select %588, %579, %545 : i32
    %c262144_i32_202 = arith.constant 262144 : i32
    %590 = arith.ori %556, %c262144_i32_202 : i32
    %c-2147483648_i32_203 = arith.constant -2147483648 : i32
    %591 = arith.xori %590, %c-2147483648_i32_203 : i32
    %592 = vector.broadcast %591 : i32 to vector<8x128xi32>
    %593 = arith.cmpi slt, %6, %592 : vector<8x128xi32>
    %594 = arith.extui %593 : vector<8x128xi1> to vector<8x128xi32>
    %595 = vector.shape_cast %594 : vector<8x128xi32> to vector<1x8x128xi32>
    %cst_204 = arith.constant dense<0> : vector<1xi32>
    %596 = vector.multi_reduction <add>, %595, %cst_204 [1, 2] : vector<1x8x128xi32> to vector<1xi32>
    %597 = vector.shape_cast %596 : vector<1xi32> to vector<1x1x1xi32>
    %598 = vector.extract %597[0, 0, 0] : i32 from vector<1x1x1xi32>
    %c6_i32_205 = arith.constant 6 : i32
    %599 = arith.cmpi sle, %598, %c6_i32_205 : i32
    %600 = arith.select %599, %590, %556 : i32
    %c262144_i32_206 = arith.constant 262144 : i32
    %601 = arith.ori %567, %c262144_i32_206 : i32
    %c-2147483648_i32_207 = arith.constant -2147483648 : i32
    %602 = arith.xori %601, %c-2147483648_i32_207 : i32
    %603 = vector.broadcast %602 : i32 to vector<8x128xi32>
    %604 = arith.cmpi slt, %6, %603 : vector<8x128xi32>
    %605 = arith.extui %604 : vector<8x128xi1> to vector<8x128xi32>
    %606 = vector.shape_cast %605 : vector<8x128xi32> to vector<1x8x128xi32>
    %cst_208 = arith.constant dense<0> : vector<1xi32>
    %607 = vector.multi_reduction <add>, %606, %cst_208 [1, 2] : vector<1x8x128xi32> to vector<1xi32>
    %608 = vector.shape_cast %607 : vector<1xi32> to vector<1x1x1xi32>
    %609 = vector.extract %608[0, 0, 0] : i32 from vector<1x1x1xi32>
    %c9_i32_209 = arith.constant 9 : i32
    %610 = arith.cmpi sle, %609, %c9_i32_209 : i32
    %611 = arith.select %610, %601, %567 : i32
    %c262144_i32_210 = arith.constant 262144 : i32
    %612 = arith.ori %578, %c262144_i32_210 : i32
    %c-2147483648_i32_211 = arith.constant -2147483648 : i32
    %613 = arith.xori %612, %c-2147483648_i32_211 : i32
    %614 = vector.broadcast %613 : i32 to vector<8x128xi32>
    %615 = arith.cmpi slt, %6, %614 : vector<8x128xi32>
    %616 = arith.extui %615 : vector<8x128xi1> to vector<8x128xi32>
    %617 = vector.shape_cast %616 : vector<8x128xi32> to vector<1x8x128xi32>
    %cst_212 = arith.constant dense<0> : vector<1xi32>
    %618 = vector.multi_reduction <add>, %617, %cst_212 [1, 2] : vector<1x8x128xi32> to vector<1xi32>
    %619 = vector.shape_cast %618 : vector<1xi32> to vector<1x1x1xi32>
    %620 = vector.extract %619[0, 0, 0] : i32 from vector<1x1x1xi32>
    %c10_i32_213 = arith.constant 10 : i32
    %621 = arith.cmpi sle, %620, %c10_i32_213 : i32
    %622 = arith.select %621, %612, %578 : i32
    %c131072_i32 = arith.constant 131072 : i32
    %623 = arith.ori %589, %c131072_i32 : i32
    %c-2147483648_i32_214 = arith.constant -2147483648 : i32
    %624 = arith.xori %623, %c-2147483648_i32_214 : i32
    %625 = vector.broadcast %624 : i32 to vector<8x128xi32>
    %626 = arith.cmpi slt, %6, %625 : vector<8x128xi32>
    %627 = arith.extui %626 : vector<8x128xi1> to vector<8x128xi32>
    %628 = vector.shape_cast %627 : vector<8x128xi32> to vector<1x8x128xi32>
    %cst_215 = arith.constant dense<0> : vector<1xi32>
    %629 = vector.multi_reduction <add>, %628, %cst_215 [1, 2] : vector<1x8x128xi32> to vector<1xi32>
    %630 = vector.shape_cast %629 : vector<1xi32> to vector<1x1x1xi32>
    %631 = vector.extract %630[0, 0, 0] : i32 from vector<1x1x1xi32>
    %c5_i32_216 = arith.constant 5 : i32
    %632 = arith.cmpi sle, %631, %c5_i32_216 : i32
    %633 = arith.select %632, %623, %589 : i32
    %c131072_i32_217 = arith.constant 131072 : i32
    %634 = arith.ori %600, %c131072_i32_217 : i32
    %c-2147483648_i32_218 = arith.constant -2147483648 : i32
    %635 = arith.xori %634, %c-2147483648_i32_218 : i32
    %636 = vector.broadcast %635 : i32 to vector<8x128xi32>
    %637 = arith.cmpi slt, %6, %636 : vector<8x128xi32>
    %638 = arith.extui %637 : vector<8x128xi1> to vector<8x128xi32>
    %639 = vector.shape_cast %638 : vector<8x128xi32> to vector<1x8x128xi32>
    %cst_219 = arith.constant dense<0> : vector<1xi32>
    %640 = vector.multi_reduction <add>, %639, %cst_219 [1, 2] : vector<1x8x128xi32> to vector<1xi32>
    %641 = vector.shape_cast %640 : vector<1xi32> to vector<1x1x1xi32>
    %642 = vector.extract %641[0, 0, 0] : i32 from vector<1x1x1xi32>
    %c6_i32_220 = arith.constant 6 : i32
    %643 = arith.cmpi sle, %642, %c6_i32_220 : i32
    %644 = arith.select %643, %634, %600 : i32
    %c131072_i32_221 = arith.constant 131072 : i32
    %645 = arith.ori %611, %c131072_i32_221 : i32
    %c-2147483648_i32_222 = arith.constant -2147483648 : i32
    %646 = arith.xori %645, %c-2147483648_i32_222 : i32
    %647 = vector.broadcast %646 : i32 to vector<8x128xi32>
    %648 = arith.cmpi slt, %6, %647 : vector<8x128xi32>
    %649 = arith.extui %648 : vector<8x128xi1> to vector<8x128xi32>
    %650 = vector.shape_cast %649 : vector<8x128xi32> to vector<1x8x128xi32>
    %cst_223 = arith.constant dense<0> : vector<1xi32>
    %651 = vector.multi_reduction <add>, %650, %cst_223 [1, 2] : vector<1x8x128xi32> to vector<1xi32>
    %652 = vector.shape_cast %651 : vector<1xi32> to vector<1x1x1xi32>
    %653 = vector.extract %652[0, 0, 0] : i32 from vector<1x1x1xi32>
    %c9_i32_224 = arith.constant 9 : i32
    %654 = arith.cmpi sle, %653, %c9_i32_224 : i32
    %655 = arith.select %654, %645, %611 : i32
    %c131072_i32_225 = arith.constant 131072 : i32
    %656 = arith.ori %622, %c131072_i32_225 : i32
    %c-2147483648_i32_226 = arith.constant -2147483648 : i32
    %657 = arith.xori %656, %c-2147483648_i32_226 : i32
    %658 = vector.broadcast %657 : i32 to vector<8x128xi32>
    %659 = arith.cmpi slt, %6, %658 : vector<8x128xi32>
    %660 = arith.extui %659 : vector<8x128xi1> to vector<8x128xi32>
    %661 = vector.shape_cast %660 : vector<8x128xi32> to vector<1x8x128xi32>
    %cst_227 = arith.constant dense<0> : vector<1xi32>
    %662 = vector.multi_reduction <add>, %661, %cst_227 [1, 2] : vector<1x8x128xi32> to vector<1xi32>
    %663 = vector.shape_cast %662 : vector<1xi32> to vector<1x1x1xi32>
    %664 = vector.extract %663[0, 0, 0] : i32 from vector<1x1x1xi32>
    %c10_i32_228 = arith.constant 10 : i32
    %665 = arith.cmpi sle, %664, %c10_i32_228 : i32
    %666 = arith.select %665, %656, %622 : i32
    %c65536_i32 = arith.constant 65536 : i32
    %667 = arith.ori %633, %c65536_i32 : i32
    %c-2147483648_i32_229 = arith.constant -2147483648 : i32
    %668 = arith.xori %667, %c-2147483648_i32_229 : i32
    %669 = vector.broadcast %668 : i32 to vector<8x128xi32>
    %670 = arith.cmpi slt, %6, %669 : vector<8x128xi32>
    %671 = arith.extui %670 : vector<8x128xi1> to vector<8x128xi32>
    %672 = vector.shape_cast %671 : vector<8x128xi32> to vector<1x8x128xi32>
    %cst_230 = arith.constant dense<0> : vector<1xi32>
    %673 = vector.multi_reduction <add>, %672, %cst_230 [1, 2] : vector<1x8x128xi32> to vector<1xi32>
    %674 = vector.shape_cast %673 : vector<1xi32> to vector<1x1x1xi32>
    %675 = vector.extract %674[0, 0, 0] : i32 from vector<1x1x1xi32>
    %c5_i32_231 = arith.constant 5 : i32
    %676 = arith.cmpi sle, %675, %c5_i32_231 : i32
    %677 = arith.select %676, %667, %633 : i32
    %c65536_i32_232 = arith.constant 65536 : i32
    %678 = arith.ori %644, %c65536_i32_232 : i32
    %c-2147483648_i32_233 = arith.constant -2147483648 : i32
    %679 = arith.xori %678, %c-2147483648_i32_233 : i32
    %680 = vector.broadcast %679 : i32 to vector<8x128xi32>
    %681 = arith.cmpi slt, %6, %680 : vector<8x128xi32>
    %682 = arith.extui %681 : vector<8x128xi1> to vector<8x128xi32>
    %683 = vector.shape_cast %682 : vector<8x128xi32> to vector<1x8x128xi32>
    %cst_234 = arith.constant dense<0> : vector<1xi32>
    %684 = vector.multi_reduction <add>, %683, %cst_234 [1, 2] : vector<1x8x128xi32> to vector<1xi32>
    %685 = vector.shape_cast %684 : vector<1xi32> to vector<1x1x1xi32>
    %686 = vector.extract %685[0, 0, 0] : i32 from vector<1x1x1xi32>
    %c6_i32_235 = arith.constant 6 : i32
    %687 = arith.cmpi sle, %686, %c6_i32_235 : i32
    %688 = arith.select %687, %678, %644 : i32
    %c65536_i32_236 = arith.constant 65536 : i32
    %689 = arith.ori %655, %c65536_i32_236 : i32
    %c-2147483648_i32_237 = arith.constant -2147483648 : i32
    %690 = arith.xori %689, %c-2147483648_i32_237 : i32
    %691 = vector.broadcast %690 : i32 to vector<8x128xi32>
    %692 = arith.cmpi slt, %6, %691 : vector<8x128xi32>
    %693 = arith.extui %692 : vector<8x128xi1> to vector<8x128xi32>
    %694 = vector.shape_cast %693 : vector<8x128xi32> to vector<1x8x128xi32>
    %cst_238 = arith.constant dense<0> : vector<1xi32>
    %695 = vector.multi_reduction <add>, %694, %cst_238 [1, 2] : vector<1x8x128xi32> to vector<1xi32>
    %696 = vector.shape_cast %695 : vector<1xi32> to vector<1x1x1xi32>
    %697 = vector.extract %696[0, 0, 0] : i32 from vector<1x1x1xi32>
    %c9_i32_239 = arith.constant 9 : i32
    %698 = arith.cmpi sle, %697, %c9_i32_239 : i32
    %699 = arith.select %698, %689, %655 : i32
    %c65536_i32_240 = arith.constant 65536 : i32
    %700 = arith.ori %666, %c65536_i32_240 : i32
    %c-2147483648_i32_241 = arith.constant -2147483648 : i32
    %701 = arith.xori %700, %c-2147483648_i32_241 : i32
    %702 = vector.broadcast %701 : i32 to vector<8x128xi32>
    %703 = arith.cmpi slt, %6, %702 : vector<8x128xi32>
    %704 = arith.extui %703 : vector<8x128xi1> to vector<8x128xi32>
    %705 = vector.shape_cast %704 : vector<8x128xi32> to vector<1x8x128xi32>
    %cst_242 = arith.constant dense<0> : vector<1xi32>
    %706 = vector.multi_reduction <add>, %705, %cst_242 [1, 2] : vector<1x8x128xi32> to vector<1xi32>
    %707 = vector.shape_cast %706 : vector<1xi32> to vector<1x1x1xi32>
    %708 = vector.extract %707[0, 0, 0] : i32 from vector<1x1x1xi32>
    %c10_i32_243 = arith.constant 10 : i32
    %709 = arith.cmpi sle, %708, %c10_i32_243 : i32
    %710 = arith.select %709, %700, %666 : i32
    %c32768_i32 = arith.constant 32768 : i32
    %711 = arith.ori %677, %c32768_i32 : i32
    %c-2147483648_i32_244 = arith.constant -2147483648 : i32
    %712 = arith.xori %711, %c-2147483648_i32_244 : i32
    %713 = vector.broadcast %712 : i32 to vector<8x128xi32>
    %714 = arith.cmpi slt, %6, %713 : vector<8x128xi32>
    %715 = arith.extui %714 : vector<8x128xi1> to vector<8x128xi32>
    %716 = vector.shape_cast %715 : vector<8x128xi32> to vector<1x8x128xi32>
    %cst_245 = arith.constant dense<0> : vector<1xi32>
    %717 = vector.multi_reduction <add>, %716, %cst_245 [1, 2] : vector<1x8x128xi32> to vector<1xi32>
    %718 = vector.shape_cast %717 : vector<1xi32> to vector<1x1x1xi32>
    %719 = vector.extract %718[0, 0, 0] : i32 from vector<1x1x1xi32>
    %c5_i32_246 = arith.constant 5 : i32
    %720 = arith.cmpi sle, %719, %c5_i32_246 : i32
    %721 = arith.select %720, %711, %677 : i32
    %c32768_i32_247 = arith.constant 32768 : i32
    %722 = arith.ori %688, %c32768_i32_247 : i32
    %c-2147483648_i32_248 = arith.constant -2147483648 : i32
    %723 = arith.xori %722, %c-2147483648_i32_248 : i32
    %724 = vector.broadcast %723 : i32 to vector<8x128xi32>
    %725 = arith.cmpi slt, %6, %724 : vector<8x128xi32>
    %726 = arith.extui %725 : vector<8x128xi1> to vector<8x128xi32>
    %727 = vector.shape_cast %726 : vector<8x128xi32> to vector<1x8x128xi32>
    %cst_249 = arith.constant dense<0> : vector<1xi32>
    %728 = vector.multi_reduction <add>, %727, %cst_249 [1, 2] : vector<1x8x128xi32> to vector<1xi32>
    %729 = vector.shape_cast %728 : vector<1xi32> to vector<1x1x1xi32>
    %730 = vector.extract %729[0, 0, 0] : i32 from vector<1x1x1xi32>
    %c6_i32_250 = arith.constant 6 : i32
    %731 = arith.cmpi sle, %730, %c6_i32_250 : i32
    %732 = arith.select %731, %722, %688 : i32
    %c32768_i32_251 = arith.constant 32768 : i32
    %733 = arith.ori %699, %c32768_i32_251 : i32
    %c-2147483648_i32_252 = arith.constant -2147483648 : i32
    %734 = arith.xori %733, %c-2147483648_i32_252 : i32
    %735 = vector.broadcast %734 : i32 to vector<8x128xi32>
    %736 = arith.cmpi slt, %6, %735 : vector<8x128xi32>
    %737 = arith.extui %736 : vector<8x128xi1> to vector<8x128xi32>
    %738 = vector.shape_cast %737 : vector<8x128xi32> to vector<1x8x128xi32>
    %cst_253 = arith.constant dense<0> : vector<1xi32>
    %739 = vector.multi_reduction <add>, %738, %cst_253 [1, 2] : vector<1x8x128xi32> to vector<1xi32>
    %740 = vector.shape_cast %739 : vector<1xi32> to vector<1x1x1xi32>
    %741 = vector.extract %740[0, 0, 0] : i32 from vector<1x1x1xi32>
    %c9_i32_254 = arith.constant 9 : i32
    %742 = arith.cmpi sle, %741, %c9_i32_254 : i32
    %743 = arith.select %742, %733, %699 : i32
    %c32768_i32_255 = arith.constant 32768 : i32
    %744 = arith.ori %710, %c32768_i32_255 : i32
    %c-2147483648_i32_256 = arith.constant -2147483648 : i32
    %745 = arith.xori %744, %c-2147483648_i32_256 : i32
    %746 = vector.broadcast %745 : i32 to vector<8x128xi32>
    %747 = arith.cmpi slt, %6, %746 : vector<8x128xi32>
    %748 = arith.extui %747 : vector<8x128xi1> to vector<8x128xi32>
    %749 = vector.shape_cast %748 : vector<8x128xi32> to vector<1x8x128xi32>
    %cst_257 = arith.constant dense<0> : vector<1xi32>
    %750 = vector.multi_reduction <add>, %749, %cst_257 [1, 2] : vector<1x8x128xi32> to vector<1xi32>
    %751 = vector.shape_cast %750 : vector<1xi32> to vector<1x1x1xi32>
    %752 = vector.extract %751[0, 0, 0] : i32 from vector<1x1x1xi32>
    %c10_i32_258 = arith.constant 10 : i32
    %753 = arith.cmpi sle, %752, %c10_i32_258 : i32
    %754 = arith.select %753, %744, %710 : i32
    %c16384_i32 = arith.constant 16384 : i32
    %755 = arith.ori %721, %c16384_i32 : i32
    %c-2147483648_i32_259 = arith.constant -2147483648 : i32
    %756 = arith.xori %755, %c-2147483648_i32_259 : i32
    %757 = vector.broadcast %756 : i32 to vector<8x128xi32>
    %758 = arith.cmpi slt, %6, %757 : vector<8x128xi32>
    %759 = arith.extui %758 : vector<8x128xi1> to vector<8x128xi32>
    %760 = vector.shape_cast %759 : vector<8x128xi32> to vector<1x8x128xi32>
    %cst_260 = arith.constant dense<0> : vector<1xi32>
    %761 = vector.multi_reduction <add>, %760, %cst_260 [1, 2] : vector<1x8x128xi32> to vector<1xi32>
    %762 = vector.shape_cast %761 : vector<1xi32> to vector<1x1x1xi32>
    %763 = vector.extract %762[0, 0, 0] : i32 from vector<1x1x1xi32>
    %c5_i32_261 = arith.constant 5 : i32
    %764 = arith.cmpi sle, %763, %c5_i32_261 : i32
    %765 = arith.select %764, %755, %721 : i32
    %c16384_i32_262 = arith.constant 16384 : i32
    %766 = arith.ori %732, %c16384_i32_262 : i32
    %c-2147483648_i32_263 = arith.constant -2147483648 : i32
    %767 = arith.xori %766, %c-2147483648_i32_263 : i32
    %768 = vector.broadcast %767 : i32 to vector<8x128xi32>
    %769 = arith.cmpi slt, %6, %768 : vector<8x128xi32>
    %770 = arith.extui %769 : vector<8x128xi1> to vector<8x128xi32>
    %771 = vector.shape_cast %770 : vector<8x128xi32> to vector<1x8x128xi32>
    %cst_264 = arith.constant dense<0> : vector<1xi32>
    %772 = vector.multi_reduction <add>, %771, %cst_264 [1, 2] : vector<1x8x128xi32> to vector<1xi32>
    %773 = vector.shape_cast %772 : vector<1xi32> to vector<1x1x1xi32>
    %774 = vector.extract %773[0, 0, 0] : i32 from vector<1x1x1xi32>
    %c6_i32_265 = arith.constant 6 : i32
    %775 = arith.cmpi sle, %774, %c6_i32_265 : i32
    %776 = arith.select %775, %766, %732 : i32
    %c16384_i32_266 = arith.constant 16384 : i32
    %777 = arith.ori %743, %c16384_i32_266 : i32
    %c-2147483648_i32_267 = arith.constant -2147483648 : i32
    %778 = arith.xori %777, %c-2147483648_i32_267 : i32
    %779 = vector.broadcast %778 : i32 to vector<8x128xi32>
    %780 = arith.cmpi slt, %6, %779 : vector<8x128xi32>
    %781 = arith.extui %780 : vector<8x128xi1> to vector<8x128xi32>
    %782 = vector.shape_cast %781 : vector<8x128xi32> to vector<1x8x128xi32>
    %cst_268 = arith.constant dense<0> : vector<1xi32>
    %783 = vector.multi_reduction <add>, %782, %cst_268 [1, 2] : vector<1x8x128xi32> to vector<1xi32>
    %784 = vector.shape_cast %783 : vector<1xi32> to vector<1x1x1xi32>
    %785 = vector.extract %784[0, 0, 0] : i32 from vector<1x1x1xi32>
    %c9_i32_269 = arith.constant 9 : i32
    %786 = arith.cmpi sle, %785, %c9_i32_269 : i32
    %787 = arith.select %786, %777, %743 : i32
    %c16384_i32_270 = arith.constant 16384 : i32
    %788 = arith.ori %754, %c16384_i32_270 : i32
    %c-2147483648_i32_271 = arith.constant -2147483648 : i32
    %789 = arith.xori %788, %c-2147483648_i32_271 : i32
    %790 = vector.broadcast %789 : i32 to vector<8x128xi32>
    %791 = arith.cmpi slt, %6, %790 : vector<8x128xi32>
    %792 = arith.extui %791 : vector<8x128xi1> to vector<8x128xi32>
    %793 = vector.shape_cast %792 : vector<8x128xi32> to vector<1x8x128xi32>
    %cst_272 = arith.constant dense<0> : vector<1xi32>
    %794 = vector.multi_reduction <add>, %793, %cst_272 [1, 2] : vector<1x8x128xi32> to vector<1xi32>
    %795 = vector.shape_cast %794 : vector<1xi32> to vector<1x1x1xi32>
    %796 = vector.extract %795[0, 0, 0] : i32 from vector<1x1x1xi32>
    %c10_i32_273 = arith.constant 10 : i32
    %797 = arith.cmpi sle, %796, %c10_i32_273 : i32
    %798 = arith.select %797, %788, %754 : i32
    %c8192_i32 = arith.constant 8192 : i32
    %799 = arith.ori %765, %c8192_i32 : i32
    %c-2147483648_i32_274 = arith.constant -2147483648 : i32
    %800 = arith.xori %799, %c-2147483648_i32_274 : i32
    %801 = vector.broadcast %800 : i32 to vector<8x128xi32>
    %802 = arith.cmpi slt, %6, %801 : vector<8x128xi32>
    %803 = arith.extui %802 : vector<8x128xi1> to vector<8x128xi32>
    %804 = vector.shape_cast %803 : vector<8x128xi32> to vector<1x8x128xi32>
    %cst_275 = arith.constant dense<0> : vector<1xi32>
    %805 = vector.multi_reduction <add>, %804, %cst_275 [1, 2] : vector<1x8x128xi32> to vector<1xi32>
    %806 = vector.shape_cast %805 : vector<1xi32> to vector<1x1x1xi32>
    %807 = vector.extract %806[0, 0, 0] : i32 from vector<1x1x1xi32>
    %c5_i32_276 = arith.constant 5 : i32
    %808 = arith.cmpi sle, %807, %c5_i32_276 : i32
    %809 = arith.select %808, %799, %765 : i32
    %c8192_i32_277 = arith.constant 8192 : i32
    %810 = arith.ori %776, %c8192_i32_277 : i32
    %c-2147483648_i32_278 = arith.constant -2147483648 : i32
    %811 = arith.xori %810, %c-2147483648_i32_278 : i32
    %812 = vector.broadcast %811 : i32 to vector<8x128xi32>
    %813 = arith.cmpi slt, %6, %812 : vector<8x128xi32>
    %814 = arith.extui %813 : vector<8x128xi1> to vector<8x128xi32>
    %815 = vector.shape_cast %814 : vector<8x128xi32> to vector<1x8x128xi32>
    %cst_279 = arith.constant dense<0> : vector<1xi32>
    %816 = vector.multi_reduction <add>, %815, %cst_279 [1, 2] : vector<1x8x128xi32> to vector<1xi32>
    %817 = vector.shape_cast %816 : vector<1xi32> to vector<1x1x1xi32>
    %818 = vector.extract %817[0, 0, 0] : i32 from vector<1x1x1xi32>
    %c6_i32_280 = arith.constant 6 : i32
    %819 = arith.cmpi sle, %818, %c6_i32_280 : i32
    %820 = arith.select %819, %810, %776 : i32
    %c8192_i32_281 = arith.constant 8192 : i32
    %821 = arith.ori %787, %c8192_i32_281 : i32
    %c-2147483648_i32_282 = arith.constant -2147483648 : i32
    %822 = arith.xori %821, %c-2147483648_i32_282 : i32
    %823 = vector.broadcast %822 : i32 to vector<8x128xi32>
    %824 = arith.cmpi slt, %6, %823 : vector<8x128xi32>
    %825 = arith.extui %824 : vector<8x128xi1> to vector<8x128xi32>
    %826 = vector.shape_cast %825 : vector<8x128xi32> to vector<1x8x128xi32>
    %cst_283 = arith.constant dense<0> : vector<1xi32>
    %827 = vector.multi_reduction <add>, %826, %cst_283 [1, 2] : vector<1x8x128xi32> to vector<1xi32>
    %828 = vector.shape_cast %827 : vector<1xi32> to vector<1x1x1xi32>
    %829 = vector.extract %828[0, 0, 0] : i32 from vector<1x1x1xi32>
    %c9_i32_284 = arith.constant 9 : i32
    %830 = arith.cmpi sle, %829, %c9_i32_284 : i32
    %831 = arith.select %830, %821, %787 : i32
    %c8192_i32_285 = arith.constant 8192 : i32
    %832 = arith.ori %798, %c8192_i32_285 : i32
    %c-2147483648_i32_286 = arith.constant -2147483648 : i32
    %833 = arith.xori %832, %c-2147483648_i32_286 : i32
    %834 = vector.broadcast %833 : i32 to vector<8x128xi32>
    %835 = arith.cmpi slt, %6, %834 : vector<8x128xi32>
    %836 = arith.extui %835 : vector<8x128xi1> to vector<8x128xi32>
    %837 = vector.shape_cast %836 : vector<8x128xi32> to vector<1x8x128xi32>
    %cst_287 = arith.constant dense<0> : vector<1xi32>
    %838 = vector.multi_reduction <add>, %837, %cst_287 [1, 2] : vector<1x8x128xi32> to vector<1xi32>
    %839 = vector.shape_cast %838 : vector<1xi32> to vector<1x1x1xi32>
    %840 = vector.extract %839[0, 0, 0] : i32 from vector<1x1x1xi32>
    %c10_i32_288 = arith.constant 10 : i32
    %841 = arith.cmpi sle, %840, %c10_i32_288 : i32
    %842 = arith.select %841, %832, %798 : i32
    %c4096_i32 = arith.constant 4096 : i32
    %843 = arith.ori %809, %c4096_i32 : i32
    %c-2147483648_i32_289 = arith.constant -2147483648 : i32
    %844 = arith.xori %843, %c-2147483648_i32_289 : i32
    %845 = vector.broadcast %844 : i32 to vector<8x128xi32>
    %846 = arith.cmpi slt, %6, %845 : vector<8x128xi32>
    %847 = arith.extui %846 : vector<8x128xi1> to vector<8x128xi32>
    %848 = vector.shape_cast %847 : vector<8x128xi32> to vector<1x8x128xi32>
    %cst_290 = arith.constant dense<0> : vector<1xi32>
    %849 = vector.multi_reduction <add>, %848, %cst_290 [1, 2] : vector<1x8x128xi32> to vector<1xi32>
    %850 = vector.shape_cast %849 : vector<1xi32> to vector<1x1x1xi32>
    %851 = vector.extract %850[0, 0, 0] : i32 from vector<1x1x1xi32>
    %c5_i32_291 = arith.constant 5 : i32
    %852 = arith.cmpi sle, %851, %c5_i32_291 : i32
    %853 = arith.select %852, %843, %809 : i32
    %c4096_i32_292 = arith.constant 4096 : i32
    %854 = arith.ori %820, %c4096_i32_292 : i32
    %c-2147483648_i32_293 = arith.constant -2147483648 : i32
    %855 = arith.xori %854, %c-2147483648_i32_293 : i32
    %856 = vector.broadcast %855 : i32 to vector<8x128xi32>
    %857 = arith.cmpi slt, %6, %856 : vector<8x128xi32>
    %858 = arith.extui %857 : vector<8x128xi1> to vector<8x128xi32>
    %859 = vector.shape_cast %858 : vector<8x128xi32> to vector<1x8x128xi32>
    %cst_294 = arith.constant dense<0> : vector<1xi32>
    %860 = vector.multi_reduction <add>, %859, %cst_294 [1, 2] : vector<1x8x128xi32> to vector<1xi32>
    %861 = vector.shape_cast %860 : vector<1xi32> to vector<1x1x1xi32>
    %862 = vector.extract %861[0, 0, 0] : i32 from vector<1x1x1xi32>
    %c6_i32_295 = arith.constant 6 : i32
    %863 = arith.cmpi sle, %862, %c6_i32_295 : i32
    %864 = arith.select %863, %854, %820 : i32
    %c4096_i32_296 = arith.constant 4096 : i32
    %865 = arith.ori %831, %c4096_i32_296 : i32
    %c-2147483648_i32_297 = arith.constant -2147483648 : i32
    %866 = arith.xori %865, %c-2147483648_i32_297 : i32
    %867 = vector.broadcast %866 : i32 to vector<8x128xi32>
    %868 = arith.cmpi slt, %6, %867 : vector<8x128xi32>
    %869 = arith.extui %868 : vector<8x128xi1> to vector<8x128xi32>
    %870 = vector.shape_cast %869 : vector<8x128xi32> to vector<1x8x128xi32>
    %cst_298 = arith.constant dense<0> : vector<1xi32>
    %871 = vector.multi_reduction <add>, %870, %cst_298 [1, 2] : vector<1x8x128xi32> to vector<1xi32>
    %872 = vector.shape_cast %871 : vector<1xi32> to vector<1x1x1xi32>
    %873 = vector.extract %872[0, 0, 0] : i32 from vector<1x1x1xi32>
    %c9_i32_299 = arith.constant 9 : i32
    %874 = arith.cmpi sle, %873, %c9_i32_299 : i32
    %875 = arith.select %874, %865, %831 : i32
    %c4096_i32_300 = arith.constant 4096 : i32
    %876 = arith.ori %842, %c4096_i32_300 : i32
    %c-2147483648_i32_301 = arith.constant -2147483648 : i32
    %877 = arith.xori %876, %c-2147483648_i32_301 : i32
    %878 = vector.broadcast %877 : i32 to vector<8x128xi32>
    %879 = arith.cmpi slt, %6, %878 : vector<8x128xi32>
    %880 = arith.extui %879 : vector<8x128xi1> to vector<8x128xi32>
    %881 = vector.shape_cast %880 : vector<8x128xi32> to vector<1x8x128xi32>
    %cst_302 = arith.constant dense<0> : vector<1xi32>
    %882 = vector.multi_reduction <add>, %881, %cst_302 [1, 2] : vector<1x8x128xi32> to vector<1xi32>
    %883 = vector.shape_cast %882 : vector<1xi32> to vector<1x1x1xi32>
    %884 = vector.extract %883[0, 0, 0] : i32 from vector<1x1x1xi32>
    %c10_i32_303 = arith.constant 10 : i32
    %885 = arith.cmpi sle, %884, %c10_i32_303 : i32
    %886 = arith.select %885, %876, %842 : i32
    %c2048_i32 = arith.constant 2048 : i32
    %887 = arith.ori %853, %c2048_i32 : i32
    %c-2147483648_i32_304 = arith.constant -2147483648 : i32
    %888 = arith.xori %887, %c-2147483648_i32_304 : i32
    %889 = vector.broadcast %888 : i32 to vector<8x128xi32>
    %890 = arith.cmpi slt, %6, %889 : vector<8x128xi32>
    %891 = arith.extui %890 : vector<8x128xi1> to vector<8x128xi32>
    %892 = vector.shape_cast %891 : vector<8x128xi32> to vector<1x8x128xi32>
    %cst_305 = arith.constant dense<0> : vector<1xi32>
    %893 = vector.multi_reduction <add>, %892, %cst_305 [1, 2] : vector<1x8x128xi32> to vector<1xi32>
    %894 = vector.shape_cast %893 : vector<1xi32> to vector<1x1x1xi32>
    %895 = vector.extract %894[0, 0, 0] : i32 from vector<1x1x1xi32>
    %c5_i32_306 = arith.constant 5 : i32
    %896 = arith.cmpi sle, %895, %c5_i32_306 : i32
    %897 = arith.select %896, %887, %853 : i32
    %c2048_i32_307 = arith.constant 2048 : i32
    %898 = arith.ori %864, %c2048_i32_307 : i32
    %c-2147483648_i32_308 = arith.constant -2147483648 : i32
    %899 = arith.xori %898, %c-2147483648_i32_308 : i32
    %900 = vector.broadcast %899 : i32 to vector<8x128xi32>
    %901 = arith.cmpi slt, %6, %900 : vector<8x128xi32>
    %902 = arith.extui %901 : vector<8x128xi1> to vector<8x128xi32>
    %903 = vector.shape_cast %902 : vector<8x128xi32> to vector<1x8x128xi32>
    %cst_309 = arith.constant dense<0> : vector<1xi32>
    %904 = vector.multi_reduction <add>, %903, %cst_309 [1, 2] : vector<1x8x128xi32> to vector<1xi32>
    %905 = vector.shape_cast %904 : vector<1xi32> to vector<1x1x1xi32>
    %906 = vector.extract %905[0, 0, 0] : i32 from vector<1x1x1xi32>
    %c6_i32_310 = arith.constant 6 : i32
    %907 = arith.cmpi sle, %906, %c6_i32_310 : i32
    %908 = arith.select %907, %898, %864 : i32
    %c2048_i32_311 = arith.constant 2048 : i32
    %909 = arith.ori %875, %c2048_i32_311 : i32
    %c-2147483648_i32_312 = arith.constant -2147483648 : i32
    %910 = arith.xori %909, %c-2147483648_i32_312 : i32
    %911 = vector.broadcast %910 : i32 to vector<8x128xi32>
    %912 = arith.cmpi slt, %6, %911 : vector<8x128xi32>
    %913 = arith.extui %912 : vector<8x128xi1> to vector<8x128xi32>
    %914 = vector.shape_cast %913 : vector<8x128xi32> to vector<1x8x128xi32>
    %cst_313 = arith.constant dense<0> : vector<1xi32>
    %915 = vector.multi_reduction <add>, %914, %cst_313 [1, 2] : vector<1x8x128xi32> to vector<1xi32>
    %916 = vector.shape_cast %915 : vector<1xi32> to vector<1x1x1xi32>
    %917 = vector.extract %916[0, 0, 0] : i32 from vector<1x1x1xi32>
    %c9_i32_314 = arith.constant 9 : i32
    %918 = arith.cmpi sle, %917, %c9_i32_314 : i32
    %919 = arith.select %918, %909, %875 : i32
    %c2048_i32_315 = arith.constant 2048 : i32
    %920 = arith.ori %886, %c2048_i32_315 : i32
    %c-2147483648_i32_316 = arith.constant -2147483648 : i32
    %921 = arith.xori %920, %c-2147483648_i32_316 : i32
    %922 = vector.broadcast %921 : i32 to vector<8x128xi32>
    %923 = arith.cmpi slt, %6, %922 : vector<8x128xi32>
    %924 = arith.extui %923 : vector<8x128xi1> to vector<8x128xi32>
    %925 = vector.shape_cast %924 : vector<8x128xi32> to vector<1x8x128xi32>
    %cst_317 = arith.constant dense<0> : vector<1xi32>
    %926 = vector.multi_reduction <add>, %925, %cst_317 [1, 2] : vector<1x8x128xi32> to vector<1xi32>
    %927 = vector.shape_cast %926 : vector<1xi32> to vector<1x1x1xi32>
    %928 = vector.extract %927[0, 0, 0] : i32 from vector<1x1x1xi32>
    %c10_i32_318 = arith.constant 10 : i32
    %929 = arith.cmpi sle, %928, %c10_i32_318 : i32
    %930 = arith.select %929, %920, %886 : i32
    %c1024_i32 = arith.constant 1024 : i32
    %931 = arith.ori %897, %c1024_i32 : i32
    %c-2147483648_i32_319 = arith.constant -2147483648 : i32
    %932 = arith.xori %931, %c-2147483648_i32_319 : i32
    %933 = vector.broadcast %932 : i32 to vector<8x128xi32>
    %934 = arith.cmpi slt, %6, %933 : vector<8x128xi32>
    %935 = arith.extui %934 : vector<8x128xi1> to vector<8x128xi32>
    %936 = vector.shape_cast %935 : vector<8x128xi32> to vector<1x8x128xi32>
    %cst_320 = arith.constant dense<0> : vector<1xi32>
    %937 = vector.multi_reduction <add>, %936, %cst_320 [1, 2] : vector<1x8x128xi32> to vector<1xi32>
    %938 = vector.shape_cast %937 : vector<1xi32> to vector<1x1x1xi32>
    %939 = vector.extract %938[0, 0, 0] : i32 from vector<1x1x1xi32>
    %c5_i32_321 = arith.constant 5 : i32
    %940 = arith.cmpi sle, %939, %c5_i32_321 : i32
    %941 = arith.select %940, %931, %897 : i32
    %c1024_i32_322 = arith.constant 1024 : i32
    %942 = arith.ori %908, %c1024_i32_322 : i32
    %c-2147483648_i32_323 = arith.constant -2147483648 : i32
    %943 = arith.xori %942, %c-2147483648_i32_323 : i32
    %944 = vector.broadcast %943 : i32 to vector<8x128xi32>
    %945 = arith.cmpi slt, %6, %944 : vector<8x128xi32>
    %946 = arith.extui %945 : vector<8x128xi1> to vector<8x128xi32>
    %947 = vector.shape_cast %946 : vector<8x128xi32> to vector<1x8x128xi32>
    %cst_324 = arith.constant dense<0> : vector<1xi32>
    %948 = vector.multi_reduction <add>, %947, %cst_324 [1, 2] : vector<1x8x128xi32> to vector<1xi32>
    %949 = vector.shape_cast %948 : vector<1xi32> to vector<1x1x1xi32>
    %950 = vector.extract %949[0, 0, 0] : i32 from vector<1x1x1xi32>
    %c6_i32_325 = arith.constant 6 : i32
    %951 = arith.cmpi sle, %950, %c6_i32_325 : i32
    %952 = arith.select %951, %942, %908 : i32
    %c1024_i32_326 = arith.constant 1024 : i32
    %953 = arith.ori %919, %c1024_i32_326 : i32
    %c-2147483648_i32_327 = arith.constant -2147483648 : i32
    %954 = arith.xori %953, %c-2147483648_i32_327 : i32
    %955 = vector.broadcast %954 : i32 to vector<8x128xi32>
    %956 = arith.cmpi slt, %6, %955 : vector<8x128xi32>
    %957 = arith.extui %956 : vector<8x128xi1> to vector<8x128xi32>
    %958 = vector.shape_cast %957 : vector<8x128xi32> to vector<1x8x128xi32>
    %cst_328 = arith.constant dense<0> : vector<1xi32>
    %959 = vector.multi_reduction <add>, %958, %cst_328 [1, 2] : vector<1x8x128xi32> to vector<1xi32>
    %960 = vector.shape_cast %959 : vector<1xi32> to vector<1x1x1xi32>
    %961 = vector.extract %960[0, 0, 0] : i32 from vector<1x1x1xi32>
    %c9_i32_329 = arith.constant 9 : i32
    %962 = arith.cmpi sle, %961, %c9_i32_329 : i32
    %963 = arith.select %962, %953, %919 : i32
    %c1024_i32_330 = arith.constant 1024 : i32
    %964 = arith.ori %930, %c1024_i32_330 : i32
    %c-2147483648_i32_331 = arith.constant -2147483648 : i32
    %965 = arith.xori %964, %c-2147483648_i32_331 : i32
    %966 = vector.broadcast %965 : i32 to vector<8x128xi32>
    %967 = arith.cmpi slt, %6, %966 : vector<8x128xi32>
    %968 = arith.extui %967 : vector<8x128xi1> to vector<8x128xi32>
    %969 = vector.shape_cast %968 : vector<8x128xi32> to vector<1x8x128xi32>
    %cst_332 = arith.constant dense<0> : vector<1xi32>
    %970 = vector.multi_reduction <add>, %969, %cst_332 [1, 2] : vector<1x8x128xi32> to vector<1xi32>
    %971 = vector.shape_cast %970 : vector<1xi32> to vector<1x1x1xi32>
    %972 = vector.extract %971[0, 0, 0] : i32 from vector<1x1x1xi32>
    %c10_i32_333 = arith.constant 10 : i32
    %973 = arith.cmpi sle, %972, %c10_i32_333 : i32
    %974 = arith.select %973, %964, %930 : i32
    %c512_i32 = arith.constant 512 : i32
    %975 = arith.ori %941, %c512_i32 : i32
    %c-2147483648_i32_334 = arith.constant -2147483648 : i32
    %976 = arith.xori %975, %c-2147483648_i32_334 : i32
    %977 = vector.broadcast %976 : i32 to vector<8x128xi32>
    %978 = arith.cmpi slt, %6, %977 : vector<8x128xi32>
    %979 = arith.extui %978 : vector<8x128xi1> to vector<8x128xi32>
    %980 = vector.shape_cast %979 : vector<8x128xi32> to vector<1x8x128xi32>
    %cst_335 = arith.constant dense<0> : vector<1xi32>
    %981 = vector.multi_reduction <add>, %980, %cst_335 [1, 2] : vector<1x8x128xi32> to vector<1xi32>
    %982 = vector.shape_cast %981 : vector<1xi32> to vector<1x1x1xi32>
    %983 = vector.extract %982[0, 0, 0] : i32 from vector<1x1x1xi32>
    %c5_i32_336 = arith.constant 5 : i32
    %984 = arith.cmpi sle, %983, %c5_i32_336 : i32
    %985 = arith.select %984, %975, %941 : i32
    %c512_i32_337 = arith.constant 512 : i32
    %986 = arith.ori %952, %c512_i32_337 : i32
    %c-2147483648_i32_338 = arith.constant -2147483648 : i32
    %987 = arith.xori %986, %c-2147483648_i32_338 : i32
    %988 = vector.broadcast %987 : i32 to vector<8x128xi32>
    %989 = arith.cmpi slt, %6, %988 : vector<8x128xi32>
    %990 = arith.extui %989 : vector<8x128xi1> to vector<8x128xi32>
    %991 = vector.shape_cast %990 : vector<8x128xi32> to vector<1x8x128xi32>
    %cst_339 = arith.constant dense<0> : vector<1xi32>
    %992 = vector.multi_reduction <add>, %991, %cst_339 [1, 2] : vector<1x8x128xi32> to vector<1xi32>
    %993 = vector.shape_cast %992 : vector<1xi32> to vector<1x1x1xi32>
    %994 = vector.extract %993[0, 0, 0] : i32 from vector<1x1x1xi32>
    %c6_i32_340 = arith.constant 6 : i32
    %995 = arith.cmpi sle, %994, %c6_i32_340 : i32
    %996 = arith.select %995, %986, %952 : i32
    %c512_i32_341 = arith.constant 512 : i32
    %997 = arith.ori %963, %c512_i32_341 : i32
    %c-2147483648_i32_342 = arith.constant -2147483648 : i32
    %998 = arith.xori %997, %c-2147483648_i32_342 : i32
    %999 = vector.broadcast %998 : i32 to vector<8x128xi32>
    %1000 = arith.cmpi slt, %6, %999 : vector<8x128xi32>
    %1001 = arith.extui %1000 : vector<8x128xi1> to vector<8x128xi32>
    %1002 = vector.shape_cast %1001 : vector<8x128xi32> to vector<1x8x128xi32>
    %cst_343 = arith.constant dense<0> : vector<1xi32>
    %1003 = vector.multi_reduction <add>, %1002, %cst_343 [1, 2] : vector<1x8x128xi32> to vector<1xi32>
    %1004 = vector.shape_cast %1003 : vector<1xi32> to vector<1x1x1xi32>
    %1005 = vector.extract %1004[0, 0, 0] : i32 from vector<1x1x1xi32>
    %c9_i32_344 = arith.constant 9 : i32
    %1006 = arith.cmpi sle, %1005, %c9_i32_344 : i32
    %1007 = arith.select %1006, %997, %963 : i32
    %c512_i32_345 = arith.constant 512 : i32
    %1008 = arith.ori %974, %c512_i32_345 : i32
    %c-2147483648_i32_346 = arith.constant -2147483648 : i32
    %1009 = arith.xori %1008, %c-2147483648_i32_346 : i32
    %1010 = vector.broadcast %1009 : i32 to vector<8x128xi32>
    %1011 = arith.cmpi slt, %6, %1010 : vector<8x128xi32>
    %1012 = arith.extui %1011 : vector<8x128xi1> to vector<8x128xi32>
    %1013 = vector.shape_cast %1012 : vector<8x128xi32> to vector<1x8x128xi32>
    %cst_347 = arith.constant dense<0> : vector<1xi32>
    %1014 = vector.multi_reduction <add>, %1013, %cst_347 [1, 2] : vector<1x8x128xi32> to vector<1xi32>
    %1015 = vector.shape_cast %1014 : vector<1xi32> to vector<1x1x1xi32>
    %1016 = vector.extract %1015[0, 0, 0] : i32 from vector<1x1x1xi32>
    %c10_i32_348 = arith.constant 10 : i32
    %1017 = arith.cmpi sle, %1016, %c10_i32_348 : i32
    %1018 = arith.select %1017, %1008, %974 : i32
    %c256_i32 = arith.constant 256 : i32
    %1019 = arith.ori %985, %c256_i32 : i32
    %c-2147483648_i32_349 = arith.constant -2147483648 : i32
    %1020 = arith.xori %1019, %c-2147483648_i32_349 : i32
    %1021 = vector.broadcast %1020 : i32 to vector<8x128xi32>
    %1022 = arith.cmpi slt, %6, %1021 : vector<8x128xi32>
    %1023 = arith.extui %1022 : vector<8x128xi1> to vector<8x128xi32>
    %1024 = vector.shape_cast %1023 : vector<8x128xi32> to vector<1x8x128xi32>
    %cst_350 = arith.constant dense<0> : vector<1xi32>
    %1025 = vector.multi_reduction <add>, %1024, %cst_350 [1, 2] : vector<1x8x128xi32> to vector<1xi32>
    %1026 = vector.shape_cast %1025 : vector<1xi32> to vector<1x1x1xi32>
    %1027 = vector.extract %1026[0, 0, 0] : i32 from vector<1x1x1xi32>
    %c5_i32_351 = arith.constant 5 : i32
    %1028 = arith.cmpi sle, %1027, %c5_i32_351 : i32
    %1029 = arith.select %1028, %1019, %985 : i32
    %c256_i32_352 = arith.constant 256 : i32
    %1030 = arith.ori %996, %c256_i32_352 : i32
    %c-2147483648_i32_353 = arith.constant -2147483648 : i32
    %1031 = arith.xori %1030, %c-2147483648_i32_353 : i32
    %1032 = vector.broadcast %1031 : i32 to vector<8x128xi32>
    %1033 = arith.cmpi slt, %6, %1032 : vector<8x128xi32>
    %1034 = arith.extui %1033 : vector<8x128xi1> to vector<8x128xi32>
    %1035 = vector.shape_cast %1034 : vector<8x128xi32> to vector<1x8x128xi32>
    %cst_354 = arith.constant dense<0> : vector<1xi32>
    %1036 = vector.multi_reduction <add>, %1035, %cst_354 [1, 2] : vector<1x8x128xi32> to vector<1xi32>
    %1037 = vector.shape_cast %1036 : vector<1xi32> to vector<1x1x1xi32>
    %1038 = vector.extract %1037[0, 0, 0] : i32 from vector<1x1x1xi32>
    %c6_i32_355 = arith.constant 6 : i32
    %1039 = arith.cmpi sle, %1038, %c6_i32_355 : i32
    %1040 = arith.select %1039, %1030, %996 : i32
    %c256_i32_356 = arith.constant 256 : i32
    %1041 = arith.ori %1007, %c256_i32_356 : i32
    %c-2147483648_i32_357 = arith.constant -2147483648 : i32
    %1042 = arith.xori %1041, %c-2147483648_i32_357 : i32
    %1043 = vector.broadcast %1042 : i32 to vector<8x128xi32>
    %1044 = arith.cmpi slt, %6, %1043 : vector<8x128xi32>
    %1045 = arith.extui %1044 : vector<8x128xi1> to vector<8x128xi32>
    %1046 = vector.shape_cast %1045 : vector<8x128xi32> to vector<1x8x128xi32>
    %cst_358 = arith.constant dense<0> : vector<1xi32>
    %1047 = vector.multi_reduction <add>, %1046, %cst_358 [1, 2] : vector<1x8x128xi32> to vector<1xi32>
    %1048 = vector.shape_cast %1047 : vector<1xi32> to vector<1x1x1xi32>
    %1049 = vector.extract %1048[0, 0, 0] : i32 from vector<1x1x1xi32>
    %c9_i32_359 = arith.constant 9 : i32
    %1050 = arith.cmpi sle, %1049, %c9_i32_359 : i32
    %1051 = arith.select %1050, %1041, %1007 : i32
    %c256_i32_360 = arith.constant 256 : i32
    %1052 = arith.ori %1018, %c256_i32_360 : i32
    %c-2147483648_i32_361 = arith.constant -2147483648 : i32
    %1053 = arith.xori %1052, %c-2147483648_i32_361 : i32
    %1054 = vector.broadcast %1053 : i32 to vector<8x128xi32>
    %1055 = arith.cmpi slt, %6, %1054 : vector<8x128xi32>
    %1056 = arith.extui %1055 : vector<8x128xi1> to vector<8x128xi32>
    %1057 = vector.shape_cast %1056 : vector<8x128xi32> to vector<1x8x128xi32>
    %cst_362 = arith.constant dense<0> : vector<1xi32>
    %1058 = vector.multi_reduction <add>, %1057, %cst_362 [1, 2] : vector<1x8x128xi32> to vector<1xi32>
    %1059 = vector.shape_cast %1058 : vector<1xi32> to vector<1x1x1xi32>
    %1060 = vector.extract %1059[0, 0, 0] : i32 from vector<1x1x1xi32>
    %c10_i32_363 = arith.constant 10 : i32
    %1061 = arith.cmpi sle, %1060, %c10_i32_363 : i32
    %1062 = arith.select %1061, %1052, %1018 : i32
    %c128_i32 = arith.constant 128 : i32
    %1063 = arith.ori %1029, %c128_i32 : i32
    %c-2147483648_i32_364 = arith.constant -2147483648 : i32
    %1064 = arith.xori %1063, %c-2147483648_i32_364 : i32
    %1065 = vector.broadcast %1064 : i32 to vector<8x128xi32>
    %1066 = arith.cmpi slt, %6, %1065 : vector<8x128xi32>
    %1067 = arith.extui %1066 : vector<8x128xi1> to vector<8x128xi32>
    %1068 = vector.shape_cast %1067 : vector<8x128xi32> to vector<1x8x128xi32>
    %cst_365 = arith.constant dense<0> : vector<1xi32>
    %1069 = vector.multi_reduction <add>, %1068, %cst_365 [1, 2] : vector<1x8x128xi32> to vector<1xi32>
    %1070 = vector.shape_cast %1069 : vector<1xi32> to vector<1x1x1xi32>
    %1071 = vector.extract %1070[0, 0, 0] : i32 from vector<1x1x1xi32>
    %c5_i32_366 = arith.constant 5 : i32
    %1072 = arith.cmpi sle, %1071, %c5_i32_366 : i32
    %1073 = arith.select %1072, %1063, %1029 : i32
    %c128_i32_367 = arith.constant 128 : i32
    %1074 = arith.ori %1040, %c128_i32_367 : i32
    %c-2147483648_i32_368 = arith.constant -2147483648 : i32
    %1075 = arith.xori %1074, %c-2147483648_i32_368 : i32
    %1076 = vector.broadcast %1075 : i32 to vector<8x128xi32>
    %1077 = arith.cmpi slt, %6, %1076 : vector<8x128xi32>
    %1078 = arith.extui %1077 : vector<8x128xi1> to vector<8x128xi32>
    %1079 = vector.shape_cast %1078 : vector<8x128xi32> to vector<1x8x128xi32>
    %cst_369 = arith.constant dense<0> : vector<1xi32>
    %1080 = vector.multi_reduction <add>, %1079, %cst_369 [1, 2] : vector<1x8x128xi32> to vector<1xi32>
    %1081 = vector.shape_cast %1080 : vector<1xi32> to vector<1x1x1xi32>
    %1082 = vector.extract %1081[0, 0, 0] : i32 from vector<1x1x1xi32>
    %c6_i32_370 = arith.constant 6 : i32
    %1083 = arith.cmpi sle, %1082, %c6_i32_370 : i32
    %1084 = arith.select %1083, %1074, %1040 : i32
    %c128_i32_371 = arith.constant 128 : i32
    %1085 = arith.ori %1051, %c128_i32_371 : i32
    %c-2147483648_i32_372 = arith.constant -2147483648 : i32
    %1086 = arith.xori %1085, %c-2147483648_i32_372 : i32
    %1087 = vector.broadcast %1086 : i32 to vector<8x128xi32>
    %1088 = arith.cmpi slt, %6, %1087 : vector<8x128xi32>
    %1089 = arith.extui %1088 : vector<8x128xi1> to vector<8x128xi32>
    %1090 = vector.shape_cast %1089 : vector<8x128xi32> to vector<1x8x128xi32>
    %cst_373 = arith.constant dense<0> : vector<1xi32>
    %1091 = vector.multi_reduction <add>, %1090, %cst_373 [1, 2] : vector<1x8x128xi32> to vector<1xi32>
    %1092 = vector.shape_cast %1091 : vector<1xi32> to vector<1x1x1xi32>
    %1093 = vector.extract %1092[0, 0, 0] : i32 from vector<1x1x1xi32>
    %c9_i32_374 = arith.constant 9 : i32
    %1094 = arith.cmpi sle, %1093, %c9_i32_374 : i32
    %1095 = arith.select %1094, %1085, %1051 : i32
    %c128_i32_375 = arith.constant 128 : i32
    %1096 = arith.ori %1062, %c128_i32_375 : i32
    %c-2147483648_i32_376 = arith.constant -2147483648 : i32
    %1097 = arith.xori %1096, %c-2147483648_i32_376 : i32
    %1098 = vector.broadcast %1097 : i32 to vector<8x128xi32>
    %1099 = arith.cmpi slt, %6, %1098 : vector<8x128xi32>
    %1100 = arith.extui %1099 : vector<8x128xi1> to vector<8x128xi32>
    %1101 = vector.shape_cast %1100 : vector<8x128xi32> to vector<1x8x128xi32>
    %cst_377 = arith.constant dense<0> : vector<1xi32>
    %1102 = vector.multi_reduction <add>, %1101, %cst_377 [1, 2] : vector<1x8x128xi32> to vector<1xi32>
    %1103 = vector.shape_cast %1102 : vector<1xi32> to vector<1x1x1xi32>
    %1104 = vector.extract %1103[0, 0, 0] : i32 from vector<1x1x1xi32>
    %c10_i32_378 = arith.constant 10 : i32
    %1105 = arith.cmpi sle, %1104, %c10_i32_378 : i32
    %1106 = arith.select %1105, %1096, %1062 : i32
    %c64_i32 = arith.constant 64 : i32
    %1107 = arith.ori %1073, %c64_i32 : i32
    %c-2147483648_i32_379 = arith.constant -2147483648 : i32
    %1108 = arith.xori %1107, %c-2147483648_i32_379 : i32
    %1109 = vector.broadcast %1108 : i32 to vector<8x128xi32>
    %1110 = arith.cmpi slt, %6, %1109 : vector<8x128xi32>
    %1111 = arith.extui %1110 : vector<8x128xi1> to vector<8x128xi32>
    %1112 = vector.shape_cast %1111 : vector<8x128xi32> to vector<1x8x128xi32>
    %cst_380 = arith.constant dense<0> : vector<1xi32>
    %1113 = vector.multi_reduction <add>, %1112, %cst_380 [1, 2] : vector<1x8x128xi32> to vector<1xi32>
    %1114 = vector.shape_cast %1113 : vector<1xi32> to vector<1x1x1xi32>
    %1115 = vector.extract %1114[0, 0, 0] : i32 from vector<1x1x1xi32>
    %c5_i32_381 = arith.constant 5 : i32
    %1116 = arith.cmpi sle, %1115, %c5_i32_381 : i32
    %1117 = arith.select %1116, %1107, %1073 : i32
    %c64_i32_382 = arith.constant 64 : i32
    %1118 = arith.ori %1084, %c64_i32_382 : i32
    %c-2147483648_i32_383 = arith.constant -2147483648 : i32
    %1119 = arith.xori %1118, %c-2147483648_i32_383 : i32
    %1120 = vector.broadcast %1119 : i32 to vector<8x128xi32>
    %1121 = arith.cmpi slt, %6, %1120 : vector<8x128xi32>
    %1122 = arith.extui %1121 : vector<8x128xi1> to vector<8x128xi32>
    %1123 = vector.shape_cast %1122 : vector<8x128xi32> to vector<1x8x128xi32>
    %cst_384 = arith.constant dense<0> : vector<1xi32>
    %1124 = vector.multi_reduction <add>, %1123, %cst_384 [1, 2] : vector<1x8x128xi32> to vector<1xi32>
    %1125 = vector.shape_cast %1124 : vector<1xi32> to vector<1x1x1xi32>
    %1126 = vector.extract %1125[0, 0, 0] : i32 from vector<1x1x1xi32>
    %c6_i32_385 = arith.constant 6 : i32
    %1127 = arith.cmpi sle, %1126, %c6_i32_385 : i32
    %1128 = arith.select %1127, %1118, %1084 : i32
    %c64_i32_386 = arith.constant 64 : i32
    %1129 = arith.ori %1095, %c64_i32_386 : i32
    %c-2147483648_i32_387 = arith.constant -2147483648 : i32
    %1130 = arith.xori %1129, %c-2147483648_i32_387 : i32
    %1131 = vector.broadcast %1130 : i32 to vector<8x128xi32>
    %1132 = arith.cmpi slt, %6, %1131 : vector<8x128xi32>
    %1133 = arith.extui %1132 : vector<8x128xi1> to vector<8x128xi32>
    %1134 = vector.shape_cast %1133 : vector<8x128xi32> to vector<1x8x128xi32>
    %cst_388 = arith.constant dense<0> : vector<1xi32>
    %1135 = vector.multi_reduction <add>, %1134, %cst_388 [1, 2] : vector<1x8x128xi32> to vector<1xi32>
    %1136 = vector.shape_cast %1135 : vector<1xi32> to vector<1x1x1xi32>
    %1137 = vector.extract %1136[0, 0, 0] : i32 from vector<1x1x1xi32>
    %c9_i32_389 = arith.constant 9 : i32
    %1138 = arith.cmpi sle, %1137, %c9_i32_389 : i32
    %1139 = arith.select %1138, %1129, %1095 : i32
    %c64_i32_390 = arith.constant 64 : i32
    %1140 = arith.ori %1106, %c64_i32_390 : i32
    %c-2147483648_i32_391 = arith.constant -2147483648 : i32
    %1141 = arith.xori %1140, %c-2147483648_i32_391 : i32
    %1142 = vector.broadcast %1141 : i32 to vector<8x128xi32>
    %1143 = arith.cmpi slt, %6, %1142 : vector<8x128xi32>
    %1144 = arith.extui %1143 : vector<8x128xi1> to vector<8x128xi32>
    %1145 = vector.shape_cast %1144 : vector<8x128xi32> to vector<1x8x128xi32>
    %cst_392 = arith.constant dense<0> : vector<1xi32>
    %1146 = vector.multi_reduction <add>, %1145, %cst_392 [1, 2] : vector<1x8x128xi32> to vector<1xi32>
    %1147 = vector.shape_cast %1146 : vector<1xi32> to vector<1x1x1xi32>
    %1148 = vector.extract %1147[0, 0, 0] : i32 from vector<1x1x1xi32>
    %c10_i32_393 = arith.constant 10 : i32
    %1149 = arith.cmpi sle, %1148, %c10_i32_393 : i32
    %1150 = arith.select %1149, %1140, %1106 : i32
    %c32_i32 = arith.constant 32 : i32
    %1151 = arith.ori %1117, %c32_i32 : i32
    %c-2147483648_i32_394 = arith.constant -2147483648 : i32
    %1152 = arith.xori %1151, %c-2147483648_i32_394 : i32
    %1153 = vector.broadcast %1152 : i32 to vector<8x128xi32>
    %1154 = arith.cmpi slt, %6, %1153 : vector<8x128xi32>
    %1155 = arith.extui %1154 : vector<8x128xi1> to vector<8x128xi32>
    %1156 = vector.shape_cast %1155 : vector<8x128xi32> to vector<1x8x128xi32>
    %cst_395 = arith.constant dense<0> : vector<1xi32>
    %1157 = vector.multi_reduction <add>, %1156, %cst_395 [1, 2] : vector<1x8x128xi32> to vector<1xi32>
    %1158 = vector.shape_cast %1157 : vector<1xi32> to vector<1x1x1xi32>
    %1159 = vector.extract %1158[0, 0, 0] : i32 from vector<1x1x1xi32>
    %c5_i32_396 = arith.constant 5 : i32
    %1160 = arith.cmpi sle, %1159, %c5_i32_396 : i32
    %1161 = arith.select %1160, %1151, %1117 : i32
    %c32_i32_397 = arith.constant 32 : i32
    %1162 = arith.ori %1128, %c32_i32_397 : i32
    %c-2147483648_i32_398 = arith.constant -2147483648 : i32
    %1163 = arith.xori %1162, %c-2147483648_i32_398 : i32
    %1164 = vector.broadcast %1163 : i32 to vector<8x128xi32>
    %1165 = arith.cmpi slt, %6, %1164 : vector<8x128xi32>
    %1166 = arith.extui %1165 : vector<8x128xi1> to vector<8x128xi32>
    %1167 = vector.shape_cast %1166 : vector<8x128xi32> to vector<1x8x128xi32>
    %cst_399 = arith.constant dense<0> : vector<1xi32>
    %1168 = vector.multi_reduction <add>, %1167, %cst_399 [1, 2] : vector<1x8x128xi32> to vector<1xi32>
    %1169 = vector.shape_cast %1168 : vector<1xi32> to vector<1x1x1xi32>
    %1170 = vector.extract %1169[0, 0, 0] : i32 from vector<1x1x1xi32>
    %c6_i32_400 = arith.constant 6 : i32
    %1171 = arith.cmpi sle, %1170, %c6_i32_400 : i32
    %1172 = arith.select %1171, %1162, %1128 : i32
    %c32_i32_401 = arith.constant 32 : i32
    %1173 = arith.ori %1139, %c32_i32_401 : i32
    %c-2147483648_i32_402 = arith.constant -2147483648 : i32
    %1174 = arith.xori %1173, %c-2147483648_i32_402 : i32
    %1175 = vector.broadcast %1174 : i32 to vector<8x128xi32>
    %1176 = arith.cmpi slt, %6, %1175 : vector<8x128xi32>
    %1177 = arith.extui %1176 : vector<8x128xi1> to vector<8x128xi32>
    %1178 = vector.shape_cast %1177 : vector<8x128xi32> to vector<1x8x128xi32>
    %cst_403 = arith.constant dense<0> : vector<1xi32>
    %1179 = vector.multi_reduction <add>, %1178, %cst_403 [1, 2] : vector<1x8x128xi32> to vector<1xi32>
    %1180 = vector.shape_cast %1179 : vector<1xi32> to vector<1x1x1xi32>
    %1181 = vector.extract %1180[0, 0, 0] : i32 from vector<1x1x1xi32>
    %c9_i32_404 = arith.constant 9 : i32
    %1182 = arith.cmpi sle, %1181, %c9_i32_404 : i32
    %1183 = arith.select %1182, %1173, %1139 : i32
    %c32_i32_405 = arith.constant 32 : i32
    %1184 = arith.ori %1150, %c32_i32_405 : i32
    %c-2147483648_i32_406 = arith.constant -2147483648 : i32
    %1185 = arith.xori %1184, %c-2147483648_i32_406 : i32
    %1186 = vector.broadcast %1185 : i32 to vector<8x128xi32>
    %1187 = arith.cmpi slt, %6, %1186 : vector<8x128xi32>
    %1188 = arith.extui %1187 : vector<8x128xi1> to vector<8x128xi32>
    %1189 = vector.shape_cast %1188 : vector<8x128xi32> to vector<1x8x128xi32>
    %cst_407 = arith.constant dense<0> : vector<1xi32>
    %1190 = vector.multi_reduction <add>, %1189, %cst_407 [1, 2] : vector<1x8x128xi32> to vector<1xi32>
    %1191 = vector.shape_cast %1190 : vector<1xi32> to vector<1x1x1xi32>
    %1192 = vector.extract %1191[0, 0, 0] : i32 from vector<1x1x1xi32>
    %c10_i32_408 = arith.constant 10 : i32
    %1193 = arith.cmpi sle, %1192, %c10_i32_408 : i32
    %1194 = arith.select %1193, %1184, %1150 : i32
    %c16_i32 = arith.constant 16 : i32
    %1195 = arith.ori %1161, %c16_i32 : i32
    %c-2147483648_i32_409 = arith.constant -2147483648 : i32
    %1196 = arith.xori %1195, %c-2147483648_i32_409 : i32
    %1197 = vector.broadcast %1196 : i32 to vector<8x128xi32>
    %1198 = arith.cmpi slt, %6, %1197 : vector<8x128xi32>
    %1199 = arith.extui %1198 : vector<8x128xi1> to vector<8x128xi32>
    %1200 = vector.shape_cast %1199 : vector<8x128xi32> to vector<1x8x128xi32>
    %cst_410 = arith.constant dense<0> : vector<1xi32>
    %1201 = vector.multi_reduction <add>, %1200, %cst_410 [1, 2] : vector<1x8x128xi32> to vector<1xi32>
    %1202 = vector.shape_cast %1201 : vector<1xi32> to vector<1x1x1xi32>
    %1203 = vector.extract %1202[0, 0, 0] : i32 from vector<1x1x1xi32>
    %c5_i32_411 = arith.constant 5 : i32
    %1204 = arith.cmpi sle, %1203, %c5_i32_411 : i32
    %1205 = arith.select %1204, %1195, %1161 : i32
    %c16_i32_412 = arith.constant 16 : i32
    %1206 = arith.ori %1172, %c16_i32_412 : i32
    %c-2147483648_i32_413 = arith.constant -2147483648 : i32
    %1207 = arith.xori %1206, %c-2147483648_i32_413 : i32
    %1208 = vector.broadcast %1207 : i32 to vector<8x128xi32>
    %1209 = arith.cmpi slt, %6, %1208 : vector<8x128xi32>
    %1210 = arith.extui %1209 : vector<8x128xi1> to vector<8x128xi32>
    %1211 = vector.shape_cast %1210 : vector<8x128xi32> to vector<1x8x128xi32>
    %cst_414 = arith.constant dense<0> : vector<1xi32>
    %1212 = vector.multi_reduction <add>, %1211, %cst_414 [1, 2] : vector<1x8x128xi32> to vector<1xi32>
    %1213 = vector.shape_cast %1212 : vector<1xi32> to vector<1x1x1xi32>
    %1214 = vector.extract %1213[0, 0, 0] : i32 from vector<1x1x1xi32>
    %c6_i32_415 = arith.constant 6 : i32
    %1215 = arith.cmpi sle, %1214, %c6_i32_415 : i32
    %1216 = arith.select %1215, %1206, %1172 : i32
    %c16_i32_416 = arith.constant 16 : i32
    %1217 = arith.ori %1183, %c16_i32_416 : i32
    %c-2147483648_i32_417 = arith.constant -2147483648 : i32
    %1218 = arith.xori %1217, %c-2147483648_i32_417 : i32
    %1219 = vector.broadcast %1218 : i32 to vector<8x128xi32>
    %1220 = arith.cmpi slt, %6, %1219 : vector<8x128xi32>
    %1221 = arith.extui %1220 : vector<8x128xi1> to vector<8x128xi32>
    %1222 = vector.shape_cast %1221 : vector<8x128xi32> to vector<1x8x128xi32>
    %cst_418 = arith.constant dense<0> : vector<1xi32>
    %1223 = vector.multi_reduction <add>, %1222, %cst_418 [1, 2] : vector<1x8x128xi32> to vector<1xi32>
    %1224 = vector.shape_cast %1223 : vector<1xi32> to vector<1x1x1xi32>
    %1225 = vector.extract %1224[0, 0, 0] : i32 from vector<1x1x1xi32>
    %c9_i32_419 = arith.constant 9 : i32
    %1226 = arith.cmpi sle, %1225, %c9_i32_419 : i32
    %1227 = arith.select %1226, %1217, %1183 : i32
    %c16_i32_420 = arith.constant 16 : i32
    %1228 = arith.ori %1194, %c16_i32_420 : i32
    %c-2147483648_i32_421 = arith.constant -2147483648 : i32
    %1229 = arith.xori %1228, %c-2147483648_i32_421 : i32
    %1230 = vector.broadcast %1229 : i32 to vector<8x128xi32>
    %1231 = arith.cmpi slt, %6, %1230 : vector<8x128xi32>
    %1232 = arith.extui %1231 : vector<8x128xi1> to vector<8x128xi32>
    %1233 = vector.shape_cast %1232 : vector<8x128xi32> to vector<1x8x128xi32>
    %cst_422 = arith.constant dense<0> : vector<1xi32>
    %1234 = vector.multi_reduction <add>, %1233, %cst_422 [1, 2] : vector<1x8x128xi32> to vector<1xi32>
    %1235 = vector.shape_cast %1234 : vector<1xi32> to vector<1x1x1xi32>
    %1236 = vector.extract %1235[0, 0, 0] : i32 from vector<1x1x1xi32>
    %c10_i32_423 = arith.constant 10 : i32
    %1237 = arith.cmpi sle, %1236, %c10_i32_423 : i32
    %1238 = arith.select %1237, %1228, %1194 : i32
    %c8_i32 = arith.constant 8 : i32
    %1239 = arith.ori %1205, %c8_i32 : i32
    %c-2147483648_i32_424 = arith.constant -2147483648 : i32
    %1240 = arith.xori %1239, %c-2147483648_i32_424 : i32
    %1241 = vector.broadcast %1240 : i32 to vector<8x128xi32>
    %1242 = arith.cmpi slt, %6, %1241 : vector<8x128xi32>
    %1243 = arith.extui %1242 : vector<8x128xi1> to vector<8x128xi32>
    %1244 = vector.shape_cast %1243 : vector<8x128xi32> to vector<1x8x128xi32>
    %cst_425 = arith.constant dense<0> : vector<1xi32>
    %1245 = vector.multi_reduction <add>, %1244, %cst_425 [1, 2] : vector<1x8x128xi32> to vector<1xi32>
    %1246 = vector.shape_cast %1245 : vector<1xi32> to vector<1x1x1xi32>
    %1247 = vector.extract %1246[0, 0, 0] : i32 from vector<1x1x1xi32>
    %c5_i32_426 = arith.constant 5 : i32
    %1248 = arith.cmpi sle, %1247, %c5_i32_426 : i32
    %1249 = arith.select %1248, %1239, %1205 : i32
    %c8_i32_427 = arith.constant 8 : i32
    %1250 = arith.ori %1216, %c8_i32_427 : i32
    %c-2147483648_i32_428 = arith.constant -2147483648 : i32
    %1251 = arith.xori %1250, %c-2147483648_i32_428 : i32
    %1252 = vector.broadcast %1251 : i32 to vector<8x128xi32>
    %1253 = arith.cmpi slt, %6, %1252 : vector<8x128xi32>
    %1254 = arith.extui %1253 : vector<8x128xi1> to vector<8x128xi32>
    %1255 = vector.shape_cast %1254 : vector<8x128xi32> to vector<1x8x128xi32>
    %cst_429 = arith.constant dense<0> : vector<1xi32>
    %1256 = vector.multi_reduction <add>, %1255, %cst_429 [1, 2] : vector<1x8x128xi32> to vector<1xi32>
    %1257 = vector.shape_cast %1256 : vector<1xi32> to vector<1x1x1xi32>
    %1258 = vector.extract %1257[0, 0, 0] : i32 from vector<1x1x1xi32>
    %c6_i32_430 = arith.constant 6 : i32
    %1259 = arith.cmpi sle, %1258, %c6_i32_430 : i32
    %1260 = arith.select %1259, %1250, %1216 : i32
    %c8_i32_431 = arith.constant 8 : i32
    %1261 = arith.ori %1227, %c8_i32_431 : i32
    %c-2147483648_i32_432 = arith.constant -2147483648 : i32
    %1262 = arith.xori %1261, %c-2147483648_i32_432 : i32
    %1263 = vector.broadcast %1262 : i32 to vector<8x128xi32>
    %1264 = arith.cmpi slt, %6, %1263 : vector<8x128xi32>
    %1265 = arith.extui %1264 : vector<8x128xi1> to vector<8x128xi32>
    %1266 = vector.shape_cast %1265 : vector<8x128xi32> to vector<1x8x128xi32>
    %cst_433 = arith.constant dense<0> : vector<1xi32>
    %1267 = vector.multi_reduction <add>, %1266, %cst_433 [1, 2] : vector<1x8x128xi32> to vector<1xi32>
    %1268 = vector.shape_cast %1267 : vector<1xi32> to vector<1x1x1xi32>
    %1269 = vector.extract %1268[0, 0, 0] : i32 from vector<1x1x1xi32>
    %c9_i32_434 = arith.constant 9 : i32
    %1270 = arith.cmpi sle, %1269, %c9_i32_434 : i32
    %1271 = arith.select %1270, %1261, %1227 : i32
    %c8_i32_435 = arith.constant 8 : i32
    %1272 = arith.ori %1238, %c8_i32_435 : i32
    %c-2147483648_i32_436 = arith.constant -2147483648 : i32
    %1273 = arith.xori %1272, %c-2147483648_i32_436 : i32
    %1274 = vector.broadcast %1273 : i32 to vector<8x128xi32>
    %1275 = arith.cmpi slt, %6, %1274 : vector<8x128xi32>
    %1276 = arith.extui %1275 : vector<8x128xi1> to vector<8x128xi32>
    %1277 = vector.shape_cast %1276 : vector<8x128xi32> to vector<1x8x128xi32>
    %cst_437 = arith.constant dense<0> : vector<1xi32>
    %1278 = vector.multi_reduction <add>, %1277, %cst_437 [1, 2] : vector<1x8x128xi32> to vector<1xi32>
    %1279 = vector.shape_cast %1278 : vector<1xi32> to vector<1x1x1xi32>
    %1280 = vector.extract %1279[0, 0, 0] : i32 from vector<1x1x1xi32>
    %c10_i32_438 = arith.constant 10 : i32
    %1281 = arith.cmpi sle, %1280, %c10_i32_438 : i32
    %1282 = arith.select %1281, %1272, %1238 : i32
    %c4_i32 = arith.constant 4 : i32
    %1283 = arith.ori %1249, %c4_i32 : i32
    %c-2147483648_i32_439 = arith.constant -2147483648 : i32
    %1284 = arith.xori %1283, %c-2147483648_i32_439 : i32
    %1285 = vector.broadcast %1284 : i32 to vector<8x128xi32>
    %1286 = arith.cmpi slt, %6, %1285 : vector<8x128xi32>
    %1287 = arith.extui %1286 : vector<8x128xi1> to vector<8x128xi32>
    %1288 = vector.shape_cast %1287 : vector<8x128xi32> to vector<1x8x128xi32>
    %cst_440 = arith.constant dense<0> : vector<1xi32>
    %1289 = vector.multi_reduction <add>, %1288, %cst_440 [1, 2] : vector<1x8x128xi32> to vector<1xi32>
    %1290 = vector.shape_cast %1289 : vector<1xi32> to vector<1x1x1xi32>
    %1291 = vector.extract %1290[0, 0, 0] : i32 from vector<1x1x1xi32>
    %c5_i32_441 = arith.constant 5 : i32
    %1292 = arith.cmpi sle, %1291, %c5_i32_441 : i32
    %1293 = arith.select %1292, %1283, %1249 : i32
    %c4_i32_442 = arith.constant 4 : i32
    %1294 = arith.ori %1260, %c4_i32_442 : i32
    %c-2147483648_i32_443 = arith.constant -2147483648 : i32
    %1295 = arith.xori %1294, %c-2147483648_i32_443 : i32
    %1296 = vector.broadcast %1295 : i32 to vector<8x128xi32>
    %1297 = arith.cmpi slt, %6, %1296 : vector<8x128xi32>
    %1298 = arith.extui %1297 : vector<8x128xi1> to vector<8x128xi32>
    %1299 = vector.shape_cast %1298 : vector<8x128xi32> to vector<1x8x128xi32>
    %cst_444 = arith.constant dense<0> : vector<1xi32>
    %1300 = vector.multi_reduction <add>, %1299, %cst_444 [1, 2] : vector<1x8x128xi32> to vector<1xi32>
    %1301 = vector.shape_cast %1300 : vector<1xi32> to vector<1x1x1xi32>
    %1302 = vector.extract %1301[0, 0, 0] : i32 from vector<1x1x1xi32>
    %c6_i32_445 = arith.constant 6 : i32
    %1303 = arith.cmpi sle, %1302, %c6_i32_445 : i32
    %1304 = arith.select %1303, %1294, %1260 : i32
    %c4_i32_446 = arith.constant 4 : i32
    %1305 = arith.ori %1271, %c4_i32_446 : i32
    %c-2147483648_i32_447 = arith.constant -2147483648 : i32
    %1306 = arith.xori %1305, %c-2147483648_i32_447 : i32
    %1307 = vector.broadcast %1306 : i32 to vector<8x128xi32>
    %1308 = arith.cmpi slt, %6, %1307 : vector<8x128xi32>
    %1309 = arith.extui %1308 : vector<8x128xi1> to vector<8x128xi32>
    %1310 = vector.shape_cast %1309 : vector<8x128xi32> to vector<1x8x128xi32>
    %cst_448 = arith.constant dense<0> : vector<1xi32>
    %1311 = vector.multi_reduction <add>, %1310, %cst_448 [1, 2] : vector<1x8x128xi32> to vector<1xi32>
    %1312 = vector.shape_cast %1311 : vector<1xi32> to vector<1x1x1xi32>
    %1313 = vector.extract %1312[0, 0, 0] : i32 from vector<1x1x1xi32>
    %c9_i32_449 = arith.constant 9 : i32
    %1314 = arith.cmpi sle, %1313, %c9_i32_449 : i32
    %1315 = arith.select %1314, %1305, %1271 : i32
    %c4_i32_450 = arith.constant 4 : i32
    %1316 = arith.ori %1282, %c4_i32_450 : i32
    %c-2147483648_i32_451 = arith.constant -2147483648 : i32
    %1317 = arith.xori %1316, %c-2147483648_i32_451 : i32
    %1318 = vector.broadcast %1317 : i32 to vector<8x128xi32>
    %1319 = arith.cmpi slt, %6, %1318 : vector<8x128xi32>
    %1320 = arith.extui %1319 : vector<8x128xi1> to vector<8x128xi32>
    %1321 = vector.shape_cast %1320 : vector<8x128xi32> to vector<1x8x128xi32>
    %cst_452 = arith.constant dense<0> : vector<1xi32>
    %1322 = vector.multi_reduction <add>, %1321, %cst_452 [1, 2] : vector<1x8x128xi32> to vector<1xi32>
    %1323 = vector.shape_cast %1322 : vector<1xi32> to vector<1x1x1xi32>
    %1324 = vector.extract %1323[0, 0, 0] : i32 from vector<1x1x1xi32>
    %c10_i32_453 = arith.constant 10 : i32
    %1325 = arith.cmpi sle, %1324, %c10_i32_453 : i32
    %1326 = arith.select %1325, %1316, %1282 : i32
    %c2_i32 = arith.constant 2 : i32
    %1327 = arith.ori %1293, %c2_i32 : i32
    %c-2147483648_i32_454 = arith.constant -2147483648 : i32
    %1328 = arith.xori %1327, %c-2147483648_i32_454 : i32
    %1329 = vector.broadcast %1328 : i32 to vector<8x128xi32>
    %1330 = arith.cmpi slt, %6, %1329 : vector<8x128xi32>
    %1331 = arith.extui %1330 : vector<8x128xi1> to vector<8x128xi32>
    %1332 = vector.shape_cast %1331 : vector<8x128xi32> to vector<1x8x128xi32>
    %cst_455 = arith.constant dense<0> : vector<1xi32>
    %1333 = vector.multi_reduction <add>, %1332, %cst_455 [1, 2] : vector<1x8x128xi32> to vector<1xi32>
    %1334 = vector.shape_cast %1333 : vector<1xi32> to vector<1x1x1xi32>
    %1335 = vector.extract %1334[0, 0, 0] : i32 from vector<1x1x1xi32>
    %c5_i32_456 = arith.constant 5 : i32
    %1336 = arith.cmpi sle, %1335, %c5_i32_456 : i32
    %1337 = arith.select %1336, %1327, %1293 : i32
    %c2_i32_457 = arith.constant 2 : i32
    %1338 = arith.ori %1304, %c2_i32_457 : i32
    %c-2147483648_i32_458 = arith.constant -2147483648 : i32
    %1339 = arith.xori %1338, %c-2147483648_i32_458 : i32
    %1340 = vector.broadcast %1339 : i32 to vector<8x128xi32>
    %1341 = arith.cmpi slt, %6, %1340 : vector<8x128xi32>
    %1342 = arith.extui %1341 : vector<8x128xi1> to vector<8x128xi32>
    %1343 = vector.shape_cast %1342 : vector<8x128xi32> to vector<1x8x128xi32>
    %cst_459 = arith.constant dense<0> : vector<1xi32>
    %1344 = vector.multi_reduction <add>, %1343, %cst_459 [1, 2] : vector<1x8x128xi32> to vector<1xi32>
    %1345 = vector.shape_cast %1344 : vector<1xi32> to vector<1x1x1xi32>
    %1346 = vector.extract %1345[0, 0, 0] : i32 from vector<1x1x1xi32>
    %c6_i32_460 = arith.constant 6 : i32
    %1347 = arith.cmpi sle, %1346, %c6_i32_460 : i32
    %1348 = arith.select %1347, %1338, %1304 : i32
    %c2_i32_461 = arith.constant 2 : i32
    %1349 = arith.ori %1315, %c2_i32_461 : i32
    %c-2147483648_i32_462 = arith.constant -2147483648 : i32
    %1350 = arith.xori %1349, %c-2147483648_i32_462 : i32
    %1351 = vector.broadcast %1350 : i32 to vector<8x128xi32>
    %1352 = arith.cmpi slt, %6, %1351 : vector<8x128xi32>
    %1353 = arith.extui %1352 : vector<8x128xi1> to vector<8x128xi32>
    %1354 = vector.shape_cast %1353 : vector<8x128xi32> to vector<1x8x128xi32>
    %cst_463 = arith.constant dense<0> : vector<1xi32>
    %1355 = vector.multi_reduction <add>, %1354, %cst_463 [1, 2] : vector<1x8x128xi32> to vector<1xi32>
    %1356 = vector.shape_cast %1355 : vector<1xi32> to vector<1x1x1xi32>
    %1357 = vector.extract %1356[0, 0, 0] : i32 from vector<1x1x1xi32>
    %c9_i32_464 = arith.constant 9 : i32
    %1358 = arith.cmpi sle, %1357, %c9_i32_464 : i32
    %1359 = arith.select %1358, %1349, %1315 : i32
    %c2_i32_465 = arith.constant 2 : i32
    %1360 = arith.ori %1326, %c2_i32_465 : i32
    %c-2147483648_i32_466 = arith.constant -2147483648 : i32
    %1361 = arith.xori %1360, %c-2147483648_i32_466 : i32
    %1362 = vector.broadcast %1361 : i32 to vector<8x128xi32>
    %1363 = arith.cmpi slt, %6, %1362 : vector<8x128xi32>
    %1364 = arith.extui %1363 : vector<8x128xi1> to vector<8x128xi32>
    %1365 = vector.shape_cast %1364 : vector<8x128xi32> to vector<1x8x128xi32>
    %cst_467 = arith.constant dense<0> : vector<1xi32>
    %1366 = vector.multi_reduction <add>, %1365, %cst_467 [1, 2] : vector<1x8x128xi32> to vector<1xi32>
    %1367 = vector.shape_cast %1366 : vector<1xi32> to vector<1x1x1xi32>
    %1368 = vector.extract %1367[0, 0, 0] : i32 from vector<1x1x1xi32>
    %c10_i32_468 = arith.constant 10 : i32
    %1369 = arith.cmpi sle, %1368, %c10_i32_468 : i32
    %1370 = arith.select %1369, %1360, %1326 : i32
    %c1_i32 = arith.constant 1 : i32
    %1371 = arith.ori %1337, %c1_i32 : i32
    %c-2147483648_i32_469 = arith.constant -2147483648 : i32
    %1372 = arith.xori %1371, %c-2147483648_i32_469 : i32
    %1373 = vector.broadcast %1372 : i32 to vector<8x128xi32>
    %1374 = arith.cmpi slt, %6, %1373 : vector<8x128xi32>
    %1375 = arith.extui %1374 : vector<8x128xi1> to vector<8x128xi32>
    %1376 = vector.shape_cast %1375 : vector<8x128xi32> to vector<1x8x128xi32>
    %cst_470 = arith.constant dense<0> : vector<1xi32>
    %1377 = vector.multi_reduction <add>, %1376, %cst_470 [1, 2] : vector<1x8x128xi32> to vector<1xi32>
    %1378 = vector.shape_cast %1377 : vector<1xi32> to vector<1x1x1xi32>
    %1379 = vector.extract %1378[0, 0, 0] : i32 from vector<1x1x1xi32>
    %c5_i32_471 = arith.constant 5 : i32
    %1380 = arith.cmpi sle, %1379, %c5_i32_471 : i32
    %1381 = arith.select %1380, %1371, %1337 : i32
    %c1_i32_472 = arith.constant 1 : i32
    %1382 = arith.ori %1348, %c1_i32_472 : i32
    %c-2147483648_i32_473 = arith.constant -2147483648 : i32
    %1383 = arith.xori %1382, %c-2147483648_i32_473 : i32
    %1384 = vector.broadcast %1383 : i32 to vector<8x128xi32>
    %1385 = arith.cmpi slt, %6, %1384 : vector<8x128xi32>
    %1386 = arith.extui %1385 : vector<8x128xi1> to vector<8x128xi32>
    %1387 = vector.shape_cast %1386 : vector<8x128xi32> to vector<1x8x128xi32>
    %cst_474 = arith.constant dense<0> : vector<1xi32>
    %1388 = vector.multi_reduction <add>, %1387, %cst_474 [1, 2] : vector<1x8x128xi32> to vector<1xi32>
    %1389 = vector.shape_cast %1388 : vector<1xi32> to vector<1x1x1xi32>
    %1390 = vector.extract %1389[0, 0, 0] : i32 from vector<1x1x1xi32>
    %c6_i32_475 = arith.constant 6 : i32
    %1391 = arith.cmpi sle, %1390, %c6_i32_475 : i32
    %1392 = arith.select %1391, %1382, %1348 : i32
    %c1_i32_476 = arith.constant 1 : i32
    %1393 = arith.ori %1359, %c1_i32_476 : i32
    %c-2147483648_i32_477 = arith.constant -2147483648 : i32
    %1394 = arith.xori %1393, %c-2147483648_i32_477 : i32
    %1395 = vector.broadcast %1394 : i32 to vector<8x128xi32>
    %1396 = arith.cmpi slt, %6, %1395 : vector<8x128xi32>
    %1397 = arith.extui %1396 : vector<8x128xi1> to vector<8x128xi32>
    %1398 = vector.shape_cast %1397 : vector<8x128xi32> to vector<1x8x128xi32>
    %cst_478 = arith.constant dense<0> : vector<1xi32>
    %1399 = vector.multi_reduction <add>, %1398, %cst_478 [1, 2] : vector<1x8x128xi32> to vector<1xi32>
    %1400 = vector.shape_cast %1399 : vector<1xi32> to vector<1x1x1xi32>
    %1401 = vector.extract %1400[0, 0, 0] : i32 from vector<1x1x1xi32>
    %c9_i32_479 = arith.constant 9 : i32
    %1402 = arith.cmpi sle, %1401, %c9_i32_479 : i32
    %1403 = arith.select %1402, %1393, %1359 : i32
    %c1_i32_480 = arith.constant 1 : i32
    %1404 = arith.ori %1370, %c1_i32_480 : i32
    %c-2147483648_i32_481 = arith.constant -2147483648 : i32
    %1405 = arith.xori %1404, %c-2147483648_i32_481 : i32
    %1406 = vector.broadcast %1405 : i32 to vector<8x128xi32>
    %1407 = arith.cmpi slt, %6, %1406 : vector<8x128xi32>
    %1408 = arith.extui %1407 : vector<8x128xi1> to vector<8x128xi32>
    %1409 = vector.shape_cast %1408 : vector<8x128xi32> to vector<1x8x128xi32>
    %cst_482 = arith.constant dense<0> : vector<1xi32>
    %1410 = vector.multi_reduction <add>, %1409, %cst_482 [1, 2] : vector<1x8x128xi32> to vector<1xi32>
    %1411 = vector.shape_cast %1410 : vector<1xi32> to vector<1x1x1xi32>
    %1412 = vector.extract %1411[0, 0, 0] : i32 from vector<1x1x1xi32>
    %c10_i32_483 = arith.constant 10 : i32
    %1413 = arith.cmpi sle, %1412, %c10_i32_483 : i32
    %1414 = arith.select %1413, %1404, %1370 : i32
    %c-2147483648_i32_484 = arith.constant -2147483648 : i32
    %1415 = arith.xori %1381, %c-2147483648_i32_484 : i32
    %1416 = vector.broadcast %1415 : i32 to vector<8x128xi32>
    %1417 = arith.cmpi eq, %6, %1416 : vector<8x128xi32>
    %cst_485 = arith.constant 0xFF800000 : f32
    %1418 = vector.broadcast %cst_485 : f32 to vector<8x128xf32>
    %1419 = arith.select %1417, %0, %1418 : vector<8x128xi1>, vector<8x128xf32>
    %1420 = vector.shape_cast %1419 : vector<8x128xf32> to vector<1x8x128xf32>
    %cst_486 = arith.constant dense<0xFF800000> : vector<1xf32>
    %1421 = vector.multi_reduction <maximumf>, %1420, %cst_486 [1, 2] : vector<1x8x128xf32> to vector<1xf32>
    %1422 = vector.shape_cast %1421 : vector<1xf32> to vector<1x1x1xf32>
    %1423 = vector.extract %1422[0, 0, 0] : f32 from vector<1x1x1xf32>
    %c-2147483648_i32_487 = arith.constant -2147483648 : i32
    %1424 = arith.xori %1392, %c-2147483648_i32_487 : i32
    %1425 = vector.broadcast %1424 : i32 to vector<8x128xi32>
    %1426 = arith.cmpi eq, %6, %1425 : vector<8x128xi32>
    %cst_488 = arith.constant 0xFF800000 : f32
    %1427 = vector.broadcast %cst_488 : f32 to vector<8x128xf32>
    %1428 = arith.select %1426, %0, %1427 : vector<8x128xi1>, vector<8x128xf32>
    %1429 = vector.shape_cast %1428 : vector<8x128xf32> to vector<1x8x128xf32>
    %cst_489 = arith.constant dense<0xFF800000> : vector<1xf32>
    %1430 = vector.multi_reduction <maximumf>, %1429, %cst_489 [1, 2] : vector<1x8x128xf32> to vector<1xf32>
    %1431 = vector.shape_cast %1430 : vector<1xf32> to vector<1x1x1xf32>
    %1432 = vector.extract %1431[0, 0, 0] : f32 from vector<1x1x1xf32>
    %c-2147483648_i32_490 = arith.constant -2147483648 : i32
    %1433 = arith.xori %1403, %c-2147483648_i32_490 : i32
    %1434 = vector.broadcast %1433 : i32 to vector<8x128xi32>
    %1435 = arith.cmpi eq, %6, %1434 : vector<8x128xi32>
    %cst_491 = arith.constant 0xFF800000 : f32
    %1436 = vector.broadcast %cst_491 : f32 to vector<8x128xf32>
    %1437 = arith.select %1435, %0, %1436 : vector<8x128xi1>, vector<8x128xf32>
    %1438 = vector.shape_cast %1437 : vector<8x128xf32> to vector<1x8x128xf32>
    %cst_492 = arith.constant dense<0xFF800000> : vector<1xf32>
    %1439 = vector.multi_reduction <maximumf>, %1438, %cst_492 [1, 2] : vector<1x8x128xf32> to vector<1xf32>
    %1440 = vector.shape_cast %1439 : vector<1xf32> to vector<1x1x1xf32>
    %1441 = vector.extract %1440[0, 0, 0] : f32 from vector<1x1x1xf32>
    %c-2147483648_i32_493 = arith.constant -2147483648 : i32
    %1442 = arith.xori %1414, %c-2147483648_i32_493 : i32
    %1443 = vector.broadcast %1442 : i32 to vector<8x128xi32>
    %1444 = arith.cmpi eq, %6, %1443 : vector<8x128xi32>
    %cst_494 = arith.constant 0xFF800000 : f32
    %1445 = vector.broadcast %cst_494 : f32 to vector<8x128xf32>
    %1446 = arith.select %1444, %0, %1445 : vector<8x128xi1>, vector<8x128xf32>
    %1447 = vector.shape_cast %1446 : vector<8x128xf32> to vector<1x8x128xf32>
    %cst_495 = arith.constant dense<0xFF800000> : vector<1xf32>
    %1448 = vector.multi_reduction <maximumf>, %1447, %cst_495 [1, 2] : vector<1x8x128xf32> to vector<1xf32>
    %1449 = vector.shape_cast %1448 : vector<1xf32> to vector<1x1x1xf32>
    %1450 = vector.extract %1449[0, 0, 0] : f32 from vector<1x1x1xf32>
    %c0_496 = arith.constant 0 : index
    %c0_497 = arith.constant 0 : index
    %1451 = vector.load %arg1[%c0_496, %c0_497] : memref<2x2xf32, #tpu.memory_space<vmem>>, vector<2x2xf32>
    %1452 = arith.subf %1432, %1423 : f32
    %cst_498 = arith.constant 2.500000e-01 : f32
    %1453 = arith.mulf %cst_498, %1452 : f32
    %1454 = arith.addf %1423, %1453 : f32
    %1455 = vector.extract_strided_slice %1451 {offsets = [0, 0], sizes = [2, 1], strides = [1, 1]} : vector<2x2xf32> to vector<2x1xf32>
    %1456 = vector.broadcast %1454 : f32 to vector<2x1xf32>
    %1457 = arith.subf %1456, %1455 : vector<2x1xf32>
    %cst_499 = arith.constant 3.500000e-01 : f32
    %1458 = vector.broadcast %cst_499 : f32 to vector<2x1xf32>
    %1459 = arith.mulf %1458, %1457 : vector<2x1xf32>
    %cst_500 = arith.constant -6.500000e-01 : f32
    %1460 = vector.broadcast %cst_500 : f32 to vector<2x1xf32>
    %1461 = arith.mulf %1460, %1457 : vector<2x1xf32>
    %1462 = arith.maximumf %1459, %1461 : vector<2x1xf32>
    %1463 = vector.shape_cast %1462 : vector<2x1xf32> to vector<1x2x1xf32>
    %cst_501 = arith.constant dense<0.000000e+00> : vector<1xf32>
    %1464 = vector.multi_reduction <add>, %1463, %cst_501 [1, 2] : vector<1x2x1xf32> to vector<1xf32>
    %1465 = vector.shape_cast %1464 : vector<1xf32> to vector<1x1x1xf32>
    %1466 = vector.extract %1465[0, 0, 0] : f32 from vector<1x1x1xf32>
    %cst_502 = arith.constant 2.000000e+00 : f32
    %1467 = arith.divf %1466, %cst_502 : f32
    %cst_503 = arith.constant 0.000000e+00 : f32
    %1468 = arith.addf %cst_503, %1467 : f32
    %1469 = arith.subf %1450, %1441 : f32
    %cst_504 = arith.constant 7.500000e-01 : f32
    %1470 = arith.mulf %cst_504, %1469 : f32
    %1471 = arith.addf %1441, %1470 : f32
    %1472 = vector.extract_strided_slice %1451 {offsets = [0, 1], sizes = [2, 1], strides = [1, 1]} : vector<2x2xf32> to vector<2x1xf32>
    %1473 = vector.broadcast %1471 : f32 to vector<2x1xf32>
    %1474 = arith.subf %1473, %1472 : vector<2x1xf32>
    %cst_505 = arith.constant 6.500000e-01 : f32
    %1475 = vector.broadcast %cst_505 : f32 to vector<2x1xf32>
    %1476 = arith.mulf %1475, %1474 : vector<2x1xf32>
    %cst_506 = arith.constant -3.500000e-01 : f32
    %1477 = vector.broadcast %cst_506 : f32 to vector<2x1xf32>
    %1478 = arith.mulf %1477, %1474 : vector<2x1xf32>
    %1479 = arith.maximumf %1476, %1478 : vector<2x1xf32>
    %1480 = vector.shape_cast %1479 : vector<2x1xf32> to vector<1x2x1xf32>
    %cst_507 = arith.constant dense<0.000000e+00> : vector<1xf32>
    %1481 = vector.multi_reduction <add>, %1480, %cst_507 [1, 2] : vector<1x2x1xf32> to vector<1xf32>
    %1482 = vector.shape_cast %1481 : vector<1xf32> to vector<1x1x1xf32>
    %1483 = vector.extract %1482[0, 0, 0] : f32 from vector<1x1x1xf32>
    %cst_508 = arith.constant 2.000000e+00 : f32
    %1484 = arith.divf %1483, %cst_508 : f32
    %1485 = arith.addf %1468, %1484 : f32
    %1486 = vector.broadcast %1485 : f32 to vector<1x1xf32>
    %c0_509 = arith.constant 0 : index
    %c0_510 = arith.constant 0 : index
    %1487 = vector.load %arg2[%c0_509, %c0_510] : memref<1x1xf32, #tpu.memory_space<vmem>>, vector<1x1xf32>
    tpu.vector_store %arg2[%c0_509, %c0_510], %1486 {strides = array<i32>} : memref<1x1xf32, #tpu.memory_space<vmem>>, vector<1x1xf32>,
    return
  }
}

</mosaic_0001>

<llo_original>
// kernel: tpu_custom_call.1
$region0: #{tpu_custom_call.1}
  #allocation0 [shape = 'u32[]', space=smem, size = 0x4, offset = 0x4, fixed_abs, tag = 'smem constant byte address 0x4 - core index']
  #allocation1 [shape = 'u32[144,128]{1,0:T(1,128)}', space=vmem, size = 0x12000, scoped, tag = 'internal scratch']
  %s0 = inlined_call_operand.hbm [shape: f32[8,128], index: 0, kind: input, shape index: {}]
  %s1 = inlined_call_operand.vmem [shape: f32[2,2], index: 1, kind: input, shape index: {}]
  %s2 = inlined_call_operand.hbm [shape: f32[1,1], index: 2, kind: output, shape index: {}]
  %s3 = sld [smem:[#allocation0]]
  $region22: #{tpu_custom_call.1} parent=0
    _
  %s5 = ssub.s32 1, %s3
  %s6 = scalar_select 0, %s5, %s3
  $region1: #{tpu_custom_call.1} parent=0
    #allocation2 [shape = 'u8[4096]{0}', space=vmem, size = 0x1000, scoped, tag = 'input window, operand 0, single buffered']
    #allocation3 [shape = 's32[1]{0}', space=sflag, size = 0x4, scoped, tag = 'scoped memory for tpu_custom_call.1']
    #allocation4 [shape = 's32[1]{0}', space=sflag, size = 0x4, scoped, tag = 'scoped memory for tpu_custom_call.1']
    #allocation5 [shape = 'u8[512]{0}', space=vmem, size = 0x400, scoped, tag = 'output window, operand 0, single buffered']
    %7 = vsyncpa [#allocation3], 0
    %8 = vsyncpa [#allocation4], 0
    // Predicated region
    $region2: #{tpu_custom_call.1} parent=1 // pred_check
      _
    $region3: #{tpu_custom_call.1} parent=1 // pred_check_branch
      %10 = sbr.rel (0) target = $region5
    $region4: #{tpu_custom_call.1} parent=1 // pred_region
      %s12 = ssub.s32 128, 128
      %13 = vsyncadd [#allocation3], %s12
      %s15 = sshll.u32 [#allocation2], 4
      %s16 = int_to_ptr.vmem [resolvable:$true] %s15
      %18 = dma.hbm_to_vmem [thread:$0]  %s0, 128, %s16, [#allocation3]
    $region5: #{tpu_custom_call.1} parent=1 // pred_fallthru
      _
    // Predicated region
    $region6: #{tpu_custom_call.1} parent=1 // pred_check
      _
    $region7: #{tpu_custom_call.1} parent=1 // pred_check_branch
      %20 = sbr.rel (0) target = $region9
    $region8: #{tpu_custom_call.1} parent=1 // pred_region
      _
    $region9: #{tpu_custom_call.1} parent=1 // pred_fallthru
      _
    // Predicated region
    $region10: #{tpu_custom_call.1} parent=1 // pred_check
      _
    $region11: #{tpu_custom_call.1} parent=1 // pred_check_branch
      %22 = sbr.rel (0) target = $region13
    $region12: #{tpu_custom_call.1} parent=1 // pred_region
      %23 = dma.done [#allocation3], 128
    $region13: #{tpu_custom_call.1} parent=1 // pred_fallthru
      _
    %v24 = vld [vmem:[#allocation2] sm:$0xff]
    %vm26 = vcmp.ge.s32.totalorder %v24, 0
    %v27 = vxor.u32 %v24, 2147483647
    %v28 = vsel %vm26, %v24, %v27
    %vm29 = vcmp.lt.s32.totalorder %v28, 0
    %v30 = vsel %vm29, 1, 0
    %v31 = vand.u32 %v30, 65535
    %v32 = vshrl.u32 %v30, 16
    %v33 = vcvt.s32.f32 %v31
    %v34 = vcvt.s32.f32 %v32
    %35 = vadd.xlane.f32.xlu0 %v33
    %v36 = vpop.xlane.xlu0 %35
    %37 = vadd.xlane.f32.xlu0 %v34
    %v38 = vpop.xlane.xlu0 %37
    %v39 = vcvt.f32.s32 %v36
    %v40 = vcvt.f32.s32 %v38
    %v41 = vshll.u32 %v40, 16
    %v42 = vadd.s32 %v41, %v39
    %v43 = vrot.slane %v42, 4
    %v44 = vadd.s32 %v42, %v43
    %v45 = vrot.slane %v44, 2
    %v46 = vadd.s32 %v44, %v45
    %v47 = vrot.slane %v46, 1
    %v48 = vadd.s32 %v46, %v47
    %s49 = vtos %v48
    %p50 = scmp.le.s32.totalorder %s49, 5
    %s51 = scalar_select %p50, 2147483648, 0
    %p52 = scmp.le.s32.totalorder %s49, 6
    %s53 = scalar_select %p52, 2147483648, 0
    %p54 = scmp.le.s32.totalorder %s49, 9
    %s55 = scalar_select %p54, 2147483648, 0
    %p56 = scmp.le.s32.totalorder %s49, 10
    %s57 = scalar_select %p56, 2147483648, 0
    %s58 = sor.u32 %s51, 1073741824
    %s59 = sxor.u32 %s58, 2147483648
    %v60 = vstv %s59
    %vm61 = vcmp.lt.s32.totalorder %v28, %v60
    %v62 = vsel %vm61, 1, 0
    %v63 = vand.u32 %v62, 65535
    %v64 = vshrl.u32 %v62, 16
    %v65 = vcvt.s32.f32 %v63
    %v66 = vcvt.s32.f32 %v64
    %67 = vadd.xlane.f32.xlu0 %v65
    %v68 = vpop.xlane.xlu0 %67
    %69 = vadd.xlane.f32.xlu0 %v66
    %v70 = vpop.xlane.xlu0 %69
    %v71 = vcvt.f32.s32 %v68
    %v72 = vcvt.f32.s32 %v70
    %v73 = vshll.u32 %v72, 16
    %v74 = vadd.s32 %v73, %v71
    %v75 = vrot.slane %v74, 4
    %v76 = vadd.s32 %v74, %v75
    %v77 = vrot.slane %v76, 2
    %v78 = vadd.s32 %v76, %v77
    %v79 = vrot.slane %v78, 1
    %v80 = vadd.s32 %v78, %v79
    %s81 = vtos %v80
    %p82 = scmp.le.s32.totalorder %s81, 5
    %s83 = scalar_select %p82, %s58, %s51
    %s84 = sor.u32 %s53, 1073741824
    %s85 = sxor.u32 %s84, 2147483648
    %v86 = vstv %s85
    %vm87 = vcmp.lt.s32.totalorder %v28, %v86
    %v88 = vsel %vm87, 1, 0
    %v89 = vand.u32 %v88, 65535
    %v90 = vshrl.u32 %v88, 16
    %v91 = vcvt.s32.f32 %v89
    %v92 = vcvt.s32.f32 %v90
    %93 = vadd.xlane.f32.xlu0 %v91
    %v94 = vpop.xlane.xlu0 %93
    %95 = vadd.xlane.f32.xlu0 %v92
    %v96 = vpop.xlane.xlu0 %95
    %v97 = vcvt.f32.s32 %v94
    %v98 = vcvt.f32.s32 %v96
    %v99 = vshll.u32 %v98, 16
    %v100 = vadd.s32 %v99, %v97
    %v101 = vrot.slane %v100, 4
    %v102 = vadd.s32 %v100, %v101
    %v103 = vrot.slane %v102, 2
    %v104 = vadd.s32 %v102, %v103
    %v105 = vrot.slane %v104, 1
    %v106 = vadd.s32 %v104, %v105
    %s107 = vtos %v106
    %p108 = scmp.le.s32.totalorder %s107, 6
    %s109 = scalar_select %p108, %s84, %s53
    %s110 = sor.u32 %s55, 1073741824
    %s111 = sxor.u32 %s110, 2147483648
    %v112 = vstv %s111
    %vm113 = vcmp.lt.s32.totalorder %v28, %v112
    %v114 = vsel %vm113, 1, 0
    %v115 = vand.u32 %v114, 65535
    %v116 = vshrl.u32 %v114, 16
    %v117 = vcvt.s32.f32 %v115
    %v118 = vcvt.s32.f32 %v116
    %119 = vadd.xlane.f32.xlu0 %v117
    %v120 = vpop.xlane.xlu0 %119
    %121 = vadd.xlane.f32.xlu0 %v118
    %v122 = vpop.xlane.xlu0 %121
    %v123 = vcvt.f32.s32 %v120
    %v124 = vcvt.f32.s32 %v122
    %v125 = vshll.u32 %v124, 16
    %v126 = vadd.s32 %v125, %v123
    %v127 = vrot.slane %v126, 4
    %v128 = vadd.s32 %v126, %v127
    %v129 = vrot.slane %v128, 2
    %v130 = vadd.s32 %v128, %v129
    %v131 = vrot.slane %v130, 1
    %v132 = vadd.s32 %v130, %v131
    %s133 = vtos %v132
    %p134 = scmp.le.s32.totalorder %s133, 9
    %s135 = scalar_select %p134, %s110, %s55
    %s136 = sor.u32 %s57, 1073741824
    %s137 = sxor.u32 %s136, 2147483648
    %v138 = vstv %s137
    %vm139 = vcmp.lt.s32.totalorder %v28, %v138
    %v140 = vsel %vm139, 1, 0
    %v141 = vand.u32 %v140, 65535
    %v142 = vshrl.u32 %v140, 16
    %v143 = vcvt.s32.f32 %v141
    %v144 = vcvt.s32.f32 %v142
    %145 = vadd.xlane.f32.xlu0 %v143
    %v146 = vpop.xlane.xlu0 %145
    %147 = vadd.xlane.f32.xlu0 %v144
    %v148 = vpop.xlane.xlu0 %147
    %v149 = vcvt.f32.s32 %v146
    %v150 = vcvt.f32.s32 %v148
    %v151 = vshll.u32 %v150, 16
    %v152 = vadd.s32 %v151, %v149
    %v153 = vrot.slane %v152, 4
    %v154 = vadd.s32 %v152, %v153
    %v155 = vrot.slane %v154, 2
    %v156 = vadd.s32 %v154, %v155
    %v157 = vrot.slane %v156, 1
    %v158 = vadd.s32 %v156, %v157
    %s159 = vtos %v158
    %p160 = scmp.le.s32.totalorder %s159, 10
    %s161 = scalar_select %p160, %s136, %s57
    %s162 = sor.u32 %s83, 536870912
    %s163 = sxor.u32 %s162, 2147483648
    %v164 = vstv %s163
    %vm165 = vcmp.lt.s32.totalorder %v28, %v164
    %v166 = vsel %vm165, 1, 0
    %v167 = vand.u32 %v166, 65535
    %v168 = vshrl.u32 %v166, 16
    %v169 = vcvt.s32.f32 %v167
    %v170 = vcvt.s32.f32 %v168
    %171 = vadd.xlane.f32.xlu0 %v169
    %v172 = vpop.xlane.xlu0 %171
    %173 = vadd.xlane.f32.xlu0 %v170
    %v174 = vpop.xlane.xlu0 %173
    %v175 = vcvt.f32.s32 %v172
    %v176 = vcvt.f32.s32 %v174
    %v177 = vshll.u32 %v176, 16
    %v178 = vadd.s32 %v177, %v175
    %v179 = vrot.slane %v178, 4
    %v180 = vadd.s32 %v178, %v179
    %v181 = vrot.slane %v180, 2
    %v182 = vadd.s32 %v180, %v181
    %v183 = vrot.slane %v182, 1
    %v184 = vadd.s32 %v182, %v183
    %s185 = vtos %v184
    %p186 = scmp.le.s32.totalorder %s185, 5
    %s187 = scalar_select %p186, %s162, %s83
    %s188 = sor.u32 %s109, 536870912
    %s189 = sxor.u32 %s188, 2147483648
    %v190 = vstv %s189
    %vm191 = vcmp.lt.s32.totalorder %v28, %v190
    %v192 = vsel %vm191, 1, 0
    %v193 = vand.u32 %v192, 65535
    %v194 = vshrl.u32 %v192, 16
    %v195 = vcvt.s32.f32 %v193
    %v196 = vcvt.s32.f32 %v194
    %197 = vadd.xlane.f32.xlu0 %v195
    %v198 = vpop.xlane.xlu0 %197
    %199 = vadd.xlane.f32.xlu0 %v196
    %v200 = vpop.xlane.xlu0 %199
    %v201 = vcvt.f32.s32 %v198
    %v202 = vcvt.f32.s32 %v200
    %v203 = vshll.u32 %v202, 16
    %v204 = vadd.s32 %v203, %v201
    %v205 = vrot.slane %v204, 4
    %v206 = vadd.s32 %v204, %v205
    %v207 = vrot.slane %v206, 2
    %v208 = vadd.s32 %v206, %v207
    %v209 = vrot.slane %v208, 1
    %v210 = vadd.s32 %v208, %v209
    %s211 = vtos %v210
    %p212 = scmp.le.s32.totalorder %s211, 6
    %s213 = scalar_select %p212, %s188, %s109
    %s214 = sor.u32 %s135, 536870912
    %s215 = sxor.u32 %s214, 2147483648
    %v216 = vstv %s215
    %vm217 = vcmp.lt.s32.totalorder %v28, %v216
    %v218 = vsel %vm217, 1, 0
    %v219 = vand.u32 %v218, 65535
    %v220 = vshrl.u32 %v218, 16
    %v221 = vcvt.s32.f32 %v219
    %v222 = vcvt.s32.f32 %v220
    %223 = vadd.xlane.f32.xlu0 %v221
    %v224 = vpop.xlane.xlu0 %223
    %225 = vadd.xlane.f32.xlu0 %v222
    %v226 = vpop.xlane.xlu0 %225
    %v227 = vcvt.f32.s32 %v224
    %v228 = vcvt.f32.s32 %v226
    %v229 = vshll.u32 %v228, 16
    %v230 = vadd.s32 %v229, %v227
    %v231 = vrot.slane %v230, 4
    %v232 = vadd.s32 %v230, %v231
    %v233 = vrot.slane %v232, 2
    %v234 = vadd.s32 %v232, %v233
    %v235 = vrot.slane %v234, 1
    %v236 = vadd.s32 %v234, %v235
    %s237 = vtos %v236
    %p238 = scmp.le.s32.totalorder %s237, 9
    %s239 = scalar_select %p238, %s214, %s135
    %s240 = sor.u32 %s161, 536870912
    %s241 = sxor.u32 %s240, 2147483648
    %v242 = vstv %s241
    %vm243 = vcmp.lt.s32.totalorder %v28, %v242
    %v244 = vsel %vm243, 1, 0
    %v245 = vand.u32 %v244, 65535
    %v246 = vshrl.u32 %v244, 16
    %v247 = vcvt.s32.f32 %v245
    %v248 = vcvt.s32.f32 %v246
    %249 = vadd.xlane.f32.xlu0 %v247
    %v250 = vpop.xlane.xlu0 %249
    %251 = vadd.xlane.f32.xlu0 %v248
    %v252 = vpop.xlane.xlu0 %251
    %v253 = vcvt.f32.s32 %v250
    %v254 = vcvt.f32.s32 %v252
    %v255 = vshll.u32 %v254, 16
    %v256 = vadd.s32 %v255, %v253
    %v257 = vrot.slane %v256, 4
    %v258 = vadd.s32 %v256, %v257
    %v259 = vrot.slane %v258, 2
    %v260 = vadd.s32 %v258, %v259
    %v261 = vrot.slane %v260, 1
    %v262 = vadd.s32 %v260, %v261
    %s263 = vtos %v262
    %p264 = scmp.le.s32.totalorder %s263, 10
    %s265 = scalar_select %p264, %s240, %s161
    %s266 = sor.u32 %s187, 268435456
    %s267 = sxor.u32 %s266, 2147483648
    %v268 = vstv %s267
    %vm269 = vcmp.lt.s32.totalorder %v28, %v268
    %v270 = vsel %vm269, 1, 0
    %v271 = vand.u32 %v270, 65535
    %v272 = vshrl.u32 %v270, 16
    %v273 = vcvt.s32.f32 %v271
    %v274 = vcvt.s32.f32 %v272
    %275 = vadd.xlane.f32.xlu0 %v273
    %v276 = vpop.xlane.xlu0 %275
    %277 = vadd.xlane.f32.xlu0 %v274
    %v278 = vpop.xlane.xlu0 %277
    %v279 = vcvt.f32.s32 %v276
    %v280 = vcvt.f32.s32 %v278
    %v281 = vshll.u32 %v280, 16
    %v282 = vadd.s32 %v281, %v279
    %v283 = vrot.slane %v282, 4
    %v284 = vadd.s32 %v282, %v283
    %v285 = vrot.slane %v284, 2
    %v286 = vadd.s32 %v284, %v285
    %v287 = vrot.slane %v286, 1
    %v288 = vadd.s32 %v286, %v287
    %s289 = vtos %v288
    %p290 = scmp.le.s32.totalorder %s289, 5
    %s291 = scalar_select %p290, %s266, %s187
    %s292 = sor.u32 %s213, 268435456
    %s293 = sxor.u32 %s292, 2147483648
    %v294 = vstv %s293
    %vm295 = vcmp.lt.s32.totalorder %v28, %v294
    %v296 = vsel %vm295, 1, 0
    %v297 = vand.u32 %v296, 65535
    %v298 = vshrl.u32 %v296, 16
    %v299 = vcvt.s32.f32 %v297
    %v300 = vcvt.s32.f32 %v298
    %301 = vadd.xlane.f32.xlu0 %v299
    %v302 = vpop.xlane.xlu0 %301
    %303 = vadd.xlane.f32.xlu0 %v300
    %v304 = vpop.xlane.xlu0 %303
    %v305 = vcvt.f32.s32 %v302
    %v306 = vcvt.f32.s32 %v304
    %v307 = vshll.u32 %v306, 16
    %v308 = vadd.s32 %v307, %v305
    %v309 = vrot.slane %v308, 4
    %v310 = vadd.s32 %v308, %v309
    %v311 = vrot.slane %v310, 2
    %v312 = vadd.s32 %v310, %v311
    %v313 = vrot.slane %v312, 1
    %v314 = vadd.s32 %v312, %v313
    %s315 = vtos %v314
    %p316 = scmp.le.s32.totalorder %s315, 6
    %s317 = scalar_select %p316, %s292, %s213
    %s318 = sor.u32 %s239, 268435456
    %s319 = sxor.u32 %s318, 2147483648
    %v320 = vstv %s319
    %vm321 = vcmp.lt.s32.totalorder %v28, %v320
    %v322 = vsel %vm321, 1, 0
    %v323 = vand.u32 %v322, 65535
    %v324 = vshrl.u32 %v322, 16
    %v325 = vcvt.s32.f32 %v323
    %v326 = vcvt.s32.f32 %v324
    %327 = vadd.xlane.f32.xlu0 %v325
    %v328 = vpop.xlane.xlu0 %327
    %329 = vadd.xlane.f32.xlu0 %v326
    %v330 = vpop.xlane.xlu0 %329
    %v331 = vcvt.f32.s32 %v328
    %v332 = vcvt.f32.s32 %v330
    %v333 = vshll.u32 %v332, 16
    %v334 = vadd.s32 %v333, %v331
    %v335 = vrot.slane %v334, 4
    %v336 = vadd.s32 %v334, %v335
    %v337 = vrot.slane %v336, 2
    %v338 = vadd.s32 %v336, %v337
    %v339 = vrot.slane %v338, 1
    %v340 = vadd.s32 %v338, %v339
    %s341 = vtos %v340
    %p342 = scmp.le.s32.totalorder %s341, 9
    %s343 = scalar_select %p342, %s318, %s239
    %s344 = sor.u32 %s265, 268435456
    %s345 = sxor.u32 %s344, 2147483648
    %v346 = vstv %s345
    %vm347 = vcmp.lt.s32.totalorder %v28, %v346
    %v348 = vsel %vm347, 1, 0
    %v349 = vand.u32 %v348, 65535
    %v350 = vshrl.u32 %v348, 16
    %v351 = vcvt.s32.f32 %v349
    %v352 = vcvt.s32.f32 %v350
    %353 = vadd.xlane.f32.xlu0 %v351
    %v354 = vpop.xlane.xlu0 %353
    %355 = vadd.xlane.f32.xlu0 %v352
    %v356 = vpop.xlane.xlu0 %355
    %v357 = vcvt.f32.s32 %v354
    %v358 = vcvt.f32.s32 %v356
    %v359 = vshll.u32 %v358, 16
    %v360 = vadd.s32 %v359, %v357
    %v361 = vrot.slane %v360, 4
    %v362 = vadd.s32 %v360, %v361
    %v363 = vrot.slane %v362, 2
    %v364 = vadd.s32 %v362, %v363
    %v365 = vrot.slane %v364, 1
    %v366 = vadd.s32 %v364, %v365
    %s367 = vtos %v366
    %p368 = scmp.le.s32.totalorder %s367, 10
    %s369 = scalar_select %p368, %s344, %s265
    %s370 = sor.u32 %s291, 134217728
    %s371 = sxor.u32 %s370, 2147483648
    %v372 = vstv %s371
    %vm373 = vcmp.lt.s32.totalorder %v28, %v372
    %v374 = vsel %vm373, 1, 0
    %v375 = vand.u32 %v374, 65535
    %v376 = vshrl.u32 %v374, 16
    %v377 = vcvt.s32.f32 %v375
    %v378 = vcvt.s32.f32 %v376
    %379 = vadd.xlane.f32.xlu0 %v377
    %v380 = vpop.xlane.xlu0 %379
    %381 = vadd.xlane.f32.xlu0 %v378
    %v382 = vpop.xlane.xlu0 %381
    %v383 = vcvt.f32.s32 %v380
    %v384 = vcvt.f32.s32 %v382
    %v385 = vshll.u32 %v384, 16
    %v386 = vadd.s32 %v385, %v383
    %v387 = vrot.slane %v386, 4
    %v388 = vadd.s32 %v386, %v387
    %v389 = vrot.slane %v388, 2
    %v390 = vadd.s32 %v388, %v389
    %v391 = vrot.slane %v390, 1
    %v392 = vadd.s32 %v390, %v391
    %s393 = vtos %v392
    %p394 = scmp.le.s32.totalorder %s393, 5
    %s395 = scalar_select %p394, %s370, %s291
    %s396 = sor.u32 %s317, 134217728
    %s397 = sxor.u32 %s396, 2147483648
    %v398 = vstv %s397
    %vm399 = vcmp.lt.s32.totalorder %v28, %v398
    %v400 = vsel %vm399, 1, 0
    %v401 = vand.u32 %v400, 65535
    %v402 = vshrl.u32 %v400, 16
    %v403 = vcvt.s32.f32 %v401
    %v404 = vcvt.s32.f32 %v402
    %405 = vadd.xlane.f32.xlu0 %v403
    %v406 = vpop.xlane.xlu0 %405
    %407 = vadd.xlane.f32.xlu0 %v404
    %v408 = vpop.xlane.xlu0 %407
    %v409 = vcvt.f32.s32 %v406
    %v410 = vcvt.f32.s32 %v408
    %v411 = vshll.u32 %v410, 16
    %v412 = vadd.s32 %v411, %v409
    %v413 = vrot.slane %v412, 4
    %v414 = vadd.s32 %v412, %v413
    %v415 = vrot.slane %v414, 2
    %v416 = vadd.s32 %v414, %v415
    %v417 = vrot.slane %v416, 1
    %v418 = vadd.s32 %v416, %v417
    %s419 = vtos %v418
    %p420 = scmp.le.s32.totalorder %s419, 6
    %s421 = scalar_select %p420, %s396, %s317
    %s422 = sor.u32 %s343, 134217728
    %s423 = sxor.u32 %s422, 2147483648
    %v424 = vstv %s423
    %vm425 = vcmp.lt.s32.totalorder %v28, %v424
    %v426 = vsel %vm425, 1, 0
    %v427 = vand.u32 %v426, 65535
    %v428 = vshrl.u32 %v426, 16
    %v429 = vcvt.s32.f32 %v427
    %v430 = vcvt.s32.f32 %v428
    %431 = vadd.xlane.f32.xlu0 %v429
    %v432 = vpop.xlane.xlu0 %431
    %433 = vadd.xlane.f32.xlu0 %v430
    %v434 = vpop.xlane.xlu0 %433
    %v435 = vcvt.f32.s32 %v432
    %v436 = vcvt.f32.s32 %v434
    %v437 = vshll.u32 %v436, 16
    %v438 = vadd.s32 %v437, %v435
    %v439 = vrot.slane %v438, 4
    %v440 = vadd.s32 %v438, %v439
    %v441 = vrot.slane %v440, 2
    %v442 = vadd.s32 %v440, %v441
    %v443 = vrot.slane %v442, 1
    %v444 = vadd.s32 %v442, %v443
    %s445 = vtos %v444
    %p446 = scmp.le.s32.totalorder %s445, 9
    %s447 = scalar_select %p446, %s422, %s343
    %s448 = sor.u32 %s369, 134217728
    %s449 = sxor.u32 %s448, 2147483648
    %v450 = vstv %s449
    %vm451 = vcmp.lt.s32.totalorder %v28, %v450
    %v452 = vsel %vm451, 1, 0
    %v453 = vand.u32 %v452, 65535
    %v454 = vshrl.u32 %v452, 16
    %v455 = vcvt.s32.f32 %v453
    %v456 = vcvt.s32.f32 %v454
    %457 = vadd.xlane.f32.xlu0 %v455
    %v458 = vpop.xlane.xlu0 %457
    %459 = vadd.xlane.f32.xlu0 %v456
    %v460 = vpop.xlane.xlu0 %459
    %v461 = vcvt.f32.s32 %v458
    %v462 = vcvt.f32.s32 %v460
    %v463 = vshll.u32 %v462, 16
    %v464 = vadd.s32 %v463, %v461
    %v465 = vrot.slane %v464, 4
    %v466 = vadd.s32 %v464, %v465
    %v467 = vrot.slane %v466, 2
    %v468 = vadd.s32 %v466, %v467
    %v469 = vrot.slane %v468, 1
    %v470 = vadd.s32 %v468, %v469
    %s471 = vtos %v470
    %p472 = scmp.le.s32.totalorder %s471, 10
    %s473 = scalar_select %p472, %s448, %s369
    %s474 = sor.u32 %s395, 67108864
    %s475 = sxor.u32 %s474, 2147483648
    %v476 = vstv %s475
    %vm477 = vcmp.lt.s32.totalorder %v28, %v476
    %v478 = vsel %vm477, 1, 0
    %v479 = vand.u32 %v478, 65535
    %v480 = vshrl.u32 %v478, 16
    %v481 = vcvt.s32.f32 %v479
    %v482 = vcvt.s32.f32 %v480
    %483 = vadd.xlane.f32.xlu0 %v481
    %v484 = vpop.xlane.xlu0 %483
    %485 = vadd.xlane.f32.xlu0 %v482
    %v486 = vpop.xlane.xlu0 %485
    %v487 = vcvt.f32.s32 %v484
    %v488 = vcvt.f32.s32 %v486
    %v489 = vshll.u32 %v488, 16
    %v490 = vadd.s32 %v489, %v487
    %v491 = vrot.slane %v490, 4
    %v492 = vadd.s32 %v490, %v491
    %v493 = vrot.slane %v492, 2
    %v494 = vadd.s32 %v492, %v493
    %v495 = vrot.slane %v494, 1
    %v496 = vadd.s32 %v494, %v495
    %s497 = vtos %v496
    %p498 = scmp.le.s32.totalorder %s497, 5
    %s499 = scalar_select %p498, %s474, %s395
    %s500 = sor.u32 %s421, 67108864
    %s501 = sxor.u32 %s500, 2147483648
    %v502 = vstv %s501
    %vm503 = vcmp.lt.s32.totalorder %v28, %v502
    %v504 = vsel %vm503, 1, 0
    %v505 = vand.u32 %v504, 65535
    %v506 = vshrl.u32 %v504, 16
    %v507 = vcvt.s32.f32 %v505
    %v508 = vcvt.s32.f32 %v506
    %509 = vadd.xlane.f32.xlu0 %v507
    %v510 = vpop.xlane.xlu0 %509
    %511 = vadd.xlane.f32.xlu0 %v508
    %v512 = vpop.xlane.xlu0 %511
    %v513 = vcvt.f32.s32 %v510
    %v514 = vcvt.f32.s32 %v512
    %v515 = vshll.u32 %v514, 16
    %v516 = vadd.s32 %v515, %v513
    %v517 = vrot.slane %v516, 4
    %v518 = vadd.s32 %v516, %v517
    %v519 = vrot.slane %v518, 2
    %v520 = vadd.s32 %v518, %v519
    %v521 = vrot.slane %v520, 1
    %v522 = vadd.s32 %v520, %v521
    %s523 = vtos %v522
    %p524 = scmp.le.s32.totalorder %s523, 6
    %s525 = scalar_select %p524, %s500, %s421
    %s526 = sor.u32 %s447, 67108864
    %s527 = sxor.u32 %s526, 2147483648
    %v528 = vstv %s527
    %vm529 = vcmp.lt.s32.totalorder %v28, %v528
    %v530 = vsel %vm529, 1, 0
    %v531 = vand.u32 %v530, 65535
    %v532 = vshrl.u32 %v530, 16
    %v533 = vcvt.s32.f32 %v531
    %v534 = vcvt.s32.f32 %v532
    %535 = vadd.xlane.f32.xlu0 %v533
    %v536 = vpop.xlane.xlu0 %535
    %537 = vadd.xlane.f32.xlu0 %v534
    %v538 = vpop.xlane.xlu0 %537
    %v539 = vcvt.f32.s32 %v536
    %v540 = vcvt.f32.s32 %v538
    %v541 = vshll.u32 %v540, 16
    %v542 = vadd.s32 %v541, %v539
    %v543 = vrot.slane %v542, 4
    %v544 = vadd.s32 %v542, %v543
    %v545 = vrot.slane %v544, 2
    %v546 = vadd.s32 %v544, %v545
    %v547 = vrot.slane %v546, 1
    %v548 = vadd.s32 %v546, %v547
    %s549 = vtos %v548
    %p550 = scmp.le.s32.totalorder %s549, 9
    %s551 = scalar_select %p550, %s526, %s447
    %s552 = sor.u32 %s473, 67108864
    %s553 = sxor.u32 %s552, 2147483648
    %v554 = vstv %s553
    %vm555 = vcmp.lt.s32.totalorder %v28, %v554
    %v556 = vsel %vm555, 1, 0
    %v557 = vand.u32 %v556, 65535
    %v558 = vshrl.u32 %v556, 16
    %v559 = vcvt.s32.f32 %v557
    %v560 = vcvt.s32.f32 %v558
    %561 = vadd.xlane.f32.xlu0 %v559
    %v562 = vpop.xlane.xlu0 %561
    %563 = vadd.xlane.f32.xlu0 %v560
    %v564 = vpop.xlane.xlu0 %563
    %v565 = vcvt.f32.s32 %v562
    %v566 = vcvt.f32.s32 %v564
    %v567 = vshll.u32 %v566, 16
    %v568 = vadd.s32 %v567, %v565
    %v569 = vrot.slane %v568, 4
    %v570 = vadd.s32 %v568, %v569
    %v571 = vrot.slane %v570, 2
    %v572 = vadd.s32 %v570, %v571
    %v573 = vrot.slane %v572, 1
    %v574 = vadd.s32 %v572, %v573
    %s575 = vtos %v574
    %p576 = scmp.le.s32.totalorder %s575, 10
    %s577 = scalar_select %p576, %s552, %s473
    %s578 = sor.u32 %s499, 33554432
    %s579 = sxor.u32 %s578, 2147483648
    %v580 = vstv %s579
    %vm581 = vcmp.lt.s32.totalorder %v28, %v580
    %v582 = vsel %vm581, 1, 0
    %v583 = vand.u32 %v582, 65535
    %v584 = vshrl.u32 %v582, 16
    %v585 = vcvt.s32.f32 %v583
    %v586 = vcvt.s32.f32 %v584
    %587 = vadd.xlane.f32.xlu0 %v585
    %v588 = vpop.xlane.xlu0 %587
    %589 = vadd.xlane.f32.xlu0 %v586
    %v590 = vpop.xlane.xlu0 %589
    %v591 = vcvt.f32.s32 %v588
    %v592 = vcvt.f32.s32 %v590
    %v593 = vshll.u32 %v592, 16
    %v594 = vadd.s32 %v593, %v591
    %v595 = vrot.slane %v594, 4
    %v596 = vadd.s32 %v594, %v595
    %v597 = vrot.slane %v596, 2
    %v598 = vadd.s32 %v596, %v597
    %v599 = vrot.slane %v598, 1
    %v600 = vadd.s32 %v598, %v599
    %s601 = vtos %v600
    %p602 = scmp.le.s32.totalorder %s601, 5
    %s603 = scalar_select %p602, %s578, %s499
    %s604 = sor.u32 %s525, 33554432
    %s605 = sxor.u32 %s604, 2147483648
    %v606 = vstv %s605
    %vm607 = vcmp.lt.s32.totalorder %v28, %v606
    %v608 = vsel %vm607, 1, 0
    %v609 = vand.u32 %v608, 65535
    %v610 = vshrl.u32 %v608, 16
    %v611 = vcvt.s32.f32 %v609
    %v612 = vcvt.s32.f32 %v610
    %613 = vadd.xlane.f32.xlu0 %v611
    %v614 = vpop.xlane.xlu0 %613
    %615 = vadd.xlane.f32.xlu0 %v612
    %v616 = vpop.xlane.xlu0 %615
    %v617 = vcvt.f32.s32 %v614
    %v618 = vcvt.f32.s32 %v616
    %v619 = vshll.u32 %v618, 16
    %v620 = vadd.s32 %v619, %v617
    %v621 = vrot.slane %v620, 4
    %v622 = vadd.s32 %v620, %v621
    %v623 = vrot.slane %v622, 2
    %v624 = vadd.s32 %v622, %v623
    %v625 = vrot.slane %v624, 1
    %v626 = vadd.s32 %v624, %v625
    %s627 = vtos %v626
    %p628 = scmp.le.s32.totalorder %s627, 6
    %s629 = scalar_select %p628, %s604, %s525
    %s630 = sor.u32 %s551, 33554432
    %s631 = sxor.u32 %s630, 2147483648
    %v632 = vstv %s631
    %vm633 = vcmp.lt.s32.totalorder %v28, %v632
    %v634 = vsel %vm633, 1, 0
    %v635 = vand.u32 %v634, 65535
    %v636 = vshrl.u32 %v634, 16
    %v637 = vcvt.s32.f32 %v635
    %v638 = vcvt.s32.f32 %v636
    %639 = vadd.xlane.f32.xlu0 %v637
    %v640 = vpop.xlane.xlu0 %639
    %641 = vadd.xlane.f32.xlu0 %v638
    %v642 = vpop.xlane.xlu0 %641
    %v643 = vcvt.f32.s32 %v640
    %v644 = vcvt.f32.s32 %v642
    %v645 = vshll.u32 %v644, 16
    %v646 = vadd.s32 %v645, %v643
    %v647 = vrot.slane %v646, 4
    %v648 = vadd.s32 %v646, %v647
    %v649 = vrot.slane %v648, 2
    %v650 = vadd.s32 %v648, %v649
    %v651 = vrot.slane %v650, 1
    %v652 = vadd.s32 %v650, %v651
    %s653 = vtos %v652
    %p654 = scmp.le.s32.totalorder %s653, 9
    %s655 = scalar_select %p654, %s630, %s551
    %s656 = sor.u32 %s577, 33554432
    %s657 = sxor.u32 %s656, 2147483648
    %v658 = vstv %s657
    %vm659 = vcmp.lt.s32.totalorder %v28, %v658
    %v660 = vsel %vm659, 1, 0
    %v661 = vand.u32 %v660, 65535
    %v662 = vshrl.u32 %v660, 16
    %v663 = vcvt.s32.f32 %v661
    %v664 = vcvt.s32.f32 %v662
    %665 = vadd.xlane.f32.xlu0 %v663
    %v666 = vpop.xlane.xlu0 %665
    %667 = vadd.xlane.f32.xlu0 %v664
    %v668 = vpop.xlane.xlu0 %667
    %v669 = vcvt.f32.s32 %v666
    %v670 = vcvt.f32.s32 %v668
    %v671 = vshll.u32 %v670, 16
    %v672 = vadd.s32 %v671, %v669
    %v673 = vrot.slane %v672, 4
    %v674 = vadd.s32 %v672, %v673
    %v675 = vrot.slane %v674, 2
    %v676 = vadd.s32 %v674, %v675
    %v677 = vrot.slane %v676, 1
    %v678 = vadd.s32 %v676, %v677
    %s679 = vtos %v678
    %p680 = scmp.le.s32.totalorder %s679, 10
    %s681 = scalar_select %p680, %s656, %s577
    %s682 = sor.u32 %s603, 16777216
    %s683 = sxor.u32 %s682, 2147483648
    %v684 = vstv %s683
    %vm685 = vcmp.lt.s32.totalorder %v28, %v684
    %v686 = vsel %vm685, 1, 0
    %v687 = vand.u32 %v686, 65535
    %v688 = vshrl.u32 %v686, 16
    %v689 = vcvt.s32.f32 %v687
    %v690 = vcvt.s32.f32 %v688
    %691 = vadd.xlane.f32.xlu0 %v689
    %v692 = vpop.xlane.xlu0 %691
    %693 = vadd.xlane.f32.xlu0 %v690
    %v694 = vpop.xlane.xlu0 %693
    %v695 = vcvt.f32.s32 %v692
    %v696 = vcvt.f32.s32 %v694
    %v697 = vshll.u32 %v696, 16
    %v698 = vadd.s32 %v697, %v695
    %v699 = vrot.slane %v698, 4
    %v700 = vadd.s32 %v698, %v699
    %v701 = vrot.slane %v700, 2
    %v702 = vadd.s32 %v700, %v701
    %v703 = vrot.slane %v702, 1
    %v704 = vadd.s32 %v702, %v703
    %s705 = vtos %v704
    %p706 = scmp.le.s32.totalorder %s705, 5
    %s707 = scalar_select %p706, %s682, %s603
    %s708 = sor.u32 %s629, 16777216
    %s709 = sxor.u32 %s708, 2147483648
    %v710 = vstv %s709
    %vm711 = vcmp.lt.s32.totalorder %v28, %v710
    %v712 = vsel %vm711, 1, 0
    %v713 = vand.u32 %v712, 65535
    %v714 = vshrl.u32 %v712, 16
    %v715 = vcvt.s32.f32 %v713
    %v716 = vcvt.s32.f32 %v714
    %717 = vadd.xlane.f32.xlu0 %v715
    %v718 = vpop.xlane.xlu0 %717
    %719 = vadd.xlane.f32.xlu0 %v716
    %v720 = vpop.xlane.xlu0 %719
    %v721 = vcvt.f32.s32 %v718
    %v722 = vcvt.f32.s32 %v720
    %v723 = vshll.u32 %v722, 16
    %v724 = vadd.s32 %v723, %v721
    %v725 = vrot.slane %v724, 4
    %v726 = vadd.s32 %v724, %v725
    %v727 = vrot.slane %v726, 2
    %v728 = vadd.s32 %v726, %v727
    %v729 = vrot.slane %v728, 1
    %v730 = vadd.s32 %v728, %v729
    %s731 = vtos %v730
    %p732 = scmp.le.s32.totalorder %s731, 6
    %s733 = scalar_select %p732, %s708, %s629
    %s734 = sor.u32 %s655, 16777216
    %s735 = sxor.u32 %s734, 2147483648
    %v736 = vstv %s735
    %vm737 = vcmp.lt.s32.totalorder %v28, %v736
    %v738 = vsel %vm737, 1, 0
    %v739 = vand.u32 %v738, 65535
    %v740 = vshrl.u32 %v738, 16
    %v741 = vcvt.s32.f32 %v739
    %v742 = vcvt.s32.f32 %v740
    %743 = vadd.xlane.f32.xlu0 %v741
    %v744 = vpop.xlane.xlu0 %743
    %745 = vadd.xlane.f32.xlu0 %v742
    %v746 = vpop.xlane.xlu0 %745
    %v747 = vcvt.f32.s32 %v744
    %v748 = vcvt.f32.s32 %v746
    %v749 = vshll.u32 %v748, 16
    %v750 = vadd.s32 %v749, %v747
    %v751 = vrot.slane %v750, 4
    %v752 = vadd.s32 %v750, %v751
    %v753 = vrot.slane %v752, 2
    %v754 = vadd.s32 %v752, %v753
    %v755 = vrot.slane %v754, 1
    %v756 = vadd.s32 %v754, %v755
    %s757 = vtos %v756
    %p758 = scmp.le.s32.totalorder %s757, 9
    %s759 = scalar_select %p758, %s734, %s655
    %s760 = sor.u32 %s681, 16777216
    %s761 = sxor.u32 %s760, 2147483648
    %v762 = vstv %s761
    %vm763 = vcmp.lt.s32.totalorder %v28, %v762
    %v764 = vsel %vm763, 1, 0
    %v765 = vand.u32 %v764, 65535
    %v766 = vshrl.u32 %v764, 16
    %v767 = vcvt.s32.f32 %v765
    %v768 = vcvt.s32.f32 %v766
    %769 = vadd.xlane.f32.xlu0 %v767
    %v770 = vpop.xlane.xlu0 %769
    %771 = vadd.xlane.f32.xlu0 %v768
    %v772 = vpop.xlane.xlu0 %771
    %v773 = vcvt.f32.s32 %v770
    %v774 = vcvt.f32.s32 %v772
    %v775 = vshll.u32 %v774, 16
    %v776 = vadd.s32 %v775, %v773
    %v777 = vrot.slane %v776, 4
    %v778 = vadd.s32 %v776, %v777
    %v779 = vrot.slane %v778, 2
    %v780 = vadd.s32 %v778, %v779
    %v781 = vrot.slane %v780, 1
    %v782 = vadd.s32 %v780, %v781
    %s783 = vtos %v782
    %p784 = scmp.le.s32.totalorder %s783, 10
    %s785 = scalar_select %p784, %s760, %s681
    %s786 = sor.u32 %s707, 8388608
    %s787 = sxor.u32 %s786, 2147483648
    %v788 = vstv %s787
    %vm789 = vcmp.lt.s32.totalorder %v28, %v788
    %v790 = vsel %vm789, 1, 0
    %v791 = vand.u32 %v790, 65535
    %v792 = vshrl.u32 %v790, 16
    %v793 = vcvt.s32.f32 %v791
    %v794 = vcvt.s32.f32 %v792
    %795 = vadd.xlane.f32.xlu0 %v793
    %v796 = vpop.xlane.xlu0 %795
    %797 = vadd.xlane.f32.xlu0 %v794
    %v798 = vpop.xlane.xlu0 %797
    %v799 = vcvt.f32.s32 %v796
    %v800 = vcvt.f32.s32 %v798
    %v801 = vshll.u32 %v800, 16
    %v802 = vadd.s32 %v801, %v799
    %v803 = vrot.slane %v802, 4
    %v804 = vadd.s32 %v802, %v803
    %v805 = vrot.slane %v804, 2
    %v806 = vadd.s32 %v804, %v805
    %v807 = vrot.slane %v806, 1
    %v808 = vadd.s32 %v806, %v807
    %s809 = vtos %v808
    %p810 = scmp.le.s32.totalorder %s809, 5
    %s811 = scalar_select %p810, %s786, %s707
    %s812 = sor.u32 %s733, 8388608
    %s813 = sxor.u32 %s812, 2147483648
    %v814 = vstv %s813
    %vm815 = vcmp.lt.s32.totalorder %v28, %v814
    %v816 = vsel %vm815, 1, 0
    %v817 = vand.u32 %v816, 65535
    %v818 = vshrl.u32 %v816, 16
    %v819 = vcvt.s32.f32 %v817
    %v820 = vcvt.s32.f32 %v818
    %821 = vadd.xlane.f32.xlu0 %v819
    %v822 = vpop.xlane.xlu0 %821
    %823 = vadd.xlane.f32.xlu0 %v820
    %v824 = vpop.xlane.xlu0 %823
    %v825 = vcvt.f32.s32 %v822
    %v826 = vcvt.f32.s32 %v824
    %v827 = vshll.u32 %v826, 16
    %v828 = vadd.s32 %v827, %v825
    %v829 = vrot.slane %v828, 4
    %v830 = vadd.s32 %v828, %v829
    %v831 = vrot.slane %v830, 2
    %v832 = vadd.s32 %v830, %v831
    %v833 = vrot.slane %v832, 1
    %v834 = vadd.s32 %v832, %v833
    %s835 = vtos %v834
    %p836 = scmp.le.s32.totalorder %s835, 6
    %s837 = scalar_select %p836, %s812, %s733
    %s838 = sor.u32 %s759, 8388608
    %s839 = sxor.u32 %s838, 2147483648
    %v840 = vstv %s839
    %vm841 = vcmp.lt.s32.totalorder %v28, %v840
    %v842 = vsel %vm841, 1, 0
    %v843 = vand.u32 %v842, 65535
    %v844 = vshrl.u32 %v842, 16
    %v845 = vcvt.s32.f32 %v843
    %v846 = vcvt.s32.f32 %v844
    %847 = vadd.xlane.f32.xlu0 %v845
    %v848 = vpop.xlane.xlu0 %847
    %849 = vadd.xlane.f32.xlu0 %v846
    %v850 = vpop.xlane.xlu0 %849
    %v851 = vcvt.f32.s32 %v848
    %v852 = vcvt.f32.s32 %v850
    %v853 = vshll.u32 %v852, 16
    %v854 = vadd.s32 %v853, %v851
    %v855 = vrot.slane %v854, 4
    %v856 = vadd.s32 %v854, %v855
    %v857 = vrot.slane %v856, 2
    %v858 = vadd.s32 %v856, %v857
    %v859 = vrot.slane %v858, 1
    %v860 = vadd.s32 %v858, %v859
    %s861 = vtos %v860
    %p862 = scmp.le.s32.totalorder %s861, 9
    %s863 = scalar_select %p862, %s838, %s759
    %s864 = sor.u32 %s785, 8388608
    %s865 = sxor.u32 %s864, 2147483648
    %v866 = vstv %s865
    %vm867 = vcmp.lt.s32.totalorder %v28, %v866
    %v868 = vsel %vm867, 1, 0
    %v869 = vand.u32 %v868, 65535
    %v870 = vshrl.u32 %v868, 16
    %v871 = vcvt.s32.f32 %v869
    %v872 = vcvt.s32.f32 %v870
    %873 = vadd.xlane.f32.xlu0 %v871
    %v874 = vpop.xlane.xlu0 %873
    %875 = vadd.xlane.f32.xlu0 %v872
    %v876 = vpop.xlane.xlu0 %875
    %v877 = vcvt.f32.s32 %v874
    %v878 = vcvt.f32.s32 %v876
    %v879 = vshll.u32 %v878, 16
    %v880 = vadd.s32 %v879, %v877
    %v881 = vrot.slane %v880, 4
    %v882 = vadd.s32 %v880, %v881
    %v883 = vrot.slane %v882, 2
    %v884 = vadd.s32 %v882, %v883
    %v885 = vrot.slane %v884, 1
    %v886 = vadd.s32 %v884, %v885
    %s887 = vtos %v886
    %p888 = scmp.le.s32.totalorder %s887, 10
    %s889 = scalar_select %p888, %s864, %s785
    %s890 = sor.u32 %s811, 4194304
    %s891 = sxor.u32 %s890, 2147483648
    %v892 = vstv %s891
    %vm893 = vcmp.lt.s32.totalorder %v28, %v892
    %v894 = vsel %vm893, 1, 0
    %v895 = vand.u32 %v894, 65535
    %v896 = vshrl.u32 %v894, 16
    %v897 = vcvt.s32.f32 %v895
    %v898 = vcvt.s32.f32 %v896
    %899 = vadd.xlane.f32.xlu0 %v897
    %v900 = vpop.xlane.xlu0 %899
    %901 = vadd.xlane.f32.xlu0 %v898
    %v902 = vpop.xlane.xlu0 %901
    %v903 = vcvt.f32.s32 %v900
    %v904 = vcvt.f32.s32 %v902
    %v905 = vshll.u32 %v904, 16
    %v906 = vadd.s32 %v905, %v903
    %v907 = vrot.slane %v906, 4
    %v908 = vadd.s32 %v906, %v907
    %v909 = vrot.slane %v908, 2
    %v910 = vadd.s32 %v908, %v909
    %v911 = vrot.slane %v910, 1
    %v912 = vadd.s32 %v910, %v911
    %s913 = vtos %v912
    %p914 = scmp.le.s32.totalorder %s913, 5
    %s915 = scalar_select %p914, %s890, %s811
    %s916 = sor.u32 %s837, 4194304
    %s917 = sxor.u32 %s916, 2147483648
    %v918 = vstv %s917
    %vm919 = vcmp.lt.s32.totalorder %v28, %v918
    %v920 = vsel %vm919, 1, 0
    %v921 = vand.u32 %v920, 65535
    %v922 = vshrl.u32 %v920, 16
    %v923 = vcvt.s32.f32 %v921
    %v924 = vcvt.s32.f32 %v922
    %925 = vadd.xlane.f32.xlu0 %v923
    %v926 = vpop.xlane.xlu0 %925
    %927 = vadd.xlane.f32.xlu0 %v924
    %v928 = vpop.xlane.xlu0 %927
    %v929 = vcvt.f32.s32 %v926
    %v930 = vcvt.f32.s32 %v928
    %v931 = vshll.u32 %v930, 16
    %v932 = vadd.s32 %v931, %v929
    %v933 = vrot.slane %v932, 4
    %v934 = vadd.s32 %v932, %v933
    %v935 = vrot.slane %v934, 2
    %v936 = vadd.s32 %v934, %v935
    %v937 = vrot.slane %v936, 1
    %v938 = vadd.s32 %v936, %v937
    %s939 = vtos %v938
    %p940 = scmp.le.s32.totalorder %s939, 6
    %s941 = scalar_select %p940, %s916, %s837
    %s942 = sor.u32 %s863, 4194304
    %s943 = sxor.u32 %s942, 2147483648
    %v944 = vstv %s943
    %vm945 = vcmp.lt.s32.totalorder %v28, %v944
    %v946 = vsel %vm945, 1, 0
    %v947 = vand.u32 %v946, 65535
    %v948 = vshrl.u32 %v946, 16
    %v949 = vcvt.s32.f32 %v947
    %v950 = vcvt.s32.f32 %v948
    %951 = vadd.xlane.f32.xlu0 %v949
    %v952 = vpop.xlane.xlu0 %951
    %953 = vadd.xlane.f32.xlu0 %v950
    %v954 = vpop.xlane.xlu0 %953
    %v955 = vcvt.f32.s32 %v952
    %v956 = vcvt.f32.s32 %v954
    %v957 = vshll.u32 %v956, 16
    %v958 = vadd.s32 %v957, %v955
    %v959 = vrot.slane %v958, 4
    %v960 = vadd.s32 %v958, %v959
    %v961 = vrot.slane %v960, 2
    %v962 = vadd.s32 %v960, %v961
    %v963 = vrot.slane %v962, 1
    %v964 = vadd.s32 %v962, %v963
    %s965 = vtos %v964
    %p966 = scmp.le.s32.totalorder %s965, 9
    %s967 = scalar_select %p966, %s942, %s863
    %s968 = sor.u32 %s889, 4194304
    %s969 = sxor.u32 %s968, 2147483648
    %v970 = vstv %s969
    %vm971 = vcmp.lt.s32.totalorder %v28, %v970
    %v972 = vsel %vm971, 1, 0
    %v973 = vand.u32 %v972, 65535
    %v974 = vshrl.u32 %v972, 16
    %v975 = vcvt.s32.f32 %v973
    %v976 = vcvt.s32.f32 %v974
    %977 = vadd.xlane.f32.xlu0 %v975
    %v978 = vpop.xlane.xlu0 %977
    %979 = vadd.xlane.f32.xlu0 %v976
    %v980 = vpop.xlane.xlu0 %979
    %v981 = vcvt.f32.s32 %v978
    %v982 = vcvt.f32.s32 %v980
    %v983 = vshll.u32 %v982, 16
    %v984 = vadd.s32 %v983, %v981
    %v985 = vrot.slane %v984, 4
    %v986 = vadd.s32 %v984, %v985
    %v987 = vrot.slane %v986, 2
    %v988 = vadd.s32 %v986, %v987
    %v989 = vrot.slane %v988, 1
    %v990 = vadd.s32 %v988, %v989
    %s991 = vtos %v990
    %p992 = scmp.le.s32.totalorder %s991, 10
    %s993 = scalar_select %p992, %s968, %s889
    %s994 = sor.u32 %s915, 2097152
    %s995 = sxor.u32 %s994, 2147483648
    %v996 = vstv %s995
    %vm997 = vcmp.lt.s32.totalorder %v28, %v996
    %v998 = vsel %vm997, 1, 0
    %v999 = vand.u32 %v998, 65535
    %v1000 = vshrl.u32 %v998, 16
    %v1001 = vcvt.s32.f32 %v999
    %v1002 = vcvt.s32.f32 %v1000
    %1003 = vadd.xlane.f32.xlu0 %v1001
    %v1004 = vpop.xlane.xlu0 %1003
    %1005 = vadd.xlane.f32.xlu0 %v1002
    %v1006 = vpop.xlane.xlu0 %1005
    %v1007 = vcvt.f32.s32 %v1004
    %v1008 = vcvt.f32.s32 %v1006
    %v1009 = vshll.u32 %v1008, 16
    %v1010 = vadd.s32 %v1009, %v1007
    %v1011 = vrot.slane %v1010, 4
    %v1012 = vadd.s32 %v1010, %v1011
    %v1013 = vrot.slane %v1012, 2
    %v1014 = vadd.s32 %v1012, %v1013
    %v1015 = vrot.slane %v1014, 1
    %v1016 = vadd.s32 %v1014, %v1015
    %s1017 = vtos %v1016
    %p1018 = scmp.le.s32.totalorder %s1017, 5
    %s1019 = scalar_select %p1018, %s994, %s915
    %s1020 = sor.u32 %s941, 2097152
    %s1021 = sxor.u32 %s1020, 2147483648
    %v1022 = vstv %s1021
    %vm1023 = vcmp.lt.s32.totalorder %v28, %v1022
    %v1024 = vsel %vm1023, 1, 0
    %v1025 = vand.u32 %v1024, 65535
    %v1026 = vshrl.u32 %v1024, 16
    %v1027 = vcvt.s32.f32 %v1025
    %v1028 = vcvt.s32.f32 %v1026
    %1029 = vadd.xlane.f32.xlu0 %v1027
    %v1030 = vpop.xlane.xlu0 %1029
    %1031 = vadd.xlane.f32.xlu0 %v1028
    %v1032 = vpop.xlane.xlu0 %1031
    %v1033 = vcvt.f32.s32 %v1030
    %v1034 = vcvt.f32.s32 %v1032
    %v1035 = vshll.u32 %v1034, 16
    %v1036 = vadd.s32 %v1035, %v1033
    %v1037 = vrot.slane %v1036, 4
    %v1038 = vadd.s32 %v1036, %v1037
    %v1039 = vrot.slane %v1038, 2
    %v1040 = vadd.s32 %v1038, %v1039
    %v1041 = vrot.slane %v1040, 1
    %v1042 = vadd.s32 %v1040, %v1041
    %s1043 = vtos %v1042
    %p1044 = scmp.le.s32.totalorder %s1043, 6
    %s1045 = scalar_select %p1044, %s1020, %s941
    %s1046 = sor.u32 %s967, 2097152
    %s1047 = sxor.u32 %s1046, 2147483648
    %v1048 = vstv %s1047
    %vm1049 = vcmp.lt.s32.totalorder %v28, %v1048
    %v1050 = vsel %vm1049, 1, 0
    %v1051 = vand.u32 %v1050, 65535
    %v1052 = vshrl.u32 %v1050, 16
    %v1053 = vcvt.s32.f32 %v1051
    %v1054 = vcvt.s32.f32 %v1052
    %1055 = vadd.xlane.f32.xlu0 %v1053
    %v1056 = vpop.xlane.xlu0 %1055
    %1057 = vadd.xlane.f32.xlu0 %v1054
    %v1058 = vpop.xlane.xlu0 %1057
    %v1059 = vcvt.f32.s32 %v1056
    %v1060 = vcvt.f32.s32 %v1058
    %v1061 = vshll.u32 %v1060, 16
    %v1062 = vadd.s32 %v1061, %v1059
    %v1063 = vrot.slane %v1062, 4
    %v1064 = vadd.s32 %v1062, %v1063
    %v1065 = vrot.slane %v1064, 2
    %v1066 = vadd.s32 %v1064, %v1065
    %v1067 = vrot.slane %v1066, 1
    %v1068 = vadd.s32 %v1066, %v1067
    %s1069 = vtos %v1068
    %p1070 = scmp.le.s32.totalorder %s1069, 9
    %s1071 = scalar_select %p1070, %s1046, %s967
    %s1072 = sor.u32 %s993, 2097152
    %s1073 = sxor.u32 %s1072, 2147483648
    %v1074 = vstv %s1073
    %vm1075 = vcmp.lt.s32.totalorder %v28, %v1074
    %v1076 = vsel %vm1075, 1, 0
    %v1077 = vand.u32 %v1076, 65535
    %v1078 = vshrl.u32 %v1076, 16
    %v1079 = vcvt.s32.f32 %v1077
    %v1080 = vcvt.s32.f32 %v1078
    %1081 = vadd.xlane.f32.xlu0 %v1079
    %v1082 = vpop.xlane.xlu0 %1081
    %1083 = vadd.xlane.f32.xlu0 %v1080
    %v1084 = vpop.xlane.xlu0 %1083
    %v1085 = vcvt.f32.s32 %v1082
    %v1086 = vcvt.f32.s32 %v1084
    %v1087 = vshll.u32 %v1086, 16
    %v1088 = vadd.s32 %v1087, %v1085
    %v1089 = vrot.slane %v1088, 4
    %v1090 = vadd.s32 %v1088, %v1089
    %v1091 = vrot.slane %v1090, 2
    %v1092 = vadd.s32 %v1090, %v1091
    %v1093 = vrot.slane %v1092, 1
    %v1094 = vadd.s32 %v1092, %v1093
    %s1095 = vtos %v1094
    %p1096 = scmp.le.s32.totalorder %s1095, 10
    %s1097 = scalar_select %p1096, %s1072, %s993
    %s1098 = sor.u32 %s1019, 1048576
    %s1099 = sxor.u32 %s1098, 2147483648
    %v1100 = vstv %s1099
    %vm1101 = vcmp.lt.s32.totalorder %v28, %v1100
    %v1102 = vsel %vm1101, 1, 0
    %v1103 = vand.u32 %v1102, 65535
    %v1104 = vshrl.u32 %v1102, 16
    %v1105 = vcvt.s32.f32 %v1103
    %v1106 = vcvt.s32.f32 %v1104
    %1107 = vadd.xlane.f32.xlu0 %v1105
    %v1108 = vpop.xlane.xlu0 %1107
    %1109 = vadd.xlane.f32.xlu0 %v1106
    %v1110 = vpop.xlane.xlu0 %1109
    %v1111 = vcvt.f32.s32 %v1108
    %v1112 = vcvt.f32.s32 %v1110
    %v1113 = vshll.u32 %v1112, 16
    %v1114 = vadd.s32 %v1113, %v1111
    %v1115 = vrot.slane %v1114, 4
    %v1116 = vadd.s32 %v1114, %v1115
    %v1117 = vrot.slane %v1116, 2
    %v1118 = vadd.s32 %v1116, %v1117
    %v1119 = vrot.slane %v1118, 1
    %v1120 = vadd.s32 %v1118, %v1119
    %s1121 = vtos %v1120
    %p1122 = scmp.le.s32.totalorder %s1121, 5
    %s1123 = scalar_select %p1122, %s1098, %s1019
    %s1124 = sor.u32 %s1045, 1048576
    %s1125 = sxor.u32 %s1124, 2147483648
    %v1126 = vstv %s1125
    %vm1127 = vcmp.lt.s32.totalorder %v28, %v1126
    %v1128 = vsel %vm1127, 1, 0
    %v1129 = vand.u32 %v1128, 65535
    %v1130 = vshrl.u32 %v1128, 16
    %v1131 = vcvt.s32.f32 %v1129
    %v1132 = vcvt.s32.f32 %v1130
    %1133 = vadd.xlane.f32.xlu0 %v1131
    %v1134 = vpop.xlane.xlu0 %1133
    %1135 = vadd.xlane.f32.xlu0 %v1132
    %v1136 = vpop.xlane.xlu0 %1135
    %v1137 = vcvt.f32.s32 %v1134
    %v1138 = vcvt.f32.s32 %v1136
    %v1139 = vshll.u32 %v1138, 16
    %v1140 = vadd.s32 %v1139, %v1137
    %v1141 = vrot.slane %v1140, 4
    %v1142 = vadd.s32 %v1140, %v1141
    %v1143 = vrot.slane %v1142, 2
    %v1144 = vadd.s32 %v1142, %v1143
    %v1145 = vrot.slane %v1144, 1
    %v1146 = vadd.s32 %v1144, %v1145
    %s1147 = vtos %v1146
    %p1148 = scmp.le.s32.totalorder %s1147, 6
    %s1149 = scalar_select %p1148, %s1124, %s1045
    %s1150 = sor.u32 %s1071, 1048576
    %s1151 = sxor.u32 %s1150, 2147483648
    %v1152 = vstv %s1151
    %vm1153 = vcmp.lt.s32.totalorder %v28, %v1152
    %v1154 = vsel %vm1153, 1, 0
    %v1155 = vand.u32 %v1154, 65535
    %v1156 = vshrl.u32 %v1154, 16
    %v1157 = vcvt.s32.f32 %v1155
    %v1158 = vcvt.s32.f32 %v1156
    %1159 = vadd.xlane.f32.xlu0 %v1157
    %v1160 = vpop.xlane.xlu0 %1159
    %1161 = vadd.xlane.f32.xlu0 %v1158
    %v1162 = vpop.xlane.xlu0 %1161
    %v1163 = vcvt.f32.s32 %v1160
    %v1164 = vcvt.f32.s32 %v1162
    %v1165 = vshll.u32 %v1164, 16
    %v1166 = vadd.s32 %v1165, %v1163
    %v1167 = vrot.slane %v1166, 4
    %v1168 = vadd.s32 %v1166, %v1167
    %v1169 = vrot.slane %v1168, 2
    %v1170 = vadd.s32 %v1168, %v1169
    %v1171 = vrot.slane %v1170, 1
    %v1172 = vadd.s32 %v1170, %v1171
    %s1173 = vtos %v1172
    %p1174 = scmp.le.s32.totalorder %s1173, 9
    %s1175 = scalar_select %p1174, %s1150, %s1071
    %s1176 = sor.u32 %s1097, 1048576
    %s1177 = sxor.u32 %s1176, 2147483648
    %v1178 = vstv %s1177
    %vm1179 = vcmp.lt.s32.totalorder %v28, %v1178
    %v1180 = vsel %vm1179, 1, 0
    %v1181 = vand.u32 %v1180, 65535
    %v1182 = vshrl.u32 %v1180, 16
    %v1183 = vcvt.s32.f32 %v1181
    %v1184 = vcvt.s32.f32 %v1182
    %1185 = vadd.xlane.f32.xlu0 %v1183
    %v1186 = vpop.xlane.xlu0 %1185
    %1187 = vadd.xlane.f32.xlu0 %v1184
    %v1188 = vpop.xlane.xlu0 %1187
    %v1189 = vcvt.f32.s32 %v1186
    %v1190 = vcvt.f32.s32 %v1188
    %v1191 = vshll.u32 %v1190, 16
    %v1192 = vadd.s32 %v1191, %v1189
    %v1193 = vrot.slane %v1192, 4
    %v1194 = vadd.s32 %v1192, %v1193
    %v1195 = vrot.slane %v1194, 2
    %v1196 = vadd.s32 %v1194, %v1195
    %v1197 = vrot.slane %v1196, 1
    %v1198 = vadd.s32 %v1196, %v1197
    %s1199 = vtos %v1198
    %p1200 = scmp.le.s32.totalorder %s1199, 10
    %s1201 = scalar_select %p1200, %s1176, %s1097
    %s1202 = sor.u32 %s1123, 524288
    %s1203 = sxor.u32 %s1202, 2147483648
    %v1204 = vstv %s1203
    %vm1205 = vcmp.lt.s32.totalorder %v28, %v1204
    %v1206 = vsel %vm1205, 1, 0
    %v1207 = vand.u32 %v1206, 65535
    %v1208 = vshrl.u32 %v1206, 16
    %v1209 = vcvt.s32.f32 %v1207
    %v1210 = vcvt.s32.f32 %v1208
    %1211 = vadd.xlane.f32.xlu0 %v1209
    %v1212 = vpop.xlane.xlu0 %1211
    %1213 = vadd.xlane.f32.xlu0 %v1210
    %v1214 = vpop.xlane.xlu0 %1213
    %v1215 = vcvt.f32.s32 %v1212
    %v1216 = vcvt.f32.s32 %v1214
    %v1217 = vshll.u32 %v1216, 16
    %v1218 = vadd.s32 %v1217, %v1215
    %v1219 = vrot.slane %v1218, 4
    %v1220 = vadd.s32 %v1218, %v1219
    %v1221 = vrot.slane %v1220, 2
    %v1222 = vadd.s32 %v1220, %v1221
    %v1223 = vrot.slane %v1222, 1
    %v1224 = vadd.s32 %v1222, %v1223
    %s1225 = vtos %v1224
    %p1226 = scmp.le.s32.totalorder %s1225, 5
    %s1227 = scalar_select %p1226, %s1202, %s1123
    %s1228 = sor.u32 %s1149, 524288
    %s1229 = sxor.u32 %s1228, 2147483648
    %v1230 = vstv %s1229
    %vm1231 = vcmp.lt.s32.totalorder %v28, %v1230
    %v1232 = vsel %vm1231, 1, 0
    %v1233 = vand.u32 %v1232, 65535
    %v1234 = vshrl.u32 %v1232, 16
    %v1235 = vcvt.s32.f32 %v1233
    %v1236 = vcvt.s32.f32 %v1234
    %1237 = vadd.xlane.f32.xlu0 %v1235
    %v1238 = vpop.xlane.xlu0 %1237
    %1239 = vadd.xlane.f32.xlu0 %v1236
    %v1240 = vpop.xlane.xlu0 %1239
    %v1241 = vcvt.f32.s32 %v1238
    %v1242 = vcvt.f32.s32 %v1240
    %v1243 = vshll.u32 %v1242, 16
    %v1244 = vadd.s32 %v1243, %v1241
    %v1245 = vrot.slane %v1244, 4
    %v1246 = vadd.s32 %v1244, %v1245
    %v1247 = vrot.slane %v1246, 2
    %v1248 = vadd.s32 %v1246, %v1247
    %v1249 = vrot.slane %v1248, 1
    %v1250 = vadd.s32 %v1248, %v1249
    %s1251 = vtos %v1250
    %p1252 = scmp.le.s32.totalorder %s1251, 6
    %s1253 = scalar_select %p1252, %s1228, %s1149
    %s1254 = sor.u32 %s1175, 524288
    %s1255 = sxor.u32 %s1254, 2147483648
    %v1256 = vstv %s1255
    %vm1257 = vcmp.lt.s32.totalorder %v28, %v1256
    %v1258 = vsel %vm1257, 1, 0
    %v1259 = vand.u32 %v1258, 65535
    %v1260 = vshrl.u32 %v1258, 16
    %v1261 = vcvt.s32.f32 %v1259
    %v1262 = vcvt.s32.f32 %v1260
    %1263 = vadd.xlane.f32.xlu0 %v1261
    %v1264 = vpop.xlane.xlu0 %1263
    %1265 = vadd.xlane.f32.xlu0 %v1262
    %v1266 = vpop.xlane.xlu0 %1265
    %v1267 = vcvt.f32.s32 %v1264
    %v1268 = vcvt.f32.s32 %v1266
    %v1269 = vshll.u32 %v1268, 16
    %v1270 = vadd.s32 %v1269, %v1267
    %v1271 = vrot.slane %v1270, 4
    %v1272 = vadd.s32 %v1270, %v1271
    %v1273 = vrot.slane %v1272, 2
    %v1274 = vadd.s32 %v1272, %v1273
    %v1275 = vrot.slane %v1274, 1
    %v1276 = vadd.s32 %v1274, %v1275
    %s1277 = vtos %v1276
    %p1278 = scmp.le.s32.totalorder %s1277, 9
    %s1279 = scalar_select %p1278, %s1254, %s1175
    %s1280 = sor.u32 %s1201, 524288
    %s1281 = sxor.u32 %s1280, 2147483648
    %v1282 = vstv %s1281
    %vm1283 = vcmp.lt.s32.totalorder %v28, %v1282
    %v1284 = vsel %vm1283, 1, 0
    %v1285 = vand.u32 %v1284, 65535
    %v1286 = vshrl.u32 %v1284, 16
    %v1287 = vcvt.s32.f32 %v1285
    %v1288 = vcvt.s32.f32 %v1286
    %1289 = vadd.xlane.f32.xlu0 %v1287
    %v1290 = vpop.xlane.xlu0 %1289
    %1291 = vadd.xlane.f32.xlu0 %v1288
    %v1292 = vpop.xlane.xlu0 %1291
    %v1293 = vcvt.f32.s32 %v1290
    %v1294 = vcvt.f32.s32 %v1292
    %v1295 = vshll.u32 %v1294, 16
    %v1296 = vadd.s32 %v1295, %v1293
    %v1297 = vrot.slane %v1296, 4
    %v1298 = vadd.s32 %v1296, %v1297
    %v1299 = vrot.slane %v1298, 2
    %v1300 = vadd.s32 %v1298, %v1299
    %v1301 = vrot.slane %v1300, 1
    %v1302 = vadd.s32 %v1300, %v1301
    %s1303 = vtos %v1302
    %p1304 = scmp.le.s32.totalorder %s1303, 10
    %s1305 = scalar_select %p1304, %s1280, %s1201
    %s1306 = sor.u32 %s1227, 262144
    %s1307 = sxor.u32 %s1306, 2147483648
    %v1308 = vstv %s1307
    %vm1309 = vcmp.lt.s32.totalorder %v28, %v1308
    %v1310 = vsel %vm1309, 1, 0
    %v1311 = vand.u32 %v1310, 65535
    %v1312 = vshrl.u32 %v1310, 16
    %v1313 = vcvt.s32.f32 %v1311
    %v1314 = vcvt.s32.f32 %v1312
    %1315 = vadd.xlane.f32.xlu0 %v1313
    %v1316 = vpop.xlane.xlu0 %1315
    %1317 = vadd.xlane.f32.xlu0 %v1314
    %v1318 = vpop.xlane.xlu0 %1317
    %v1319 = vcvt.f32.s32 %v1316
    %v1320 = vcvt.f32.s32 %v1318
    %v1321 = vshll.u32 %v1320, 16
    %v1322 = vadd.s32 %v1321, %v1319
    %v1323 = vrot.slane %v1322, 4
    %v1324 = vadd.s32 %v1322, %v1323
    %v1325 = vrot.slane %v1324, 2
    %v1326 = vadd.s32 %v1324, %v1325
    %v1327 = vrot.slane %v1326, 1
    %v1328 = vadd.s32 %v1326, %v1327
    %s1329 = vtos %v1328
    %p1330 = scmp.le.s32.totalorder %s1329, 5
    %s1331 = scalar_select %p1330, %s1306, %s1227
    %s1332 = sor.u32 %s1253, 262144
    %s1333 = sxor.u32 %s1332, 2147483648
    %v1334 = vstv %s1333
    %vm1335 = vcmp.lt.s32.totalorder %v28, %v1334
    %v1336 = vsel %vm1335, 1, 0
    %v1337 = vand.u32 %v1336, 65535
    %v1338 = vshrl.u32 %v1336, 16
    %v1339 = vcvt.s32.f32 %v1337
    %v1340 = vcvt.s32.f32 %v1338
    %1341 = vadd.xlane.f32.xlu0 %v1339
    %v1342 = vpop.xlane.xlu0 %1341
    %1343 = vadd.xlane.f32.xlu0 %v1340
    %v1344 = vpop.xlane.xlu0 %1343
    %v1345 = vcvt.f32.s32 %v1342
    %v1346 = vcvt.f32.s32 %v1344
    %v1347 = vshll.u32 %v1346, 16
    %v1348 = vadd.s32 %v1347, %v1345
    %v1349 = vrot.slane %v1348, 4
    %v1350 = vadd.s32 %v1348, %v1349
    %v1351 = vrot.slane %v1350, 2
    %v1352 = vadd.s32 %v1350, %v1351
    %v1353 = vrot.slane %v1352, 1
    %v1354 = vadd.s32 %v1352, %v1353
    %s1355 = vtos %v1354
    %p1356 = scmp.le.s32.totalorder %s1355, 6
    %s1357 = scalar_select %p1356, %s1332, %s1253
    %s1358 = sor.u32 %s1279, 262144
    %s1359 = sxor.u32 %s1358, 2147483648
    %v1360 = vstv %s1359
    %vm1361 = vcmp.lt.s32.totalorder %v28, %v1360
    %v1362 = vsel %vm1361, 1, 0
    %v1363 = vand.u32 %v1362, 65535
    %v1364 = vshrl.u32 %v1362, 16
    %v1365 = vcvt.s32.f32 %v1363
    %v1366 = vcvt.s32.f32 %v1364
    %1367 = vadd.xlane.f32.xlu0 %v1365
    %v1368 = vpop.xlane.xlu0 %1367
    %1369 = vadd.xlane.f32.xlu0 %v1366
    %v1370 = vpop.xlane.xlu0 %1369
    %v1371 = vcvt.f32.s32 %v1368
    %v1372 = vcvt.f32.s32 %v1370
    %v1373 = vshll.u32 %v1372, 16
    %v1374 = vadd.s32 %v1373, %v1371
    %v1375 = vrot.slane %v1374, 4
    %v1376 = vadd.s32 %v1374, %v1375
    %v1377 = vrot.slane %v1376, 2
    %v1378 = vadd.s32 %v1376, %v1377
    %v1379 = vrot.slane %v1378, 1
    %v1380 = vadd.s32 %v1378, %v1379
    %s1381 = vtos %v1380
    %p1382 = scmp.le.s32.totalorder %s1381, 9
    %s1383 = scalar_select %p1382, %s1358, %s1279
    %s1384 = sor.u32 %s1305, 262144
    %s1385 = sxor.u32 %s1384, 2147483648
    %v1386 = vstv %s1385
    %vm1387 = vcmp.lt.s32.totalorder %v28, %v1386
    %v1388 = vsel %vm1387, 1, 0
    %v1389 = vand.u32 %v1388, 65535
    %v1390 = vshrl.u32 %v1388, 16
    %v1391 = vcvt.s32.f32 %v1389
    %v1392 = vcvt.s32.f32 %v1390
    %1393 = vadd.xlane.f32.xlu0 %v1391
    %v1394 = vpop.xlane.xlu0 %1393
    %1395 = vadd.xlane.f32.xlu0 %v1392
    %v1396 = vpop.xlane.xlu0 %1395
    %v1397 = vcvt.f32.s32 %v1394
    %v1398 = vcvt.f32.s32 %v1396
    %v1399 = vshll.u32 %v1398, 16
    %v1400 = vadd.s32 %v1399, %v1397
    %v1401 = vrot.slane %v1400, 4
    %v1402 = vadd.s32 %v1400, %v1401
    %v1403 = vrot.slane %v1402, 2
    %v1404 = vadd.s32 %v1402, %v1403
    %v1405 = vrot.slane %v1404, 1
    %v1406 = vadd.s32 %v1404, %v1405
    %s1407 = vtos %v1406
    %p1408 = scmp.le.s32.totalorder %s1407, 10
    %s1409 = scalar_select %p1408, %s1384, %s1305
    %s1410 = sor.u32 %s1331, 131072
    %s1411 = sxor.u32 %s1410, 2147483648
    %v1412 = vstv %s1411
    %vm1413 = vcmp.lt.s32.totalorder %v28, %v1412
    %v1414 = vsel %vm1413, 1, 0
    %v1415 = vand.u32 %v1414, 65535
    %v1416 = vshrl.u32 %v1414, 16
    %v1417 = vcvt.s32.f32 %v1415
    %v1418 = vcvt.s32.f32 %v1416
    %1419 = vadd.xlane.f32.xlu0 %v1417
    %v1420 = vpop.xlane.xlu0 %1419
    %1421 = vadd.xlane.f32.xlu0 %v1418
    %v1422 = vpop.xlane.xlu0 %1421
    %v1423 = vcvt.f32.s32 %v1420
    %v1424 = vcvt.f32.s32 %v1422
    %v1425 = vshll.u32 %v1424, 16
    %v1426 = vadd.s32 %v1425, %v1423
    %v1427 = vrot.slane %v1426, 4
    %v1428 = vadd.s32 %v1426, %v1427
    %v1429 = vrot.slane %v1428, 2
    %v1430 = vadd.s32 %v1428, %v1429
    %v1431 = vrot.slane %v1430, 1
    %v1432 = vadd.s32 %v1430, %v1431
    %s1433 = vtos %v1432
    %p1434 = scmp.le.s32.totalorder %s1433, 5
    %s1435 = scalar_select %p1434, %s1410, %s1331
    %s1436 = sor.u32 %s1357, 131072
    %s1437 = sxor.u32 %s1436, 2147483648
    %v1438 = vstv %s1437
    %vm1439 = vcmp.lt.s32.totalorder %v28, %v1438
    %v1440 = vsel %vm1439, 1, 0
    %v1441 = vand.u32 %v1440, 65535
    %v1442 = vshrl.u32 %v1440, 16
    %v1443 = vcvt.s32.f32 %v1441
    %v1444 = vcvt.s32.f32 %v1442
    %1445 = vadd.xlane.f32.xlu0 %v1443
    %v1446 = vpop.xlane.xlu0 %1445
    %1447 = vadd.xlane.f32.xlu0 %v1444
    %v1448 = vpop.xlane.xlu0 %1447
    %v1449 = vcvt.f32.s32 %v1446
    %v1450 = vcvt.f32.s32 %v1448
    %v1451 = vshll.u32 %v1450, 16
    %v1452 = vadd.s32 %v1451, %v1449
    %v1453 = vrot.slane %v1452, 4
    %v1454 = vadd.s32 %v1452, %v1453
    %v1455 = vrot.slane %v1454, 2
    %v1456 = vadd.s32 %v1454, %v1455
    %v1457 = vrot.slane %v1456, 1
    %v1458 = vadd.s32 %v1456, %v1457
    %s1459 = vtos %v1458
    %p1460 = scmp.le.s32.totalorder %s1459, 6
    %s1461 = scalar_select %p1460, %s1436, %s1357
    %s1462 = sor.u32 %s1383, 131072
    %s1463 = sxor.u32 %s1462, 2147483648
    %v1464 = vstv %s1463
    %vm1465 = vcmp.lt.s32.totalorder %v28, %v1464
    %v1466 = vsel %vm1465, 1, 0
    %v1467 = vand.u32 %v1466, 65535
    %v1468 = vshrl.u32 %v1466, 16
    %v1469 = vcvt.s32.f32 %v1467
    %v1470 = vcvt.s32.f32 %v1468
    %1471 = vadd.xlane.f32.xlu0 %v1469
    %v1472 = vpop.xlane.xlu0 %1471
    %1473 = vadd.xlane.f32.xlu0 %v1470
    %v1474 = vpop.xlane.xlu0 %1473
    %v1475 = vcvt.f32.s32 %v1472
    %v1476 = vcvt.f32.s32 %v1474
    %v1477 = vshll.u32 %v1476, 16
    %v1478 = vadd.s32 %v1477, %v1475
    %v1479 = vrot.slane %v1478, 4
    %v1480 = vadd.s32 %v1478, %v1479
    %v1481 = vrot.slane %v1480, 2
    %v1482 = vadd.s32 %v1480, %v1481
    %v1483 = vrot.slane %v1482, 1
    %v1484 = vadd.s32 %v1482, %v1483
    %s1485 = vtos %v1484
    %p1486 = scmp.le.s32.totalorder %s1485, 9
    %s1487 = scalar_select %p1486, %s1462, %s1383
    %s1488 = sor.u32 %s1409, 131072
    %s1489 = sxor.u32 %s1488, 2147483648
    %v1490 = vstv %s1489
    %vm1491 = vcmp.lt.s32.totalorder %v28, %v1490
    %v1492 = vsel %vm1491, 1, 0
    %v1493 = vand.u32 %v1492, 65535
    %v1494 = vshrl.u32 %v1492, 16
    %v1495 = vcvt.s32.f32 %v1493
    %v1496 = vcvt.s32.f32 %v1494
    %1497 = vadd.xlane.f32.xlu0 %v1495
    %v1498 = vpop.xlane.xlu0 %1497
    %1499 = vadd.xlane.f32.xlu0 %v1496
    %v1500 = vpop.xlane.xlu0 %1499
    %v1501 = vcvt.f32.s32 %v1498
    %v1502 = vcvt.f32.s32 %v1500
    %v1503 = vshll.u32 %v1502, 16
    %v1504 = vadd.s32 %v1503, %v1501
    %v1505 = vrot.slane %v1504, 4
    %v1506 = vadd.s32 %v1504, %v1505
    %v1507 = vrot.slane %v1506, 2
    %v1508 = vadd.s32 %v1506, %v1507
    %v1509 = vrot.slane %v1508, 1
    %v1510 = vadd.s32 %v1508, %v1509
    %s1511 = vtos %v1510
    %p1512 = scmp.le.s32.totalorder %s1511, 10
    %s1513 = scalar_select %p1512, %s1488, %s1409
    %s1514 = sor.u32 %s1435, 65536
    %s1515 = sxor.u32 %s1514, 2147483648
    %v1516 = vstv %s1515
    %vm1517 = vcmp.lt.s32.totalorder %v28, %v1516
    %v1518 = vsel %vm1517, 1, 0
    %v1519 = vand.u32 %v1518, 65535
    %v1520 = vshrl.u32 %v1518, 16
    %v1521 = vcvt.s32.f32 %v1519
    %v1522 = vcvt.s32.f32 %v1520
    %1523 = vadd.xlane.f32.xlu0 %v1521
    %v1524 = vpop.xlane.xlu0 %1523
    %1525 = vadd.xlane.f32.xlu0 %v1522
    %v1526 = vpop.xlane.xlu0 %1525
    %v1527 = vcvt.f32.s32 %v1524
    %v1528 = vcvt.f32.s32 %v1526
    %v1529 = vshll.u32 %v1528, 16
    %v1530 = vadd.s32 %v1529, %v1527
    %v1531 = vrot.slane %v1530, 4
    %v1532 = vadd.s32 %v1530, %v1531
    %v1533 = vrot.slane %v1532, 2
    %v1534 = vadd.s32 %v1532, %v1533
    %v1535 = vrot.slane %v1534, 1
    %v1536 = vadd.s32 %v1534, %v1535
    %s1537 = vtos %v1536
    %p1538 = scmp.le.s32.totalorder %s1537, 5
    %s1539 = scalar_select %p1538, %s1514, %s1435
    %s1540 = sor.u32 %s1461, 65536
    %s1541 = sxor.u32 %s1540, 2147483648
    %v1542 = vstv %s1541
    %vm1543 = vcmp.lt.s32.totalorder %v28, %v1542
    %v1544 = vsel %vm1543, 1, 0
    %v1545 = vand.u32 %v1544, 65535
    %v1546 = vshrl.u32 %v1544, 16
    %v1547 = vcvt.s32.f32 %v1545
    %v1548 = vcvt.s32.f32 %v1546
    %1549 = vadd.xlane.f32.xlu0 %v1547
    %v1550 = vpop.xlane.xlu0 %1549
    %1551 = vadd.xlane.f32.xlu0 %v1548
    %v1552 = vpop.xlane.xlu0 %1551
    %v1553 = vcvt.f32.s32 %v1550
    %v1554 = vcvt.f32.s32 %v1552
    %v1555 = vshll.u32 %v1554, 16
    %v1556 = vadd.s32 %v1555, %v1553
    %v1557 = vrot.slane %v1556, 4
    %v1558 = vadd.s32 %v1556, %v1557
    %v1559 = vrot.slane %v1558, 2
    %v1560 = vadd.s32 %v1558, %v1559
    %v1561 = vrot.slane %v1560, 1
    %v1562 = vadd.s32 %v1560, %v1561
    %s1563 = vtos %v1562
    %p1564 = scmp.le.s32.totalorder %s1563, 6
    %s1565 = scalar_select %p1564, %s1540, %s1461
    %s1566 = sor.u32 %s1487, 65536
    %s1567 = sxor.u32 %s1566, 2147483648
    %v1568 = vstv %s1567
    %vm1569 = vcmp.lt.s32.totalorder %v28, %v1568
    %v1570 = vsel %vm1569, 1, 0
    %v1571 = vand.u32 %v1570, 65535
    %v1572 = vshrl.u32 %v1570, 16
    %v1573 = vcvt.s32.f32 %v1571
    %v1574 = vcvt.s32.f32 %v1572
    %1575 = vadd.xlane.f32.xlu0 %v1573
    %v1576 = vpop.xlane.xlu0 %1575
    %1577 = vadd.xlane.f32.xlu0 %v1574
    %v1578 = vpop.xlane.xlu0 %1577
    %v1579 = vcvt.f32.s32 %v1576
    %v1580 = vcvt.f32.s32 %v1578
    %v1581 = vshll.u32 %v1580, 16
    %v1582 = vadd.s32 %v1581, %v1579
    %v1583 = vrot.slane %v1582, 4
    %v1584 = vadd.s32 %v1582, %v1583
    %v1585 = vrot.slane %v1584, 2
    %v1586 = vadd.s32 %v1584, %v1585
    %v1587 = vrot.slane %v1586, 1
    %v1588 = vadd.s32 %v1586, %v1587
    %s1589 = vtos %v1588
    %p1590 = scmp.le.s32.totalorder %s1589, 9
    %s1591 = scalar_select %p1590, %s1566, %s1487
    %s1592 = sor.u32 %s1513, 65536
    %s1593 = sxor.u32 %s1592, 2147483648
    %v1594 = vstv %s1593
    %vm1595 = vcmp.lt.s32.totalorder %v28, %v1594
    %v1596 = vsel %vm1595, 1, 0
    %v1597 = vand.u32 %v1596, 65535
    %v1598 = vshrl.u32 %v1596, 16
    %v1599 = vcvt.s32.f32 %v1597
    %v1600 = vcvt.s32.f32 %v1598
    %1601 = vadd.xlane.f32.xlu0 %v1599
    %v1602 = vpop.xlane.xlu0 %1601
    %1603 = vadd.xlane.f32.xlu0 %v1600
    %v1604 = vpop.xlane.xlu0 %1603
    %v1605 = vcvt.f32.s32 %v1602
    %v1606 = vcvt.f32.s32 %v1604
    %v1607 = vshll.u32 %v1606, 16
    %v1608 = vadd.s32 %v1607, %v1605
    %v1609 = vrot.slane %v1608, 4
    %v1610 = vadd.s32 %v1608, %v1609
    %v1611 = vrot.slane %v1610, 2
    %v1612 = vadd.s32 %v1610, %v1611
    %v1613 = vrot.slane %v1612, 1
    %v1614 = vadd.s32 %v1612, %v1613
    %s1615 = vtos %v1614
    %p1616 = scmp.le.s32.totalorder %s1615, 10
    %s1617 = scalar_select %p1616, %s1592, %s1513
    %s1618 = sor.u32 %s1539, 32768
    %s1619 = sxor.u32 %s1618, 2147483648
    %v1620 = vstv %s1619
    %vm1621 = vcmp.lt.s32.totalorder %v28, %v1620
    %v1622 = vsel %vm1621, 1, 0
    %v1623 = vand.u32 %v1622, 65535
    %v1624 = vshrl.u32 %v1622, 16
    %v1625 = vcvt.s32.f32 %v1623
    %v1626 = vcvt.s32.f32 %v1624
    %1627 = vadd.xlane.f32.xlu0 %v1625
    %v1628 = vpop.xlane.xlu0 %1627
    %1629 = vadd.xlane.f32.xlu0 %v1626
    %v1630 = vpop.xlane.xlu0 %1629
    %v1631 = vcvt.f32.s32 %v1628
    %v1632 = vcvt.f32.s32 %v1630
    %v1633 = vshll.u32 %v1632, 16
    %v1634 = vadd.s32 %v1633, %v1631
    %v1635 = vrot.slane %v1634, 4
    %v1636 = vadd.s32 %v1634, %v1635
    %v1637 = vrot.slane %v1636, 2
    %v1638 = vadd.s32 %v1636, %v1637
    %v1639 = vrot.slane %v1638, 1
    %v1640 = vadd.s32 %v1638, %v1639
    %s1641 = vtos %v1640
    %p1642 = scmp.le.s32.totalorder %s1641, 5
    %s1643 = scalar_select %p1642, %s1618, %s1539
    %s1644 = sor.u32 %s1565, 32768
    %s1645 = sxor.u32 %s1644, 2147483648
    %v1646 = vstv %s1645
    %vm1647 = vcmp.lt.s32.totalorder %v28, %v1646
    %v1648 = vsel %vm1647, 1, 0
    %v1649 = vand.u32 %v1648, 65535
    %v1650 = vshrl.u32 %v1648, 16
    %v1651 = vcvt.s32.f32 %v1649
    %v1652 = vcvt.s32.f32 %v1650
    %1653 = vadd.xlane.f32.xlu0 %v1651
    %v1654 = vpop.xlane.xlu0 %1653
    %1655 = vadd.xlane.f32.xlu0 %v1652
    %v1656 = vpop.xlane.xlu0 %1655
    %v1657 = vcvt.f32.s32 %v1654
    %v1658 = vcvt.f32.s32 %v1656
    %v1659 = vshll.u32 %v1658, 16
    %v1660 = vadd.s32 %v1659, %v1657
    %v1661 = vrot.slane %v1660, 4
    %v1662 = vadd.s32 %v1660, %v1661
    %v1663 = vrot.slane %v1662, 2
    %v1664 = vadd.s32 %v1662, %v1663
    %v1665 = vrot.slane %v1664, 1
    %v1666 = vadd.s32 %v1664, %v1665
    %s1667 = vtos %v1666
    %p1668 = scmp.le.s32.totalorder %s1667, 6
    %s1669 = scalar_select %p1668, %s1644, %s1565
    %s1670 = sor.u32 %s1591, 32768
    %s1671 = sxor.u32 %s1670, 2147483648
    %v1672 = vstv %s1671
    %vm1673 = vcmp.lt.s32.totalorder %v28, %v1672
    %v1674 = vsel %vm1673, 1, 0
    %v1675 = vand.u32 %v1674, 65535
    %v1676 = vshrl.u32 %v1674, 16
    %v1677 = vcvt.s32.f32 %v1675
    %v1678 = vcvt.s32.f32 %v1676
    %1679 = vadd.xlane.f32.xlu0 %v1677
    %v1680 = vpop.xlane.xlu0 %1679
    %1681 = vadd.xlane.f32.xlu0 %v1678
    %v1682 = vpop.xlane.xlu0 %1681
    %v1683 = vcvt.f32.s32 %v1680
    %v1684 = vcvt.f32.s32 %v1682
    %v1685 = vshll.u32 %v1684, 16
    %v1686 = vadd.s32 %v1685, %v1683
    %v1687 = vrot.slane %v1686, 4
    %v1688 = vadd.s32 %v1686, %v1687
    %v1689 = vrot.slane %v1688, 2
    %v1690 = vadd.s32 %v1688, %v1689
    %v1691 = vrot.slane %v1690, 1
    %v1692 = vadd.s32 %v1690, %v1691
    %s1693 = vtos %v1692
    %p1694 = scmp.le.s32.totalorder %s1693, 9
    %s1695 = scalar_select %p1694, %s1670, %s1591
    %s1696 = sor.u32 %s1617, 32768
    %s1697 = sxor.u32 %s1696, 2147483648
    %v1698 = vstv %s1697
    %vm1699 = vcmp.lt.s32.totalorder %v28, %v1698
    %v1700 = vsel %vm1699, 1, 0
    %v1701 = vand.u32 %v1700, 65535
    %v1702 = vshrl.u32 %v1700, 16
    %v1703 = vcvt.s32.f32 %v1701
    %v1704 = vcvt.s32.f32 %v1702
    %1705 = vadd.xlane.f32.xlu0 %v1703
    %v1706 = vpop.xlane.xlu0 %1705
    %1707 = vadd.xlane.f32.xlu0 %v1704
    %v1708 = vpop.xlane.xlu0 %1707
    %v1709 = vcvt.f32.s32 %v1706
    %v1710 = vcvt.f32.s32 %v1708
    %v1711 = vshll.u32 %v1710, 16
    %v1712 = vadd.s32 %v1711, %v1709
    %v1713 = vrot.slane %v1712, 4
    %v1714 = vadd.s32 %v1712, %v1713
    %v1715 = vrot.slane %v1714, 2
    %v1716 = vadd.s32 %v1714, %v1715
    %v1717 = vrot.slane %v1716, 1
    %v1718 = vadd.s32 %v1716, %v1717
    %s1719 = vtos %v1718
    %p1720 = scmp.le.s32.totalorder %s1719, 10
    %s1721 = scalar_select %p1720, %s1696, %s1617
    %s1722 = sor.u32 %s1643, 16384
    %s1723 = sxor.u32 %s1722, 2147483648
    %v1724 = vstv %s1723
    %vm1725 = vcmp.lt.s32.totalorder %v28, %v1724
    %v1726 = vsel %vm1725, 1, 0
    %v1727 = vand.u32 %v1726, 65535
    %v1728 = vshrl.u32 %v1726, 16
    %v1729 = vcvt.s32.f32 %v1727
    %v1730 = vcvt.s32.f32 %v1728
    %1731 = vadd.xlane.f32.xlu0 %v1729
    %v1732 = vpop.xlane.xlu0 %1731
    %1733 = vadd.xlane.f32.xlu0 %v1730
    %v1734 = vpop.xlane.xlu0 %1733
    %v1735 = vcvt.f32.s32 %v1732
    %v1736 = vcvt.f32.s32 %v1734
    %v1737 = vshll.u32 %v1736, 16
    %v1738 = vadd.s32 %v1737, %v1735
    %v1739 = vrot.slane %v1738, 4
    %v1740 = vadd.s32 %v1738, %v1739
    %v1741 = vrot.slane %v1740, 2
    %v1742 = vadd.s32 %v1740, %v1741
    %v1743 = vrot.slane %v1742, 1
    %v1744 = vadd.s32 %v1742, %v1743
    %s1745 = vtos %v1744
    %p1746 = scmp.le.s32.totalorder %s1745, 5
    %s1747 = scalar_select %p1746, %s1722, %s1643
    %s1748 = sor.u32 %s1669, 16384
    %s1749 = sxor.u32 %s1748, 2147483648
    %v1750 = vstv %s1749
    %vm1751 = vcmp.lt.s32.totalorder %v28, %v1750
    %v1752 = vsel %vm1751, 1, 0
    %v1753 = vand.u32 %v1752, 65535
    %v1754 = vshrl.u32 %v1752, 16
    %v1755 = vcvt.s32.f32 %v1753
    %v1756 = vcvt.s32.f32 %v1754
    %1757 = vadd.xlane.f32.xlu0 %v1755
    %v1758 = vpop.xlane.xlu0 %1757
    %1759 = vadd.xlane.f32.xlu0 %v1756
    %v1760 = vpop.xlane.xlu0 %1759
    %v1761 = vcvt.f32.s32 %v1758
    %v1762 = vcvt.f32.s32 %v1760
    %v1763 = vshll.u32 %v1762, 16
    %v1764 = vadd.s32 %v1763, %v1761
    %v1765 = vrot.slane %v1764, 4
    %v1766 = vadd.s32 %v1764, %v1765
    %v1767 = vrot.slane %v1766, 2
    %v1768 = vadd.s32 %v1766, %v1767
    %v1769 = vrot.slane %v1768, 1
    %v1770 = vadd.s32 %v1768, %v1769
    %s1771 = vtos %v1770
    %p1772 = scmp.le.s32.totalorder %s1771, 6
    %s1773 = scalar_select %p1772, %s1748, %s1669
    %s1774 = sor.u32 %s1695, 16384
    %s1775 = sxor.u32 %s1774, 2147483648
    %v1776 = vstv %s1775
    %vm1777 = vcmp.lt.s32.totalorder %v28, %v1776
    %v1778 = vsel %vm1777, 1, 0
    %v1779 = vand.u32 %v1778, 65535
    %v1780 = vshrl.u32 %v1778, 16
    %v1781 = vcvt.s32.f32 %v1779
    %v1782 = vcvt.s32.f32 %v1780
    %1783 = vadd.xlane.f32.xlu0 %v1781
    %v1784 = vpop.xlane.xlu0 %1783
    %1785 = vadd.xlane.f32.xlu0 %v1782
    %v1786 = vpop.xlane.xlu0 %1785
    %v1787 = vcvt.f32.s32 %v1784
    %v1788 = vcvt.f32.s32 %v1786
    %v1789 = vshll.u32 %v1788, 16
    %v1790 = vadd.s32 %v1789, %v1787
    %v1791 = vrot.slane %v1790, 4
    %v1792 = vadd.s32 %v1790, %v1791
    %v1793 = vrot.slane %v1792, 2
    %v1794 = vadd.s32 %v1792, %v1793
    %v1795 = vrot.slane %v1794, 1
    %v1796 = vadd.s32 %v1794, %v1795
    %s1797 = vtos %v1796
    %p1798 = scmp.le.s32.totalorder %s1797, 9
    %s1799 = scalar_select %p1798, %s1774, %s1695
    %s1800 = sor.u32 %s1721, 16384
    %s1801 = sxor.u32 %s1800, 2147483648
    %v1802 = vstv %s1801
    %vm1803 = vcmp.lt.s32.totalorder %v28, %v1802
    %v1804 = vsel %vm1803, 1, 0
    %v1805 = vand.u32 %v1804, 65535
    %v1806 = vshrl.u32 %v1804, 16
    %v1807 = vcvt.s32.f32 %v1805
    %v1808 = vcvt.s32.f32 %v1806
    %1809 = vadd.xlane.f32.xlu0 %v1807
    %v1810 = vpop.xlane.xlu0 %1809
    %1811 = vadd.xlane.f32.xlu0 %v1808
    %v1812 = vpop.xlane.xlu0 %1811
    %v1813 = vcvt.f32.s32 %v1810
    %v1814 = vcvt.f32.s32 %v1812
    %v1815 = vshll.u32 %v1814, 16
    %v1816 = vadd.s32 %v1815, %v1813
    %v1817 = vrot.slane %v1816, 4
    %v1818 = vadd.s32 %v1816, %v1817
    %v1819 = vrot.slane %v1818, 2
    %v1820 = vadd.s32 %v1818, %v1819
    %v1821 = vrot.slane %v1820, 1
    %v1822 = vadd.s32 %v1820, %v1821
    %s1823 = vtos %v1822
    %p1824 = scmp.le.s32.totalorder %s1823, 10
    %s1825 = scalar_select %p1824, %s1800, %s1721
    %s1826 = sor.u32 %s1747, 8192
    %s1827 = sxor.u32 %s1826, 2147483648
    %v1828 = vstv %s1827
    %vm1829 = vcmp.lt.s32.totalorder %v28, %v1828
    %v1830 = vsel %vm1829, 1, 0
    %v1831 = vand.u32 %v1830, 65535
    %v1832 = vshrl.u32 %v1830, 16
    %v1833 = vcvt.s32.f32 %v1831
    %v1834 = vcvt.s32.f32 %v1832
    %1835 = vadd.xlane.f32.xlu0 %v1833
    %v1836 = vpop.xlane.xlu0 %1835
    %1837 = vadd.xlane.f32.xlu0 %v1834
    %v1838 = vpop.xlane.xlu0 %1837
    %v1839 = vcvt.f32.s32 %v1836
    %v1840 = vcvt.f32.s32 %v1838
    %v1841 = vshll.u32 %v1840, 16
    %v1842 = vadd.s32 %v1841, %v1839
    %v1843 = vrot.slane %v1842, 4
    %v1844 = vadd.s32 %v1842, %v1843
    %v1845 = vrot.slane %v1844, 2
    %v1846 = vadd.s32 %v1844, %v1845
    %v1847 = vrot.slane %v1846, 1
    %v1848 = vadd.s32 %v1846, %v1847
    %s1849 = vtos %v1848
    %p1850 = scmp.le.s32.totalorder %s1849, 5
    %s1851 = scalar_select %p1850, %s1826, %s1747
    %s1852 = sor.u32 %s1773, 8192
    %s1853 = sxor.u32 %s1852, 2147483648
    %v1854 = vstv %s1853
    %vm1855 = vcmp.lt.s32.totalorder %v28, %v1854
    %v1856 = vsel %vm1855, 1, 0
    %v1857 = vand.u32 %v1856, 65535
    %v1858 = vshrl.u32 %v1856, 16
    %v1859 = vcvt.s32.f32 %v1857
    %v1860 = vcvt.s32.f32 %v1858
    %1861 = vadd.xlane.f32.xlu0 %v1859
    %v1862 = vpop.xlane.xlu0 %1861
    %1863 = vadd.xlane.f32.xlu0 %v1860
    %v1864 = vpop.xlane.xlu0 %1863
    %v1865 = vcvt.f32.s32 %v1862
    %v1866 = vcvt.f32.s32 %v1864
    %v1867 = vshll.u32 %v1866, 16
    %v1868 = vadd.s32 %v1867, %v1865
    %v1869 = vrot.slane %v1868, 4
    %v1870 = vadd.s32 %v1868, %v1869
    %v1871 = vrot.slane %v1870, 2
    %v1872 = vadd.s32 %v1870, %v1871
    %v1873 = vrot.slane %v1872, 1
    %v1874 = vadd.s32 %v1872, %v1873
    %s1875 = vtos %v1874
    %p1876 = scmp.le.s32.totalorder %s1875, 6
    %s1877 = scalar_select %p1876, %s1852, %s1773
    %s1878 = sor.u32 %s1799, 8192
    %s1879 = sxor.u32 %s1878, 2147483648
    %v1880 = vstv %s1879
    %vm1881 = vcmp.lt.s32.totalorder %v28, %v1880
    %v1882 = vsel %vm1881, 1, 0
    %v1883 = vand.u32 %v1882, 65535
    %v1884 = vshrl.u32 %v1882, 16
    %v1885 = vcvt.s32.f32 %v1883
    %v1886 = vcvt.s32.f32 %v1884
    %1887 = vadd.xlane.f32.xlu0 %v1885
    %v1888 = vpop.xlane.xlu0 %1887
    %1889 = vadd.xlane.f32.xlu0 %v1886
    %v1890 = vpop.xlane.xlu0 %1889
    %v1891 = vcvt.f32.s32 %v1888
    %v1892 = vcvt.f32.s32 %v1890
    %v1893 = vshll.u32 %v1892, 16
    %v1894 = vadd.s32 %v1893, %v1891
    %v1895 = vrot.slane %v1894, 4
    %v1896 = vadd.s32 %v1894, %v1895
    %v1897 = vrot.slane %v1896, 2
    %v1898 = vadd.s32 %v1896, %v1897
    %v1899 = vrot.slane %v1898, 1
    %v1900 = vadd.s32 %v1898, %v1899
    %s1901 = vtos %v1900
    %p1902 = scmp.le.s32.totalorder %s1901, 9
    %s1903 = scalar_select %p1902, %s1878, %s1799
    %s1904 = sor.u32 %s1825, 8192
    %s1905 = sxor.u32 %s1904, 2147483648
    %v1906 = vstv %s1905
    %vm1907 = vcmp.lt.s32.totalorder %v28, %v1906
    %v1908 = vsel %vm1907, 1, 0
    %v1909 = vand.u32 %v1908, 65535
    %v1910 = vshrl.u32 %v1908, 16
    %v1911 = vcvt.s32.f32 %v1909
    %v1912 = vcvt.s32.f32 %v1910
    %1913 = vadd.xlane.f32.xlu0 %v1911
    %v1914 = vpop.xlane.xlu0 %1913
    %1915 = vadd.xlane.f32.xlu0 %v1912
    %v1916 = vpop.xlane.xlu0 %1915
    %v1917 = vcvt.f32.s32 %v1914
    %v1918 = vcvt.f32.s32 %v1916
    %v1919 = vshll.u32 %v1918, 16
    %v1920 = vadd.s32 %v1919, %v1917
    %v1921 = vrot.slane %v1920, 4
    %v1922 = vadd.s32 %v1920, %v1921
    %v1923 = vrot.slane %v1922, 2
    %v1924 = vadd.s32 %v1922, %v1923
    %v1925 = vrot.slane %v1924, 1
    %v1926 = vadd.s32 %v1924, %v1925
    %s1927 = vtos %v1926
    %p1928 = scmp.le.s32.totalorder %s1927, 10
    %s1929 = scalar_select %p1928, %s1904, %s1825
    %s1930 = sor.u32 %s1851, 4096
    %s1931 = sxor.u32 %s1930, 2147483648
    %v1932 = vstv %s1931
    %vm1933 = vcmp.lt.s32.totalorder %v28, %v1932
    %v1934 = vsel %vm1933, 1, 0
    %v1935 = vand.u32 %v1934, 65535
    %v1936 = vshrl.u32 %v1934, 16
    %v1937 = vcvt.s32.f32 %v1935
    %v1938 = vcvt.s32.f32 %v1936
    %1939 = vadd.xlane.f32.xlu0 %v1937
    %v1940 = vpop.xlane.xlu0 %1939
    %1941 = vadd.xlane.f32.xlu0 %v1938
    %v1942 = vpop.xlane.xlu0 %1941
    %v1943 = vcvt.f32.s32 %v1940
    %v1944 = vcvt.f32.s32 %v1942
    %v1945 = vshll.u32 %v1944, 16
    %v1946 = vadd.s32 %v1945, %v1943
    %v1947 = vrot.slane %v1946, 4
    %v1948 = vadd.s32 %v1946, %v1947
    %v1949 = vrot.slane %v1948, 2
    %v1950 = vadd.s32 %v1948, %v1949
    %v1951 = vrot.slane %v1950, 1
    %v1952 = vadd.s32 %v1950, %v1951
    %s1953 = vtos %v1952
    %p1954 = scmp.le.s32.totalorder %s1953, 5
    %s1955 = scalar_select %p1954, %s1930, %s1851
    %s1956 = sor.u32 %s1877, 4096
    %s1957 = sxor.u32 %s1956, 2147483648
    %v1958 = vstv %s1957
    %vm1959 = vcmp.lt.s32.totalorder %v28, %v1958
    %v1960 = vsel %vm1959, 1, 0
    %v1961 = vand.u32 %v1960, 65535
    %v1962 = vshrl.u32 %v1960, 16
    %v1963 = vcvt.s32.f32 %v1961
    %v1964 = vcvt.s32.f32 %v1962
    %1965 = vadd.xlane.f32.xlu0 %v1963
    %v1966 = vpop.xlane.xlu0 %1965
    %1967 = vadd.xlane.f32.xlu0 %v1964
    %v1968 = vpop.xlane.xlu0 %1967
    %v1969 = vcvt.f32.s32 %v1966
    %v1970 = vcvt.f32.s32 %v1968
    %v1971 = vshll.u32 %v1970, 16
    %v1972 = vadd.s32 %v1971, %v1969
    %v1973 = vrot.slane %v1972, 4
    %v1974 = vadd.s32 %v1972, %v1973
    %v1975 = vrot.slane %v1974, 2
    %v1976 = vadd.s32 %v1974, %v1975
    %v1977 = vrot.slane %v1976, 1
    %v1978 = vadd.s32 %v1976, %v1977
    %s1979 = vtos %v1978
    %p1980 = scmp.le.s32.totalorder %s1979, 6
    %s1981 = scalar_select %p1980, %s1956, %s1877
    %s1982 = sor.u32 %s1903, 4096
    %s1983 = sxor.u32 %s1982, 2147483648
    %v1984 = vstv %s1983
    %vm1985 = vcmp.lt.s32.totalorder %v28, %v1984
    %v1986 = vsel %vm1985, 1, 0
    %v1987 = vand.u32 %v1986, 65535
    %v1988 = vshrl.u32 %v1986, 16
    %v1989 = vcvt.s32.f32 %v1987
    %v1990 = vcvt.s32.f32 %v1988
    %1991 = vadd.xlane.f32.xlu0 %v1989
    %v1992 = vpop.xlane.xlu0 %1991
    %1993 = vadd.xlane.f32.xlu0 %v1990
    %v1994 = vpop.xlane.xlu0 %1993
    %v1995 = vcvt.f32.s32 %v1992
    %v1996 = vcvt.f32.s32 %v1994
    %v1997 = vshll.u32 %v1996, 16
    %v1998 = vadd.s32 %v1997, %v1995
    %v1999 = vrot.slane %v1998, 4
    %v2000 = vadd.s32 %v1998, %v1999
    %v2001 = vrot.slane %v2000, 2
    %v2002 = vadd.s32 %v2000, %v2001
    %v2003 = vrot.slane %v2002, 1
    %v2004 = vadd.s32 %v2002, %v2003
    %s2005 = vtos %v2004
    %p2006 = scmp.le.s32.totalorder %s2005, 9
    %s2007 = scalar_select %p2006, %s1982, %s1903
    %s2008 = sor.u32 %s1929, 4096
    %s2009 = sxor.u32 %s2008, 2147483648
    %v2010 = vstv %s2009
    %vm2011 = vcmp.lt.s32.totalorder %v28, %v2010
    %v2012 = vsel %vm2011, 1, 0
    %v2013 = vand.u32 %v2012, 65535
    %v2014 = vshrl.u32 %v2012, 16
    %v2015 = vcvt.s32.f32 %v2013
    %v2016 = vcvt.s32.f32 %v2014
    %2017 = vadd.xlane.f32.xlu0 %v2015
    %v2018 = vpop.xlane.xlu0 %2017
    %2019 = vadd.xlane.f32.xlu0 %v2016
    %v2020 = vpop.xlane.xlu0 %2019
    %v2021 = vcvt.f32.s32 %v2018
    %v2022 = vcvt.f32.s32 %v2020
    %v2023 = vshll.u32 %v2022, 16
    %v2024 = vadd.s32 %v2023, %v2021
    %v2025 = vrot.slane %v2024, 4
    %v2026 = vadd.s32 %v2024, %v2025
    %v2027 = vrot.slane %v2026, 2
    %v2028 = vadd.s32 %v2026, %v2027
    %v2029 = vrot.slane %v2028, 1
    %v2030 = vadd.s32 %v2028, %v2029
    %s2031 = vtos %v2030
    %p2032 = scmp.le.s32.totalorder %s2031, 10
    %s2033 = scalar_select %p2032, %s2008, %s1929
    %s2034 = sor.u32 %s1955, 2048
    %s2035 = sxor.u32 %s2034, 2147483648
    %v2036 = vstv %s2035
    %vm2037 = vcmp.lt.s32.totalorder %v28, %v2036
    %v2038 = vsel %vm2037, 1, 0
    %v2039 = vand.u32 %v2038, 65535
    %v2040 = vshrl.u32 %v2038, 16
    %v2041 = vcvt.s32.f32 %v2039
    %v2042 = vcvt.s32.f32 %v2040
    %2043 = vadd.xlane.f32.xlu0 %v2041
    %v2044 = vpop.xlane.xlu0 %2043
    %2045 = vadd.xlane.f32.xlu0 %v2042
    %v2046 = vpop.xlane.xlu0 %2045
    %v2047 = vcvt.f32.s32 %v2044
    %v2048 = vcvt.f32.s32 %v2046
    %v2049 = vshll.u32 %v2048, 16
    %v2050 = vadd.s32 %v2049, %v2047
    %v2051 = vrot.slane %v2050, 4
    %v2052 = vadd.s32 %v2050, %v2051
    %v2053 = vrot.slane %v2052, 2
    %v2054 = vadd.s32 %v2052, %v2053
    %v2055 = vrot.slane %v2054, 1
    %v2056 = vadd.s32 %v2054, %v2055
    %s2057 = vtos %v2056
    %p2058 = scmp.le.s32.totalorder %s2057, 5
    %s2059 = scalar_select %p2058, %s2034, %s1955
    %s2060 = sor.u32 %s1981, 2048
    %s2061 = sxor.u32 %s2060, 2147483648
    %v2062 = vstv %s2061
    %vm2063 = vcmp.lt.s32.totalorder %v28, %v2062
    %v2064 = vsel %vm2063, 1, 0
    %v2065 = vand.u32 %v2064, 65535
    %v2066 = vshrl.u32 %v2064, 16
    %v2067 = vcvt.s32.f32 %v2065
    %v2068 = vcvt.s32.f32 %v2066
    %2069 = vadd.xlane.f32.xlu0 %v2067
    %v2070 = vpop.xlane.xlu0 %2069
    %2071 = vadd.xlane.f32.xlu0 %v2068
    %v2072 = vpop.xlane.xlu0 %2071
    %v2073 = vcvt.f32.s32 %v2070
    %v2074 = vcvt.f32.s32 %v2072
    %v2075 = vshll.u32 %v2074, 16
    %v2076 = vadd.s32 %v2075, %v2073
    %v2077 = vrot.slane %v2076, 4
    %v2078 = vadd.s32 %v2076, %v2077
    %v2079 = vrot.slane %v2078, 2
    %v2080 = vadd.s32 %v2078, %v2079
    %v2081 = vrot.slane %v2080, 1
    %v2082 = vadd.s32 %v2080, %v2081
    %s2083 = vtos %v2082
    %p2084 = scmp.le.s32.totalorder %s2083, 6
    %s2085 = scalar_select %p2084, %s2060, %s1981
    %s2086 = sor.u32 %s2007, 2048
    %s2087 = sxor.u32 %s2086, 2147483648
    %v2088 = vstv %s2087
    %vm2089 = vcmp.lt.s32.totalorder %v28, %v2088
    %v2090 = vsel %vm2089, 1, 0
    %v2091 = vand.u32 %v2090, 65535
    %v2092 = vshrl.u32 %v2090, 16
    %v2093 = vcvt.s32.f32 %v2091
    %v2094 = vcvt.s32.f32 %v2092
    %2095 = vadd.xlane.f32.xlu0 %v2093
    %v2096 = vpop.xlane.xlu0 %2095
    %2097 = vadd.xlane.f32.xlu0 %v2094
    %v2098 = vpop.xlane.xlu0 %2097
    %v2099 = vcvt.f32.s32 %v2096
    %v2100 = vcvt.f32.s32 %v2098
    %v2101 = vshll.u32 %v2100, 16
    %v2102 = vadd.s32 %v2101, %v2099
    %v2103 = vrot.slane %v2102, 4
    %v2104 = vadd.s32 %v2102, %v2103
    %v2105 = vrot.slane %v2104, 2
    %v2106 = vadd.s32 %v2104, %v2105
    %v2107 = vrot.slane %v2106, 1
    %v2108 = vadd.s32 %v2106, %v2107
    %s2109 = vtos %v2108
    %p2110 = scmp.le.s32.totalorder %s2109, 9
    %s2111 = scalar_select %p2110, %s2086, %s2007
    %s2112 = sor.u32 %s2033, 2048
    %s2113 = sxor.u32 %s2112, 2147483648
    %v2114 = vstv %s2113
    %vm2115 = vcmp.lt.s32.totalorder %v28, %v2114
    %v2116 = vsel %vm2115, 1, 0
    %v2117 = vand.u32 %v2116, 65535
    %v2118 = vshrl.u32 %v2116, 16
    %v2119 = vcvt.s32.f32 %v2117
    %v2120 = vcvt.s32.f32 %v2118
    %2121 = vadd.xlane.f32.xlu0 %v2119
    %v2122 = vpop.xlane.xlu0 %2121
    %2123 = vadd.xlane.f32.xlu0 %v2120
    %v2124 = vpop.xlane.xlu0 %2123
    %v2125 = vcvt.f32.s32 %v2122
    %v2126 = vcvt.f32.s32 %v2124
    %v2127 = vshll.u32 %v2126, 16
    %v2128 = vadd.s32 %v2127, %v2125
    %v2129 = vrot.slane %v2128, 4
    %v2130 = vadd.s32 %v2128, %v2129
    %v2131 = vrot.slane %v2130, 2
    %v2132 = vadd.s32 %v2130, %v2131
    %v2133 = vrot.slane %v2132, 1
    %v2134 = vadd.s32 %v2132, %v2133
    %s2135 = vtos %v2134
    %p2136 = scmp.le.s32.totalorder %s2135, 10
    %s2137 = scalar_select %p2136, %s2112, %s2033
    %s2138 = sor.u32 %s2059, 1024
    %s2139 = sxor.u32 %s2138, 2147483648
    %v2140 = vstv %s2139
    %vm2141 = vcmp.lt.s32.totalorder %v28, %v2140
    %v2142 = vsel %vm2141, 1, 0
    %v2143 = vand.u32 %v2142, 65535
    %v2144 = vshrl.u32 %v2142, 16
    %v2145 = vcvt.s32.f32 %v2143
    %v2146 = vcvt.s32.f32 %v2144
    %2147 = vadd.xlane.f32.xlu0 %v2145
    %v2148 = vpop.xlane.xlu0 %2147
    %2149 = vadd.xlane.f32.xlu0 %v2146
    %v2150 = vpop.xlane.xlu0 %2149
    %v2151 = vcvt.f32.s32 %v2148
    %v2152 = vcvt.f32.s32 %v2150
    %v2153 = vshll.u32 %v2152, 16
    %v2154 = vadd.s32 %v2153, %v2151
    %v2155 = vrot.slane %v2154, 4
    %v2156 = vadd.s32 %v2154, %v2155
    %v2157 = vrot.slane %v2156, 2
    %v2158 = vadd.s32 %v2156, %v2157
    %v2159 = vrot.slane %v2158, 1
    %v2160 = vadd.s32 %v2158, %v2159
    %s2161 = vtos %v2160
    %p2162 = scmp.le.s32.totalorder %s2161, 5
    %s2163 = scalar_select %p2162, %s2138, %s2059
    %s2164 = sor.u32 %s2085, 1024
    %s2165 = sxor.u32 %s2164, 2147483648
    %v2166 = vstv %s2165
    %vm2167 = vcmp.lt.s32.totalorder %v28, %v2166
    %v2168 = vsel %vm2167, 1, 0
    %v2169 = vand.u32 %v2168, 65535
    %v2170 = vshrl.u32 %v2168, 16
    %v2171 = vcvt.s32.f32 %v2169
    %v2172 = vcvt.s32.f32 %v2170
    %2173 = vadd.xlane.f32.xlu0 %v2171
    %v2174 = vpop.xlane.xlu0 %2173
    %2175 = vadd.xlane.f32.xlu0 %v2172
    %v2176 = vpop.xlane.xlu0 %2175
    %v2177 = vcvt.f32.s32 %v2174
    %v2178 = vcvt.f32.s32 %v2176
    %v2179 = vshll.u32 %v2178, 16
    %v2180 = vadd.s32 %v2179, %v2177
    %v2181 = vrot.slane %v2180, 4
    %v2182 = vadd.s32 %v2180, %v2181
    %v2183 = vrot.slane %v2182, 2
    %v2184 = vadd.s32 %v2182, %v2183
    %v2185 = vrot.slane %v2184, 1
    %v2186 = vadd.s32 %v2184, %v2185
    %s2187 = vtos %v2186
    %p2188 = scmp.le.s32.totalorder %s2187, 6
    %s2189 = scalar_select %p2188, %s2164, %s2085
    %s2190 = sor.u32 %s2111, 1024
    %s2191 = sxor.u32 %s2190, 2147483648
    %v2192 = vstv %s2191
    %vm2193 = vcmp.lt.s32.totalorder %v28, %v2192
    %v2194 = vsel %vm2193, 1, 0
    %v2195 = vand.u32 %v2194, 65535
    %v2196 = vshrl.u32 %v2194, 16
    %v2197 = vcvt.s32.f32 %v2195
    %v2198 = vcvt.s32.f32 %v2196
    %2199 = vadd.xlane.f32.xlu0 %v2197
    %v2200 = vpop.xlane.xlu0 %2199
    %2201 = vadd.xlane.f32.xlu0 %v2198
    %v2202 = vpop.xlane.xlu0 %2201
    %v2203 = vcvt.f32.s32 %v2200
    %v2204 = vcvt.f32.s32 %v2202
    %v2205 = vshll.u32 %v2204, 16
    %v2206 = vadd.s32 %v2205, %v2203
    %v2207 = vrot.slane %v2206, 4
    %v2208 = vadd.s32 %v2206, %v2207
    %v2209 = vrot.slane %v2208, 2
    %v2210 = vadd.s32 %v2208, %v2209
    %v2211 = vrot.slane %v2210, 1
    %v2212 = vadd.s32 %v2210, %v2211
    %s2213 = vtos %v2212
    %p2214 = scmp.le.s32.totalorder %s2213, 9
    %s2215 = scalar_select %p2214, %s2190, %s2111
    %s2216 = sor.u32 %s2137, 1024
    %s2217 = sxor.u32 %s2216, 2147483648
    %v2218 = vstv %s2217
    %vm2219 = vcmp.lt.s32.totalorder %v28, %v2218
    %v2220 = vsel %vm2219, 1, 0
    %v2221 = vand.u32 %v2220, 65535
    %v2222 = vshrl.u32 %v2220, 16
    %v2223 = vcvt.s32.f32 %v2221
    %v2224 = vcvt.s32.f32 %v2222
    %2225 = vadd.xlane.f32.xlu0 %v2223
    %v2226 = vpop.xlane.xlu0 %2225
    %2227 = vadd.xlane.f32.xlu0 %v2224
    %v2228 = vpop.xlane.xlu0 %2227
    %v2229 = vcvt.f32.s32 %v2226
    %v2230 = vcvt.f32.s32 %v2228
    %v2231 = vshll.u32 %v2230, 16
    %v2232 = vadd.s32 %v2231, %v2229
    %v2233 = vrot.slane %v2232, 4
    %v2234 = vadd.s32 %v2232, %v2233
    %v2235 = vrot.slane %v2234, 2
    %v2236 = vadd.s32 %v2234, %v2235
    %v2237 = vrot.slane %v2236, 1
    %v2238 = vadd.s32 %v2236, %v2237
    %s2239 = vtos %v2238
    %p2240 = scmp.le.s32.totalorder %s2239, 10
    %s2241 = scalar_select %p2240, %s2216, %s2137
    %s2242 = sor.u32 %s2163, 512
    %s2243 = sxor.u32 %s2242, 2147483648
    %v2244 = vstv %s2243
    %vm2245 = vcmp.lt.s32.totalorder %v28, %v2244
    %v2246 = vsel %vm2245, 1, 0
    %v2247 = vand.u32 %v2246, 65535
    %v2248 = vshrl.u32 %v2246, 16
    %v2249 = vcvt.s32.f32 %v2247
    %v2250 = vcvt.s32.f32 %v2248
    %2251 = vadd.xlane.f32.xlu0 %v2249
    %v2252 = vpop.xlane.xlu0 %2251
    %2253 = vadd.xlane.f32.xlu0 %v2250
    %v2254 = vpop.xlane.xlu0 %2253
    %v2255 = vcvt.f32.s32 %v2252
    %v2256 = vcvt.f32.s32 %v2254
    %v2257 = vshll.u32 %v2256, 16
    %v2258 = vadd.s32 %v2257, %v2255
    %v2259 = vrot.slane %v2258, 4
    %v2260 = vadd.s32 %v2258, %v2259
    %v2261 = vrot.slane %v2260, 2
    %v2262 = vadd.s32 %v2260, %v2261
    %v2263 = vrot.slane %v2262, 1
    %v2264 = vadd.s32 %v2262, %v2263
    %s2265 = vtos %v2264
    %p2266 = scmp.le.s32.totalorder %s2265, 5
    %s2267 = scalar_select %p2266, %s2242, %s2163
    %s2268 = sor.u32 %s2189, 512
    %s2269 = sxor.u32 %s2268, 2147483648
    %v2270 = vstv %s2269
    %vm2271 = vcmp.lt.s32.totalorder %v28, %v2270
    %v2272 = vsel %vm2271, 1, 0
    %v2273 = vand.u32 %v2272, 65535
    %v2274 = vshrl.u32 %v2272, 16
    %v2275 = vcvt.s32.f32 %v2273
    %v2276 = vcvt.s32.f32 %v2274
    %2277 = vadd.xlane.f32.xlu0 %v2275
    %v2278 = vpop.xlane.xlu0 %2277
    %2279 = vadd.xlane.f32.xlu0 %v2276
    %v2280 = vpop.xlane.xlu0 %2279
    %v2281 = vcvt.f32.s32 %v2278
    %v2282 = vcvt.f32.s32 %v2280
    %v2283 = vshll.u32 %v2282, 16
    %v2284 = vadd.s32 %v2283, %v2281
    %v2285 = vrot.slane %v2284, 4
    %v2286 = vadd.s32 %v2284, %v2285
    %v2287 = vrot.slane %v2286, 2
    %v2288 = vadd.s32 %v2286, %v2287
    %v2289 = vrot.slane %v2288, 1
    %v2290 = vadd.s32 %v2288, %v2289
    %s2291 = vtos %v2290
    %p2292 = scmp.le.s32.totalorder %s2291, 6
    %s2293 = scalar_select %p2292, %s2268, %s2189
    %s2294 = sor.u32 %s2215, 512
    %s2295 = sxor.u32 %s2294, 2147483648
    %v2296 = vstv %s2295
    %vm2297 = vcmp.lt.s32.totalorder %v28, %v2296
    %v2298 = vsel %vm2297, 1, 0
    %v2299 = vand.u32 %v2298, 65535
    %v2300 = vshrl.u32 %v2298, 16
    %v2301 = vcvt.s32.f32 %v2299
    %v2302 = vcvt.s32.f32 %v2300
    %2303 = vadd.xlane.f32.xlu0 %v2301
    %v2304 = vpop.xlane.xlu0 %2303
    %2305 = vadd.xlane.f32.xlu0 %v2302
    %v2306 = vpop.xlane.xlu0 %2305
    %v2307 = vcvt.f32.s32 %v2304
    %v2308 = vcvt.f32.s32 %v2306
    %v2309 = vshll.u32 %v2308, 16
    %v2310 = vadd.s32 %v2309, %v2307
    %v2311 = vrot.slane %v2310, 4
    %v2312 = vadd.s32 %v2310, %v2311
    %v2313 = vrot.slane %v2312, 2
    %v2314 = vadd.s32 %v2312, %v2313
    %v2315 = vrot.slane %v2314, 1
    %v2316 = vadd.s32 %v2314, %v2315
    %s2317 = vtos %v2316
    %p2318 = scmp.le.s32.totalorder %s2317, 9
    %s2319 = scalar_select %p2318, %s2294, %s2215
    %s2320 = sor.u32 %s2241, 512
    %s2321 = sxor.u32 %s2320, 2147483648
    %v2322 = vstv %s2321
    %vm2323 = vcmp.lt.s32.totalorder %v28, %v2322
    %v2324 = vsel %vm2323, 1, 0
    %v2325 = vand.u32 %v2324, 65535
    %v2326 = vshrl.u32 %v2324, 16
    %v2327 = vcvt.s32.f32 %v2325
    %v2328 = vcvt.s32.f32 %v2326
    %2329 = vadd.xlane.f32.xlu0 %v2327
    %v2330 = vpop.xlane.xlu0 %2329
    %2331 = vadd.xlane.f32.xlu0 %v2328
    %v2332 = vpop.xlane.xlu0 %2331
    %v2333 = vcvt.f32.s32 %v2330
    %v2334 = vcvt.f32.s32 %v2332
    %v2335 = vshll.u32 %v2334, 16
    %v2336 = vadd.s32 %v2335, %v2333
    %v2337 = vrot.slane %v2336, 4
    %v2338 = vadd.s32 %v2336, %v2337
    %v2339 = vrot.slane %v2338, 2
    %v2340 = vadd.s32 %v2338, %v2339
    %v2341 = vrot.slane %v2340, 1
    %v2342 = vadd.s32 %v2340, %v2341
    %s2343 = vtos %v2342
    %p2344 = scmp.le.s32.totalorder %s2343, 10
    %s2345 = scalar_select %p2344, %s2320, %s2241
    %s2346 = sor.u32 %s2267, 256
    %s2347 = sxor.u32 %s2346, 2147483648
    %v2348 = vstv %s2347
    %vm2349 = vcmp.lt.s32.totalorder %v28, %v2348
    %v2350 = vsel %vm2349, 1, 0
    %v2351 = vand.u32 %v2350, 65535
    %v2352 = vshrl.u32 %v2350, 16
    %v2353 = vcvt.s32.f32 %v2351
    %v2354 = vcvt.s32.f32 %v2352
    %2355 = vadd.xlane.f32.xlu0 %v2353
    %v2356 = vpop.xlane.xlu0 %2355
    %2357 = vadd.xlane.f32.xlu0 %v2354
    %v2358 = vpop.xlane.xlu0 %2357
    %v2359 = vcvt.f32.s32 %v2356
    %v2360 = vcvt.f32.s32 %v2358
    %v2361 = vshll.u32 %v2360, 16
    %v2362 = vadd.s32 %v2361, %v2359
    %v2363 = vrot.slane %v2362, 4
    %v2364 = vadd.s32 %v2362, %v2363
    %v2365 = vrot.slane %v2364, 2
    %v2366 = vadd.s32 %v2364, %v2365
    %v2367 = vrot.slane %v2366, 1
    %v2368 = vadd.s32 %v2366, %v2367
    %s2369 = vtos %v2368
    %p2370 = scmp.le.s32.totalorder %s2369, 5
    %s2371 = scalar_select %p2370, %s2346, %s2267
    %s2372 = sor.u32 %s2293, 256
    %s2373 = sxor.u32 %s2372, 2147483648
    %v2374 = vstv %s2373
    %vm2375 = vcmp.lt.s32.totalorder %v28, %v2374
    %v2376 = vsel %vm2375, 1, 0
    %v2377 = vand.u32 %v2376, 65535
    %v2378 = vshrl.u32 %v2376, 16
    %v2379 = vcvt.s32.f32 %v2377
    %v2380 = vcvt.s32.f32 %v2378
    %2381 = vadd.xlane.f32.xlu0 %v2379
    %v2382 = vpop.xlane.xlu0 %2381
    %2383 = vadd.xlane.f32.xlu0 %v2380
    %v2384 = vpop.xlane.xlu0 %2383
    %v2385 = vcvt.f32.s32 %v2382
    %v2386 = vcvt.f32.s32 %v2384
    %v2387 = vshll.u32 %v2386, 16
    %v2388 = vadd.s32 %v2387, %v2385
    %v2389 = vrot.slane %v2388, 4
    %v2390 = vadd.s32 %v2388, %v2389
    %v2391 = vrot.slane %v2390, 2
    %v2392 = vadd.s32 %v2390, %v2391
    %v2393 = vrot.slane %v2392, 1
    %v2394 = vadd.s32 %v2392, %v2393
    %s2395 = vtos %v2394
    %p2396 = scmp.le.s32.totalorder %s2395, 6
    %s2397 = scalar_select %p2396, %s2372, %s2293
    %s2398 = sor.u32 %s2319, 256
    %s2399 = sxor.u32 %s2398, 2147483648
    %v2400 = vstv %s2399
    %vm2401 = vcmp.lt.s32.totalorder %v28, %v2400
    %v2402 = vsel %vm2401, 1, 0
    %v2403 = vand.u32 %v2402, 65535
    %v2404 = vshrl.u32 %v2402, 16
    %v2405 = vcvt.s32.f32 %v2403
    %v2406 = vcvt.s32.f32 %v2404
    %2407 = vadd.xlane.f32.xlu0 %v2405
    %v2408 = vpop.xlane.xlu0 %2407
    %2409 = vadd.xlane.f32.xlu0 %v2406
    %v2410 = vpop.xlane.xlu0 %2409
    %v2411 = vcvt.f32.s32 %v2408
    %v2412 = vcvt.f32.s32 %v2410
    %v2413 = vshll.u32 %v2412, 16
    %v2414 = vadd.s32 %v2413, %v2411
    %v2415 = vrot.slane %v2414, 4
    %v2416 = vadd.s32 %v2414, %v2415
    %v2417 = vrot.slane %v2416, 2
    %v2418 = vadd.s32 %v2416, %v2417
    %v2419 = vrot.slane %v2418, 1
    %v2420 = vadd.s32 %v2418, %v2419
    %s2421 = vtos %v2420
    %p2422 = scmp.le.s32.totalorder %s2421, 9
    %s2423 = scalar_select %p2422, %s2398, %s2319
    %s2424 = sor.u32 %s2345, 256
    %s2425 = sxor.u32 %s2424, 2147483648
    %v2426 = vstv %s2425
    %vm2427 = vcmp.lt.s32.totalorder %v28, %v2426
    %v2428 = vsel %vm2427, 1, 0
    %v2429 = vand.u32 %v2428, 65535
    %v2430 = vshrl.u32 %v2428, 16
    %v2431 = vcvt.s32.f32 %v2429
    %v2432 = vcvt.s32.f32 %v2430
    %2433 = vadd.xlane.f32.xlu0 %v2431
    %v2434 = vpop.xlane.xlu0 %2433
    %2435 = vadd.xlane.f32.xlu0 %v2432
    %v2436 = vpop.xlane.xlu0 %2435
    %v2437 = vcvt.f32.s32 %v2434
    %v2438 = vcvt.f32.s32 %v2436
    %v2439 = vshll.u32 %v2438, 16
    %v2440 = vadd.s32 %v2439, %v2437
    %v2441 = vrot.slane %v2440, 4
    %v2442 = vadd.s32 %v2440, %v2441
    %v2443 = vrot.slane %v2442, 2
    %v2444 = vadd.s32 %v2442, %v2443
    %v2445 = vrot.slane %v2444, 1
    %v2446 = vadd.s32 %v2444, %v2445
    %s2447 = vtos %v2446
    %p2448 = scmp.le.s32.totalorder %s2447, 10
    %s2449 = scalar_select %p2448, %s2424, %s2345
    %s2450 = sor.u32 %s2371, 128
    %s2451 = sxor.u32 %s2450, 2147483648
    %v2452 = vstv %s2451
    %vm2453 = vcmp.lt.s32.totalorder %v28, %v2452
    %v2454 = vsel %vm2453, 1, 0
    %v2455 = vand.u32 %v2454, 65535
    %v2456 = vshrl.u32 %v2454, 16
    %v2457 = vcvt.s32.f32 %v2455
    %v2458 = vcvt.s32.f32 %v2456
    %2459 = vadd.xlane.f32.xlu0 %v2457
    %v2460 = vpop.xlane.xlu0 %2459
    %2461 = vadd.xlane.f32.xlu0 %v2458
    %v2462 = vpop.xlane.xlu0 %2461
    %v2463 = vcvt.f32.s32 %v2460
    %v2464 = vcvt.f32.s32 %v2462
    %v2465 = vshll.u32 %v2464, 16
    %v2466 = vadd.s32 %v2465, %v2463
    %v2467 = vrot.slane %v2466, 4
    %v2468 = vadd.s32 %v2466, %v2467
    %v2469 = vrot.slane %v2468, 2
    %v2470 = vadd.s32 %v2468, %v2469
    %v2471 = vrot.slane %v2470, 1
    %v2472 = vadd.s32 %v2470, %v2471
    %s2473 = vtos %v2472
    %p2474 = scmp.le.s32.totalorder %s2473, 5
    %s2475 = scalar_select %p2474, %s2450, %s2371
    %s2476 = sor.u32 %s2397, 128
    %s2477 = sxor.u32 %s2476, 2147483648
    %v2478 = vstv %s2477
    %vm2479 = vcmp.lt.s32.totalorder %v28, %v2478
    %v2480 = vsel %vm2479, 1, 0
    %v2481 = vand.u32 %v2480, 65535
    %v2482 = vshrl.u32 %v2480, 16
    %v2483 = vcvt.s32.f32 %v2481
    %v2484 = vcvt.s32.f32 %v2482
    %2485 = vadd.xlane.f32.xlu0 %v2483
    %v2486 = vpop.xlane.xlu0 %2485
    %2487 = vadd.xlane.f32.xlu0 %v2484
    %v2488 = vpop.xlane.xlu0 %2487
    %v2489 = vcvt.f32.s32 %v2486
    %v2490 = vcvt.f32.s32 %v2488
    %v2491 = vshll.u32 %v2490, 16
    %v2492 = vadd.s32 %v2491, %v2489
    %v2493 = vrot.slane %v2492, 4
    %v2494 = vadd.s32 %v2492, %v2493
    %v2495 = vrot.slane %v2494, 2
    %v2496 = vadd.s32 %v2494, %v2495
    %v2497 = vrot.slane %v2496, 1
    %v2498 = vadd.s32 %v2496, %v2497
    %s2499 = vtos %v2498
    %p2500 = scmp.le.s32.totalorder %s2499, 6
    %s2501 = scalar_select %p2500, %s2476, %s2397
    %s2502 = sor.u32 %s2423, 128
    %s2503 = sxor.u32 %s2502, 2147483648
    %v2504 = vstv %s2503
    %vm2505 = vcmp.lt.s32.totalorder %v28, %v2504
    %v2506 = vsel %vm2505, 1, 0
    %v2507 = vand.u32 %v2506, 65535
    %v2508 = vshrl.u32 %v2506, 16
    %v2509 = vcvt.s32.f32 %v2507
    %v2510 = vcvt.s32.f32 %v2508
    %2511 = vadd.xlane.f32.xlu0 %v2509
    %v2512 = vpop.xlane.xlu0 %2511
    %2513 = vadd.xlane.f32.xlu0 %v2510
    %v2514 = vpop.xlane.xlu0 %2513
    %v2515 = vcvt.f32.s32 %v2512
    %v2516 = vcvt.f32.s32 %v2514
    %v2517 = vshll.u32 %v2516, 16
    %v2518 = vadd.s32 %v2517, %v2515
    %v2519 = vrot.slane %v2518, 4
    %v2520 = vadd.s32 %v2518, %v2519
    %v2521 = vrot.slane %v2520, 2
    %v2522 = vadd.s32 %v2520, %v2521
    %v2523 = vrot.slane %v2522, 1
    %v2524 = vadd.s32 %v2522, %v2523
    %s2525 = vtos %v2524
    %p2526 = scmp.le.s32.totalorder %s2525, 9
    %s2527 = scalar_select %p2526, %s2502, %s2423
    %s2528 = sor.u32 %s2449, 128
    %s2529 = sxor.u32 %s2528, 2147483648
    %v2530 = vstv %s2529
    %vm2531 = vcmp.lt.s32.totalorder %v28, %v2530
    %v2532 = vsel %vm2531, 1, 0
    %v2533 = vand.u32 %v2532, 65535
    %v2534 = vshrl.u32 %v2532, 16
    %v2535 = vcvt.s32.f32 %v2533
    %v2536 = vcvt.s32.f32 %v2534
    %2537 = vadd.xlane.f32.xlu0 %v2535
    %v2538 = vpop.xlane.xlu0 %2537
    %2539 = vadd.xlane.f32.xlu0 %v2536
    %v2540 = vpop.xlane.xlu0 %2539
    %v2541 = vcvt.f32.s32 %v2538
    %v2542 = vcvt.f32.s32 %v2540
    %v2543 = vshll.u32 %v2542, 16
    %v2544 = vadd.s32 %v2543, %v2541
    %v2545 = vrot.slane %v2544, 4
    %v2546 = vadd.s32 %v2544, %v2545
    %v2547 = vrot.slane %v2546, 2
    %v2548 = vadd.s32 %v2546, %v2547
    %v2549 = vrot.slane %v2548, 1
    %v2550 = vadd.s32 %v2548, %v2549
    %s2551 = vtos %v2550
    %p2552 = scmp.le.s32.totalorder %s2551, 10
    %s2553 = scalar_select %p2552, %s2528, %s2449
    %s2554 = sor.u32 %s2475, 64
    %s2555 = sxor.u32 %s2554, 2147483648
    %v2556 = vstv %s2555
    %vm2557 = vcmp.lt.s32.totalorder %v28, %v2556
    %v2558 = vsel %vm2557, 1, 0
    %v2559 = vand.u32 %v2558, 65535
    %v2560 = vshrl.u32 %v2558, 16
    %v2561 = vcvt.s32.f32 %v2559
    %v2562 = vcvt.s32.f32 %v2560
    %2563 = vadd.xlane.f32.xlu0 %v2561
    %v2564 = vpop.xlane.xlu0 %2563
    %2565 = vadd.xlane.f32.xlu0 %v2562
    %v2566 = vpop.xlane.xlu0 %2565
    %v2567 = vcvt.f32.s32 %v2564
    %v2568 = vcvt.f32.s32 %v2566
    %v2569 = vshll.u32 %v2568, 16
    %v2570 = vadd.s32 %v2569, %v2567
    %v2571 = vrot.slane %v2570, 4
    %v2572 = vadd.s32 %v2570, %v2571
    %v2573 = vrot.slane %v2572, 2
    %v2574 = vadd.s32 %v2572, %v2573
    %v2575 = vrot.slane %v2574, 1
    %v2576 = vadd.s32 %v2574, %v2575
    %s2577 = vtos %v2576
    %p2578 = scmp.le.s32.totalorder %s2577, 5
    %s2579 = scalar_select %p2578, %s2554, %s2475
    %s2580 = sor.u32 %s2501, 64
    %s2581 = sxor.u32 %s2580, 2147483648
    %v2582 = vstv %s2581
    %vm2583 = vcmp.lt.s32.totalorder %v28, %v2582
    %v2584 = vsel %vm2583, 1, 0
    %v2585 = vand.u32 %v2584, 65535
    %v2586 = vshrl.u32 %v2584, 16
    %v2587 = vcvt.s32.f32 %v2585
    %v2588 = vcvt.s32.f32 %v2586
    %2589 = vadd.xlane.f32.xlu0 %v2587
    %v2590 = vpop.xlane.xlu0 %2589
    %2591 = vadd.xlane.f32.xlu0 %v2588
    %v2592 = vpop.xlane.xlu0 %2591
    %v2593 = vcvt.f32.s32 %v2590
    %v2594 = vcvt.f32.s32 %v2592
    %v2595 = vshll.u32 %v2594, 16
    %v2596 = vadd.s32 %v2595, %v2593
    %v2597 = vrot.slane %v2596, 4
    %v2598 = vadd.s32 %v2596, %v2597
    %v2599 = vrot.slane %v2598, 2
    %v2600 = vadd.s32 %v2598, %v2599
    %v2601 = vrot.slane %v2600, 1
    %v2602 = vadd.s32 %v2600, %v2601
    %s2603 = vtos %v2602
    %p2604 = scmp.le.s32.totalorder %s2603, 6
    %s2605 = scalar_select %p2604, %s2580, %s2501
    %s2606 = sor.u32 %s2527, 64
    %s2607 = sxor.u32 %s2606, 2147483648
    %v2608 = vstv %s2607
    %vm2609 = vcmp.lt.s32.totalorder %v28, %v2608
    %v2610 = vsel %vm2609, 1, 0
    %v2611 = vand.u32 %v2610, 65535
    %v2612 = vshrl.u32 %v2610, 16
    %v2613 = vcvt.s32.f32 %v2611
    %v2614 = vcvt.s32.f32 %v2612
    %2615 = vadd.xlane.f32.xlu0 %v2613
    %v2616 = vpop.xlane.xlu0 %2615
    %2617 = vadd.xlane.f32.xlu0 %v2614
    %v2618 = vpop.xlane.xlu0 %2617
    %v2619 = vcvt.f32.s32 %v2616
    %v2620 = vcvt.f32.s32 %v2618
    %v2621 = vshll.u32 %v2620, 16
    %v2622 = vadd.s32 %v2621, %v2619
    %v2623 = vrot.slane %v2622, 4
    %v2624 = vadd.s32 %v2622, %v2623
    %v2625 = vrot.slane %v2624, 2
    %v2626 = vadd.s32 %v2624, %v2625
    %v2627 = vrot.slane %v2626, 1
    %v2628 = vadd.s32 %v2626, %v2627
    %s2629 = vtos %v2628
    %p2630 = scmp.le.s32.totalorder %s2629, 9
    %s2631 = scalar_select %p2630, %s2606, %s2527
    %s2632 = sor.u32 %s2553, 64
    %s2633 = sxor.u32 %s2632, 2147483648
    %v2634 = vstv %s2633
    %vm2635 = vcmp.lt.s32.totalorder %v28, %v2634
    %v2636 = vsel %vm2635, 1, 0
    %v2637 = vand.u32 %v2636, 65535
    %v2638 = vshrl.u32 %v2636, 16
    %v2639 = vcvt.s32.f32 %v2637
    %v2640 = vcvt.s32.f32 %v2638
    %2641 = vadd.xlane.f32.xlu0 %v2639
    %v2642 = vpop.xlane.xlu0 %2641
    %2643 = vadd.xlane.f32.xlu0 %v2640
    %v2644 = vpop.xlane.xlu0 %2643
    %v2645 = vcvt.f32.s32 %v2642
    %v2646 = vcvt.f32.s32 %v2644
    %v2647 = vshll.u32 %v2646, 16
    %v2648 = vadd.s32 %v2647, %v2645
    %v2649 = vrot.slane %v2648, 4
    %v2650 = vadd.s32 %v2648, %v2649
    %v2651 = vrot.slane %v2650, 2
    %v2652 = vadd.s32 %v2650, %v2651
    %v2653 = vrot.slane %v2652, 1
    %v2654 = vadd.s32 %v2652, %v2653
    %s2655 = vtos %v2654
    %p2656 = scmp.le.s32.totalorder %s2655, 10
    %s2657 = scalar_select %p2656, %s2632, %s2553
    %s2658 = sor.u32 %s2579, 32
    %s2659 = sxor.u32 %s2658, 2147483648
    %v2660 = vstv %s2659
    %vm2661 = vcmp.lt.s32.totalorder %v28, %v2660
    %v2662 = vsel %vm2661, 1, 0
    %v2663 = vand.u32 %v2662, 65535
    %v2664 = vshrl.u32 %v2662, 16
    %v2665 = vcvt.s32.f32 %v2663
    %v2666 = vcvt.s32.f32 %v2664
    %2667 = vadd.xlane.f32.xlu0 %v2665
    %v2668 = vpop.xlane.xlu0 %2667
    %2669 = vadd.xlane.f32.xlu0 %v2666
    %v2670 = vpop.xlane.xlu0 %2669
    %v2671 = vcvt.f32.s32 %v2668
    %v2672 = vcvt.f32.s32 %v2670
    %v2673 = vshll.u32 %v2672, 16
    %v2674 = vadd.s32 %v2673, %v2671
    %v2675 = vrot.slane %v2674, 4
    %v2676 = vadd.s32 %v2674, %v2675
    %v2677 = vrot.slane %v2676, 2
    %v2678 = vadd.s32 %v2676, %v2677
    %v2679 = vrot.slane %v2678, 1
    %v2680 = vadd.s32 %v2678, %v2679
    %s2681 = vtos %v2680
    %p2682 = scmp.le.s32.totalorder %s2681, 5
    %s2683 = scalar_select %p2682, %s2658, %s2579
    %s2684 = sor.u32 %s2605, 32
    %s2685 = sxor.u32 %s2684, 2147483648
    %v2686 = vstv %s2685
    %vm2687 = vcmp.lt.s32.totalorder %v28, %v2686
    %v2688 = vsel %vm2687, 1, 0
    %v2689 = vand.u32 %v2688, 65535
    %v2690 = vshrl.u32 %v2688, 16
    %v2691 = vcvt.s32.f32 %v2689
    %v2692 = vcvt.s32.f32 %v2690
    %2693 = vadd.xlane.f32.xlu0 %v2691
    %v2694 = vpop.xlane.xlu0 %2693
    %2695 = vadd.xlane.f32.xlu0 %v2692
    %v2696 = vpop.xlane.xlu0 %2695
    %v2697 = vcvt.f32.s32 %v2694
    %v2698 = vcvt.f32.s32 %v2696
    %v2699 = vshll.u32 %v2698, 16
    %v2700 = vadd.s32 %v2699, %v2697
    %v2701 = vrot.slane %v2700, 4
    %v2702 = vadd.s32 %v2700, %v2701
    %v2703 = vrot.slane %v2702, 2
    %v2704 = vadd.s32 %v2702, %v2703
    %v2705 = vrot.slane %v2704, 1
    %v2706 = vadd.s32 %v2704, %v2705
    %s2707 = vtos %v2706
    %p2708 = scmp.le.s32.totalorder %s2707, 6
    %s2709 = scalar_select %p2708, %s2684, %s2605
    %s2710 = sor.u32 %s2631, 32
    %s2711 = sxor.u32 %s2710, 2147483648
    %v2712 = vstv %s2711
    %vm2713 = vcmp.lt.s32.totalorder %v28, %v2712
    %v2714 = vsel %vm2713, 1, 0
    %v2715 = vand.u32 %v2714, 65535
    %v2716 = vshrl.u32 %v2714, 16
    %v2717 = vcvt.s32.f32 %v2715
    %v2718 = vcvt.s32.f32 %v2716
    %2719 = vadd.xlane.f32.xlu0 %v2717
    %v2720 = vpop.xlane.xlu0 %2719
    %2721 = vadd.xlane.f32.xlu0 %v2718
    %v2722 = vpop.xlane.xlu0 %2721
    %v2723 = vcvt.f32.s32 %v2720
    %v2724 = vcvt.f32.s32 %v2722
    %v2725 = vshll.u32 %v2724, 16
    %v2726 = vadd.s32 %v2725, %v2723
    %v2727 = vrot.slane %v2726, 4
    %v2728 = vadd.s32 %v2726, %v2727
    %v2729 = vrot.slane %v2728, 2
    %v2730 = vadd.s32 %v2728, %v2729
    %v2731 = vrot.slane %v2730, 1
    %v2732 = vadd.s32 %v2730, %v2731
    %s2733 = vtos %v2732
    %p2734 = scmp.le.s32.totalorder %s2733, 9
    %s2735 = scalar_select %p2734, %s2710, %s2631
    %s2736 = sor.u32 %s2657, 32
    %s2737 = sxor.u32 %s2736, 2147483648
    %v2738 = vstv %s2737
    %vm2739 = vcmp.lt.s32.totalorder %v28, %v2738
    %v2740 = vsel %vm2739, 1, 0
    %v2741 = vand.u32 %v2740, 65535
    %v2742 = vshrl.u32 %v2740, 16
    %v2743 = vcvt.s32.f32 %v2741
    %v2744 = vcvt.s32.f32 %v2742
    %2745 = vadd.xlane.f32.xlu0 %v2743
    %v2746 = vpop.xlane.xlu0 %2745
    %2747 = vadd.xlane.f32.xlu0 %v2744
    %v2748 = vpop.xlane.xlu0 %2747
    %v2749 = vcvt.f32.s32 %v2746
    %v2750 = vcvt.f32.s32 %v2748
    %v2751 = vshll.u32 %v2750, 16
    %v2752 = vadd.s32 %v2751, %v2749
    %v2753 = vrot.slane %v2752, 4
    %v2754 = vadd.s32 %v2752, %v2753
    %v2755 = vrot.slane %v2754, 2
    %v2756 = vadd.s32 %v2754, %v2755
    %v2757 = vrot.slane %v2756, 1
    %v2758 = vadd.s32 %v2756, %v2757
    %s2759 = vtos %v2758
    %p2760 = scmp.le.s32.totalorder %s2759, 10
    %s2761 = scalar_select %p2760, %s2736, %s2657
    %s2762 = sor.u32 %s2683, 16
    %s2763 = sxor.u32 %s2762, 2147483648
    %v2764 = vstv %s2763
    %vm2765 = vcmp.lt.s32.totalorder %v28, %v2764
    %v2766 = vsel %vm2765, 1, 0
    %v2767 = vand.u32 %v2766, 65535
    %v2768 = vshrl.u32 %v2766, 16
    %v2769 = vcvt.s32.f32 %v2767
    %v2770 = vcvt.s32.f32 %v2768
    %2771 = vadd.xlane.f32.xlu0 %v2769
    %v2772 = vpop.xlane.xlu0 %2771
    %2773 = vadd.xlane.f32.xlu0 %v2770
    %v2774 = vpop.xlane.xlu0 %2773
    %v2775 = vcvt.f32.s32 %v2772
    %v2776 = vcvt.f32.s32 %v2774
    %v2777 = vshll.u32 %v2776, 16
    %v2778 = vadd.s32 %v2777, %v2775
    %v2779 = vrot.slane %v2778, 4
    %v2780 = vadd.s32 %v2778, %v2779
    %v2781 = vrot.slane %v2780, 2
    %v2782 = vadd.s32 %v2780, %v2781
    %v2783 = vrot.slane %v2782, 1
    %v2784 = vadd.s32 %v2782, %v2783
    %s2785 = vtos %v2784
    %p2786 = scmp.le.s32.totalorder %s2785, 5
    %s2787 = scalar_select %p2786, %s2762, %s2683
    %s2788 = sor.u32 %s2709, 16
    %s2789 = sxor.u32 %s2788, 2147483648
    %v2790 = vstv %s2789
    %vm2791 = vcmp.lt.s32.totalorder %v28, %v2790
    %v2792 = vsel %vm2791, 1, 0
    %v2793 = vand.u32 %v2792, 65535
    %v2794 = vshrl.u32 %v2792, 16
    %v2795 = vcvt.s32.f32 %v2793
    %v2796 = vcvt.s32.f32 %v2794
    %2797 = vadd.xlane.f32.xlu0 %v2795
    %v2798 = vpop.xlane.xlu0 %2797
    %2799 = vadd.xlane.f32.xlu0 %v2796
    %v2800 = vpop.xlane.xlu0 %2799
    %v2801 = vcvt.f32.s32 %v2798
    %v2802 = vcvt.f32.s32 %v2800
    %v2803 = vshll.u32 %v2802, 16
    %v2804 = vadd.s32 %v2803, %v2801
    %v2805 = vrot.slane %v2804, 4
    %v2806 = vadd.s32 %v2804, %v2805
    %v2807 = vrot.slane %v2806, 2
    %v2808 = vadd.s32 %v2806, %v2807
    %v2809 = vrot.slane %v2808, 1
    %v2810 = vadd.s32 %v2808, %v2809
    %s2811 = vtos %v2810
    %p2812 = scmp.le.s32.totalorder %s2811, 6
    %s2813 = scalar_select %p2812, %s2788, %s2709
    %s2814 = sor.u32 %s2735, 16
    %s2815 = sxor.u32 %s2814, 2147483648
    %v2816 = vstv %s2815
    %vm2817 = vcmp.lt.s32.totalorder %v28, %v2816
    %v2818 = vsel %vm2817, 1, 0
    %v2819 = vand.u32 %v2818, 65535
    %v2820 = vshrl.u32 %v2818, 16
    %v2821 = vcvt.s32.f32 %v2819
    %v2822 = vcvt.s32.f32 %v2820
    %2823 = vadd.xlane.f32.xlu0 %v2821
    %v2824 = vpop.xlane.xlu0 %2823
    %2825 = vadd.xlane.f32.xlu0 %v2822
    %v2826 = vpop.xlane.xlu0 %2825
    %v2827 = vcvt.f32.s32 %v2824
    %v2828 = vcvt.f32.s32 %v2826
    %v2829 = vshll.u32 %v2828, 16
    %v2830 = vadd.s32 %v2829, %v2827
    %v2831 = vrot.slane %v2830, 4
    %v2832 = vadd.s32 %v2830, %v2831
    %v2833 = vrot.slane %v2832, 2
    %v2834 = vadd.s32 %v2832, %v2833
    %v2835 = vrot.slane %v2834, 1
    %v2836 = vadd.s32 %v2834, %v2835
    %s2837 = vtos %v2836
    %p2838 = scmp.le.s32.totalorder %s2837, 9
    %s2839 = scalar_select %p2838, %s2814, %s2735
    %s2840 = sor.u32 %s2761, 16
    %s2841 = sxor.u32 %s2840, 2147483648
    %v2842 = vstv %s2841
    %vm2843 = vcmp.lt.s32.totalorder %v28, %v2842
    %v2844 = vsel %vm2843, 1, 0
    %v2845 = vand.u32 %v2844, 65535
    %v2846 = vshrl.u32 %v2844, 16
    %v2847 = vcvt.s32.f32 %v2845
    %v2848 = vcvt.s32.f32 %v2846
    %2849 = vadd.xlane.f32.xlu0 %v2847
    %v2850 = vpop.xlane.xlu0 %2849
    %2851 = vadd.xlane.f32.xlu0 %v2848
    %v2852 = vpop.xlane.xlu0 %2851
    %v2853 = vcvt.f32.s32 %v2850
    %v2854 = vcvt.f32.s32 %v2852
    %v2855 = vshll.u32 %v2854, 16
    %v2856 = vadd.s32 %v2855, %v2853
    %v2857 = vrot.slane %v2856, 4
    %v2858 = vadd.s32 %v2856, %v2857
    %v2859 = vrot.slane %v2858, 2
    %v2860 = vadd.s32 %v2858, %v2859
    %v2861 = vrot.slane %v2860, 1
    %v2862 = vadd.s32 %v2860, %v2861
    %s2863 = vtos %v2862
    %p2864 = scmp.le.s32.totalorder %s2863, 10
    %s2865 = scalar_select %p2864, %s2840, %s2761
    %s2866 = sor.u32 %s2787, 8
    %s2867 = sxor.u32 %s2866, 2147483648
    %v2868 = vstv %s2867
    %vm2869 = vcmp.lt.s32.totalorder %v28, %v2868
    %v2870 = vsel %vm2869, 1, 0
    %v2871 = vand.u32 %v2870, 65535
    %v2872 = vshrl.u32 %v2870, 16
    %v2873 = vcvt.s32.f32 %v2871
    %v2874 = vcvt.s32.f32 %v2872
    %2875 = vadd.xlane.f32.xlu0 %v2873
    %v2876 = vpop.xlane.xlu0 %2875
    %2877 = vadd.xlane.f32.xlu0 %v2874
    %v2878 = vpop.xlane.xlu0 %2877
    %v2879 = vcvt.f32.s32 %v2876
    %v2880 = vcvt.f32.s32 %v2878
    %v2881 = vshll.u32 %v2880, 16
    %v2882 = vadd.s32 %v2881, %v2879
    %v2883 = vrot.slane %v2882, 4
    %v2884 = vadd.s32 %v2882, %v2883
    %v2885 = vrot.slane %v2884, 2
    %v2886 = vadd.s32 %v2884, %v2885
    %v2887 = vrot.slane %v2886, 1
    %v2888 = vadd.s32 %v2886, %v2887
    %s2889 = vtos %v2888
    %p2890 = scmp.le.s32.totalorder %s2889, 5
    %s2891 = scalar_select %p2890, %s2866, %s2787
    %s2892 = sor.u32 %s2813, 8
    %s2893 = sxor.u32 %s2892, 2147483648
    %v2894 = vstv %s2893
    %vm2895 = vcmp.lt.s32.totalorder %v28, %v2894
    %v2896 = vsel %vm2895, 1, 0
    %v2897 = vand.u32 %v2896, 65535
    %v2898 = vshrl.u32 %v2896, 16
    %v2899 = vcvt.s32.f32 %v2897
    %v2900 = vcvt.s32.f32 %v2898
    %2901 = vadd.xlane.f32.xlu0 %v2899
    %v2902 = vpop.xlane.xlu0 %2901
    %2903 = vadd.xlane.f32.xlu0 %v2900
    %v2904 = vpop.xlane.xlu0 %2903
    %v2905 = vcvt.f32.s32 %v2902
    %v2906 = vcvt.f32.s32 %v2904
    %v2907 = vshll.u32 %v2906, 16
    %v2908 = vadd.s32 %v2907, %v2905
    %v2909 = vrot.slane %v2908, 4
    %v2910 = vadd.s32 %v2908, %v2909
    %v2911 = vrot.slane %v2910, 2
    %v2912 = vadd.s32 %v2910, %v2911
    %v2913 = vrot.slane %v2912, 1
    %v2914 = vadd.s32 %v2912, %v2913
    %s2915 = vtos %v2914
    %p2916 = scmp.le.s32.totalorder %s2915, 6
    %s2917 = scalar_select %p2916, %s2892, %s2813
    %s2918 = sor.u32 %s2839, 8
    %s2919 = sxor.u32 %s2918, 2147483648
    %v2920 = vstv %s2919
    %vm2921 = vcmp.lt.s32.totalorder %v28, %v2920
    %v2922 = vsel %vm2921, 1, 0
    %v2923 = vand.u32 %v2922, 65535
    %v2924 = vshrl.u32 %v2922, 16
    %v2925 = vcvt.s32.f32 %v2923
    %v2926 = vcvt.s32.f32 %v2924
    %2927 = vadd.xlane.f32.xlu0 %v2925
    %v2928 = vpop.xlane.xlu0 %2927
    %2929 = vadd.xlane.f32.xlu0 %v2926
    %v2930 = vpop.xlane.xlu0 %2929
    %v2931 = vcvt.f32.s32 %v2928
    %v2932 = vcvt.f32.s32 %v2930
    %v2933 = vshll.u32 %v2932, 16
    %v2934 = vadd.s32 %v2933, %v2931
    %v2935 = vrot.slane %v2934, 4
    %v2936 = vadd.s32 %v2934, %v2935
    %v2937 = vrot.slane %v2936, 2
    %v2938 = vadd.s32 %v2936, %v2937
    %v2939 = vrot.slane %v2938, 1
    %v2940 = vadd.s32 %v2938, %v2939
    %s2941 = vtos %v2940
    %p2942 = scmp.le.s32.totalorder %s2941, 9
    %s2943 = scalar_select %p2942, %s2918, %s2839
    %s2944 = sor.u32 %s2865, 8
    %s2945 = sxor.u32 %s2944, 2147483648
    %v2946 = vstv %s2945
    %vm2947 = vcmp.lt.s32.totalorder %v28, %v2946
    %v2948 = vsel %vm2947, 1, 0
    %v2949 = vand.u32 %v2948, 65535
    %v2950 = vshrl.u32 %v2948, 16
    %v2951 = vcvt.s32.f32 %v2949
    %v2952 = vcvt.s32.f32 %v2950
    %2953 = vadd.xlane.f32.xlu0 %v2951
    %v2954 = vpop.xlane.xlu0 %2953
    %2955 = vadd.xlane.f32.xlu0 %v2952
    %v2956 = vpop.xlane.xlu0 %2955
    %v2957 = vcvt.f32.s32 %v2954
    %v2958 = vcvt.f32.s32 %v2956
    %v2959 = vshll.u32 %v2958, 16
    %v2960 = vadd.s32 %v2959, %v2957
    %v2961 = vrot.slane %v2960, 4
    %v2962 = vadd.s32 %v2960, %v2961
    %v2963 = vrot.slane %v2962, 2
    %v2964 = vadd.s32 %v2962, %v2963
    %v2965 = vrot.slane %v2964, 1
    %v2966 = vadd.s32 %v2964, %v2965
    %s2967 = vtos %v2966
    %p2968 = scmp.le.s32.totalorder %s2967, 10
    %s2969 = scalar_select %p2968, %s2944, %s2865
    %s2970 = sor.u32 %s2891, 4
    %s2971 = sxor.u32 %s2970, 2147483648
    %v2972 = vstv %s2971
    %vm2973 = vcmp.lt.s32.totalorder %v28, %v2972
    %v2974 = vsel %vm2973, 1, 0
    %v2975 = vand.u32 %v2974, 65535
    %v2976 = vshrl.u32 %v2974, 16
    %v2977 = vcvt.s32.f32 %v2975
    %v2978 = vcvt.s32.f32 %v2976
    %2979 = vadd.xlane.f32.xlu0 %v2977
    %v2980 = vpop.xlane.xlu0 %2979
    %2981 = vadd.xlane.f32.xlu0 %v2978
    %v2982 = vpop.xlane.xlu0 %2981
    %v2983 = vcvt.f32.s32 %v2980
    %v2984 = vcvt.f32.s32 %v2982
    %v2985 = vshll.u32 %v2984, 16
    %v2986 = vadd.s32 %v2985, %v2983
    %v2987 = vrot.slane %v2986, 4
    %v2988 = vadd.s32 %v2986, %v2987
    %v2989 = vrot.slane %v2988, 2
    %v2990 = vadd.s32 %v2988, %v2989
    %v2991 = vrot.slane %v2990, 1
    %v2992 = vadd.s32 %v2990, %v2991
    %s2993 = vtos %v2992
    %p2994 = scmp.le.s32.totalorder %s2993, 5
    %s2995 = scalar_select %p2994, %s2970, %s2891
    %s2996 = sor.u32 %s2917, 4
    %s2997 = sxor.u32 %s2996, 2147483648
    %v2998 = vstv %s2997
    %vm2999 = vcmp.lt.s32.totalorder %v28, %v2998
    %v3000 = vsel %vm2999, 1, 0
    %v3001 = vand.u32 %v3000, 65535
    %v3002 = vshrl.u32 %v3000, 16
    %v3003 = vcvt.s32.f32 %v3001
    %v3004 = vcvt.s32.f32 %v3002
    %3005 = vadd.xlane.f32.xlu0 %v3003
    %v3006 = vpop.xlane.xlu0 %3005
    %3007 = vadd.xlane.f32.xlu0 %v3004
    %v3008 = vpop.xlane.xlu0 %3007
    %v3009 = vcvt.f32.s32 %v3006
    %v3010 = vcvt.f32.s32 %v3008
    %v3011 = vshll.u32 %v3010, 16
    %v3012 = vadd.s32 %v3011, %v3009
    %v3013 = vrot.slane %v3012, 4
    %v3014 = vadd.s32 %v3012, %v3013
    %v3015 = vrot.slane %v3014, 2
    %v3016 = vadd.s32 %v3014, %v3015
    %v3017 = vrot.slane %v3016, 1
    %v3018 = vadd.s32 %v3016, %v3017
    %s3019 = vtos %v3018
    %p3020 = scmp.le.s32.totalorder %s3019, 6
    %s3021 = scalar_select %p3020, %s2996, %s2917
    %s3022 = sor.u32 %s2943, 4
    %s3023 = sxor.u32 %s3022, 2147483648
    %v3024 = vstv %s3023
    %vm3025 = vcmp.lt.s32.totalorder %v28, %v3024
    %v3026 = vsel %vm3025, 1, 0
    %v3027 = vand.u32 %v3026, 65535
    %v3028 = vshrl.u32 %v3026, 16
    %v3029 = vcvt.s32.f32 %v3027
    %v3030 = vcvt.s32.f32 %v3028
    %3031 = vadd.xlane.f32.xlu0 %v3029
    %v3032 = vpop.xlane.xlu0 %3031
    %3033 = vadd.xlane.f32.xlu0 %v3030
    %v3034 = vpop.xlane.xlu0 %3033
    %v3035 = vcvt.f32.s32 %v3032
    %v3036 = vcvt.f32.s32 %v3034
    %v3037 = vshll.u32 %v3036, 16
    %v3038 = vadd.s32 %v3037, %v3035
    %v3039 = vrot.slane %v3038, 4
    %v3040 = vadd.s32 %v3038, %v3039
    %v3041 = vrot.slane %v3040, 2
    %v3042 = vadd.s32 %v3040, %v3041
    %v3043 = vrot.slane %v3042, 1
    %v3044 = vadd.s32 %v3042, %v3043
    %s3045 = vtos %v3044
    %p3046 = scmp.le.s32.totalorder %s3045, 9
    %s3047 = scalar_select %p3046, %s3022, %s2943
    %s3048 = sor.u32 %s2969, 4
    %s3049 = sxor.u32 %s3048, 2147483648
    %v3050 = vstv %s3049
    %vm3051 = vcmp.lt.s32.totalorder %v28, %v3050
    %v3052 = vsel %vm3051, 1, 0
    %v3053 = vand.u32 %v3052, 65535
    %v3054 = vshrl.u32 %v3052, 16
    %v3055 = vcvt.s32.f32 %v3053
    %v3056 = vcvt.s32.f32 %v3054
    %3057 = vadd.xlane.f32.xlu0 %v3055
    %v3058 = vpop.xlane.xlu0 %3057
    %3059 = vadd.xlane.f32.xlu0 %v3056
    %v3060 = vpop.xlane.xlu0 %3059
    %v3061 = vcvt.f32.s32 %v3058
    %v3062 = vcvt.f32.s32 %v3060
    %v3063 = vshll.u32 %v3062, 16
    %v3064 = vadd.s32 %v3063, %v3061
    %v3065 = vrot.slane %v3064, 4
    %v3066 = vadd.s32 %v3064, %v3065
    %v3067 = vrot.slane %v3066, 2
    %v3068 = vadd.s32 %v3066, %v3067
    %v3069 = vrot.slane %v3068, 1
    %v3070 = vadd.s32 %v3068, %v3069
    %s3071 = vtos %v3070
    %p3072 = scmp.le.s32.totalorder %s3071, 10
    %s3073 = scalar_select %p3072, %s3048, %s2969
    %s3074 = sor.u32 %s2995, 2
    %s3075 = sxor.u32 %s3074, 2147483648
    %v3076 = vstv %s3075
    %vm3077 = vcmp.lt.s32.totalorder %v28, %v3076
    %v3078 = vsel %vm3077, 1, 0
    %v3079 = vand.u32 %v3078, 65535
    %v3080 = vshrl.u32 %v3078, 16
    %v3081 = vcvt.s32.f32 %v3079
    %v3082 = vcvt.s32.f32 %v3080
    %3083 = vadd.xlane.f32.xlu0 %v3081
    %v3084 = vpop.xlane.xlu0 %3083
    %3085 = vadd.xlane.f32.xlu0 %v3082
    %v3086 = vpop.xlane.xlu0 %3085
    %v3087 = vcvt.f32.s32 %v3084
    %v3088 = vcvt.f32.s32 %v3086
    %v3089 = vshll.u32 %v3088, 16
    %v3090 = vadd.s32 %v3089, %v3087
    %v3091 = vrot.slane %v3090, 4
    %v3092 = vadd.s32 %v3090, %v3091
    %v3093 = vrot.slane %v3092, 2
    %v3094 = vadd.s32 %v3092, %v3093
    %v3095 = vrot.slane %v3094, 1
    %v3096 = vadd.s32 %v3094, %v3095
    %s3097 = vtos %v3096
    %p3098 = scmp.le.s32.totalorder %s3097, 5
    %s3099 = scalar_select %p3098, %s3074, %s2995
    %s3100 = sor.u32 %s3021, 2
    %s3101 = sxor.u32 %s3100, 2147483648
    %v3102 = vstv %s3101
    %vm3103 = vcmp.lt.s32.totalorder %v28, %v3102
    %v3104 = vsel %vm3103, 1, 0
    %v3105 = vand.u32 %v3104, 65535
    %v3106 = vshrl.u32 %v3104, 16
    %v3107 = vcvt.s32.f32 %v3105
    %v3108 = vcvt.s32.f32 %v3106
    %3109 = vadd.xlane.f32.xlu0 %v3107
    %v3110 = vpop.xlane.xlu0 %3109
    %3111 = vadd.xlane.f32.xlu0 %v3108
    %v3112 = vpop.xlane.xlu0 %3111
    %v3113 = vcvt.f32.s32 %v3110
    %v3114 = vcvt.f32.s32 %v3112
    %v3115 = vshll.u32 %v3114, 16
    %v3116 = vadd.s32 %v3115, %v3113
    %v3117 = vrot.slane %v3116, 4
    %v3118 = vadd.s32 %v3116, %v3117
    %v3119 = vrot.slane %v3118, 2
    %v3120 = vadd.s32 %v3118, %v3119
    %v3121 = vrot.slane %v3120, 1
    %v3122 = vadd.s32 %v3120, %v3121
    %s3123 = vtos %v3122
    %p3124 = scmp.le.s32.totalorder %s3123, 6
    %s3125 = scalar_select %p3124, %s3100, %s3021
    %s3126 = sor.u32 %s3047, 2
    %s3127 = sxor.u32 %s3126, 2147483648
    %v3128 = vstv %s3127
    %vm3129 = vcmp.lt.s32.totalorder %v28, %v3128
    %v3130 = vsel %vm3129, 1, 0
    %v3131 = vand.u32 %v3130, 65535
    %v3132 = vshrl.u32 %v3130, 16
    %v3133 = vcvt.s32.f32 %v3131
    %v3134 = vcvt.s32.f32 %v3132
    %3135 = vadd.xlane.f32.xlu0 %v3133
    %v3136 = vpop.xlane.xlu0 %3135
    %3137 = vadd.xlane.f32.xlu0 %v3134
    %v3138 = vpop.xlane.xlu0 %3137
    %v3139 = vcvt.f32.s32 %v3136
    %v3140 = vcvt.f32.s32 %v3138
    %v3141 = vshll.u32 %v3140, 16
    %v3142 = vadd.s32 %v3141, %v3139
    %v3143 = vrot.slane %v3142, 4
    %v3144 = vadd.s32 %v3142, %v3143
    %v3145 = vrot.slane %v3144, 2
    %v3146 = vadd.s32 %v3144, %v3145
    %v3147 = vrot.slane %v3146, 1
    %v3148 = vadd.s32 %v3146, %v3147
    %s3149 = vtos %v3148
    %p3150 = scmp.le.s32.totalorder %s3149, 9
    %s3151 = scalar_select %p3150, %s3126, %s3047
    %s3152 = sor.u32 %s3073, 2
    %s3153 = sxor.u32 %s3152, 2147483648
    %v3154 = vstv %s3153
    %vm3155 = vcmp.lt.s32.totalorder %v28, %v3154
    %v3156 = vsel %vm3155, 1, 0
    %v3157 = vand.u32 %v3156, 65535
    %v3158 = vshrl.u32 %v3156, 16
    %v3159 = vcvt.s32.f32 %v3157
    %v3160 = vcvt.s32.f32 %v3158
    %3161 = vadd.xlane.f32.xlu0 %v3159
    %v3162 = vpop.xlane.xlu0 %3161
    %3163 = vadd.xlane.f32.xlu0 %v3160
    %v3164 = vpop.xlane.xlu0 %3163
    %v3165 = vcvt.f32.s32 %v3162
    %v3166 = vcvt.f32.s32 %v3164
    %v3167 = vshll.u32 %v3166, 16
    %v3168 = vadd.s32 %v3167, %v3165
    %v3169 = vrot.slane %v3168, 4
    %v3170 = vadd.s32 %v3168, %v3169
    %v3171 = vrot.slane %v3170, 2
    %v3172 = vadd.s32 %v3170, %v3171
    %v3173 = vrot.slane %v3172, 1
    %v3174 = vadd.s32 %v3172, %v3173
    %s3175 = vtos %v3174
    %p3176 = scmp.le.s32.totalorder %s3175, 10
    %s3177 = scalar_select %p3176, %s3152, %s3073
    %s3178 = sor.u32 %s3099, 1
    %s3179 = sxor.u32 %s3178, 2147483648
    %v3180 = vstv %s3179
    %vm3181 = vcmp.lt.s32.totalorder %v28, %v3180
    %v3182 = vsel %vm3181, 1, 0
    %v3183 = vand.u32 %v3182, 65535
    %v3184 = vshrl.u32 %v3182, 16
    %v3185 = vcvt.s32.f32 %v3183
    %v3186 = vcvt.s32.f32 %v3184
    %3187 = vadd.xlane.f32.xlu0 %v3185
    %v3188 = vpop.xlane.xlu0 %3187
    %3189 = vadd.xlane.f32.xlu0 %v3186
    %v3190 = vpop.xlane.xlu0 %3189
    %v3191 = vcvt.f32.s32 %v3188
    %v3192 = vcvt.f32.s32 %v3190
    %v3193 = vshll.u32 %v3192, 16
    %v3194 = vadd.s32 %v3193, %v3191
    %v3195 = vrot.slane %v3194, 4
    %v3196 = vadd.s32 %v3194, %v3195
    %v3197 = vrot.slane %v3196, 2
    %v3198 = vadd.s32 %v3196, %v3197
    %v3199 = vrot.slane %v3198, 1
    %v3200 = vadd.s32 %v3198, %v3199
    %s3201 = vtos %v3200
    %p3202 = scmp.le.s32.totalorder %s3201, 5
    %s3203 = scalar_select %p3202, %s3178, %s3099
    %s3204 = sor.u32 %s3125, 1
    %s3205 = sxor.u32 %s3204, 2147483648
    %v3206 = vstv %s3205
    %vm3207 = vcmp.lt.s32.totalorder %v28, %v3206
    %v3208 = vsel %vm3207, 1, 0
    %v3209 = vand.u32 %v3208, 65535
    %v3210 = vshrl.u32 %v3208, 16
    %v3211 = vcvt.s32.f32 %v3209
    %v3212 = vcvt.s32.f32 %v3210
    %3213 = vadd.xlane.f32.xlu0 %v3211
    %v3214 = vpop.xlane.xlu0 %3213
    %3215 = vadd.xlane.f32.xlu0 %v3212
    %v3216 = vpop.xlane.xlu0 %3215
    %v3217 = vcvt.f32.s32 %v3214
    %v3218 = vcvt.f32.s32 %v3216
    %v3219 = vshll.u32 %v3218, 16
    %v3220 = vadd.s32 %v3219, %v3217
    %v3221 = vrot.slane %v3220, 4
    %v3222 = vadd.s32 %v3220, %v3221
    %v3223 = vrot.slane %v3222, 2
    %v3224 = vadd.s32 %v3222, %v3223
    %v3225 = vrot.slane %v3224, 1
    %v3226 = vadd.s32 %v3224, %v3225
    %s3227 = vtos %v3226
    %p3228 = scmp.le.s32.totalorder %s3227, 6
    %s3229 = scalar_select %p3228, %s3204, %s3125
    %s3230 = sor.u32 %s3151, 1
    %s3231 = sxor.u32 %s3230, 2147483648
    %v3232 = vstv %s3231
    %vm3233 = vcmp.lt.s32.totalorder %v28, %v3232
    %v3234 = vsel %vm3233, 1, 0
    %v3235 = vand.u32 %v3234, 65535
    %v3236 = vshrl.u32 %v3234, 16
    %v3237 = vcvt.s32.f32 %v3235
    %v3238 = vcvt.s32.f32 %v3236
    %3239 = vadd.xlane.f32.xlu0 %v3237
    %v3240 = vpop.xlane.xlu0 %3239
    %3241 = vadd.xlane.f32.xlu0 %v3238
    %v3242 = vpop.xlane.xlu0 %3241
    %v3243 = vcvt.f32.s32 %v3240
    %v3244 = vcvt.f32.s32 %v3242
    %v3245 = vshll.u32 %v3244, 16
    %v3246 = vadd.s32 %v3245, %v3243
    %v3247 = vrot.slane %v3246, 4
    %v3248 = vadd.s32 %v3246, %v3247
    %v3249 = vrot.slane %v3248, 2
    %v3250 = vadd.s32 %v3248, %v3249
    %v3251 = vrot.slane %v3250, 1
    %v3252 = vadd.s32 %v3250, %v3251
    %s3253 = vtos %v3252
    %p3254 = scmp.le.s32.totalorder %s3253, 9
    %s3255 = scalar_select %p3254, %s3230, %s3151
    %s3256 = sor.u32 %s3177, 1
    %s3257 = sxor.u32 %s3256, 2147483648
    %v3258 = vstv %s3257
    %vm3259 = vcmp.lt.s32.totalorder %v28, %v3258
    %v3260 = vsel %vm3259, 1, 0
    %v3261 = vand.u32 %v3260, 65535
    %v3262 = vshrl.u32 %v3260, 16
    %v3263 = vcvt.s32.f32 %v3261
    %v3264 = vcvt.s32.f32 %v3262
    %3265 = vadd.xlane.f32.xlu0 %v3263
    %v3266 = vpop.xlane.xlu0 %3265
    %3267 = vadd.xlane.f32.xlu0 %v3264
    %v3268 = vpop.xlane.xlu0 %3267
    %v3269 = vcvt.f32.s32 %v3266
    %v3270 = vcvt.f32.s32 %v3268
    %v3271 = vshll.u32 %v3270, 16
    %v3272 = vadd.s32 %v3271, %v3269
    %v3273 = vrot.slane %v3272, 4
    %v3274 = vadd.s32 %v3272, %v3273
    %v3275 = vrot.slane %v3274, 2
    %v3276 = vadd.s32 %v3274, %v3275
    %v3277 = vrot.slane %v3276, 1
    %v3278 = vadd.s32 %v3276, %v3277
    %s3279 = vtos %v3278
    %p3280 = scmp.le.s32.totalorder %s3279, 10
    %s3281 = scalar_select %p3280, %s3256, %s3177
    %s3282 = sxor.u32 %s3203, 2147483648
    %v3283 = vstv %s3282
    %vm3284 = vcmp.eq.s32.totalorder %v28, %v3283
    %v3285 = vsel %vm3284, %v24, -inf
    %3286 = vmax.xlane.f32.xlu0 %v3285
    %v3287 = vpop.xlane.xlu0 %3286
    %v3288 = vrot.slane %v3287, 4
    %v3289 = vmax.f32 %v3287, %v3288
    %v3290 = vrot.slane %v3289, 2
    %v3291 = vmax.f32 %v3289, %v3290
    %v3292 = vrot.slane %v3291, 1
    %v3293 = vmax.f32 %v3291, %v3292
    %s3294 = vtos %v3293
    %s3295 = sxor.u32 %s3229, 2147483648
    %v3296 = vstv %s3295
    %vm3297 = vcmp.eq.s32.totalorder %v28, %v3296
    %v3298 = vsel %vm3297, %v24, -inf
    %3299 = vmax.xlane.f32.xlu0 %v3298
    %v3300 = vpop.xlane.xlu0 %3299
    %v3301 = vrot.slane %v3300, 4
    %v3302 = vmax.f32 %v3300, %v3301
    %v3303 = vrot.slane %v3302, 2
    %v3304 = vmax.f32 %v3302, %v3303
    %v3305 = vrot.slane %v3304, 1
    %v3306 = vmax.f32 %v3304, %v3305
    %s3307 = vtos %v3306
    %s3308 = sxor.u32 %s3255, 2147483648
    %v3309 = vstv %s3308
    %vm3310 = vcmp.eq.s32.totalorder %v28, %v3309
    %v3311 = vsel %vm3310, %v24, -inf
    %3312 = vmax.xlane.f32.xlu0 %v3311
    %v3313 = vpop.xlane.xlu0 %3312
    %v3314 = vrot.slane %v3313, 4
    %v3315 = vmax.f32 %v3313, %v3314
    %v3316 = vrot.slane %v3315, 2
    %v3317 = vmax.f32 %v3315, %v3316
    %v3318 = vrot.slane %v3317, 1
    %v3319 = vmax.f32 %v3317, %v3318
    %s3320 = vtos %v3319
    %s3321 = sxor.u32 %s3281, 2147483648
    %v3322 = vstv %s3321
    %vm3323 = vcmp.eq.s32.totalorder %v28, %v3322
    %v3324 = vsel %vm3323, %v24, -inf
    %3325 = vmax.xlane.f32.xlu0 %v3324
    %v3326 = vpop.xlane.xlu0 %3325
    %v3327 = vrot.slane %v3326, 4
    %v3328 = vmax.f32 %v3326, %v3327
    %v3329 = vrot.slane %v3328, 2
    %v3330 = vmax.f32 %v3328, %v3329
    %v3331 = vrot.slane %v3330, 1
    %v3332 = vmax.f32 %v3330, %v3331
    %s3333 = vtos %v3332
    %v3334 = vld [vmem:[%s1] sm:$0x3]
    %s3335 = ssub.f32 %s3307, %s3294
    %s3336 = smul.f32 %s3335, 0.25
    %s3337 = sadd.f32 %s3294, %s3336
    %v3338 = vstv %s3337
    %v3339 = vsub.f32 %v3338, %v3334
    %v3340 = vmul.f32 %v3339, 0.35
    %v3341 = vmul.f32 %v3339, -0.65
    %v3342 = vmax.f32 %v3340, %v3341
    %vm3343 = vcmask 1024
    %v3344 = vsel %vm3343, %v3342, 0.0
    %3345 = vadd.xlane.f32.xlu0 %v3344
    %v3346 = vpop.xlane.xlu0 %3345
    %v3347 = vrot.slane %v3346, 4
    %v3348 = vadd.f32 %v3346, %v3347
    %v3349 = vrot.slane %v3348, 2
    %v3350 = vadd.f32 %v3348, %v3349
    %v3351 = vrot.slane %v3350, 1
    %v3352 = vadd.f32 %v3350, %v3351
    %s3353 = vtos %v3352
    %v3354 = vrcp.pop 2.0
    %s3355 = vtos %v3354
    %s3356 = smul.f32 %s3353, %s3355
    %s3357 = sadd.f32 %s3356, 0.0
    %s3358 = ssub.f32 %s3333, %s3320
    %s3359 = smul.f32 %s3358, 0.75
    %s3360 = sadd.f32 %s3320, %s3359
    %v3361 = vstv %s3360
    %v3362 = vsub.f32 %v3361, %v3334
    %v3363 = vmul.f32 %v3362, 0.65
    %v3364 = vmul.f32 %v3362, -0.35
    %v3365 = vmax.f32 %v3363, %v3364
    %3367 = vrot.lane.b32.xlu0 %v3365, 127
    %v3368 = vpop.permute.xlu0 %3367
    %v3370 = vsel %vm3343, %v3368, 0.0
    %3371 = vadd.xlane.f32.xlu0 %v3370
    %v3372 = vpop.xlane.xlu0 %3371
    %v3373 = vrot.slane %v3372, 4
    %v3374 = vadd.f32 %v3372, %v3373
    %v3375 = vrot.slane %v3374, 2
    %v3376 = vadd.f32 %v3374, %v3375
    %v3377 = vrot.slane %v3376, 1
    %v3378 = vadd.f32 %v3376, %v3377
    %s3379 = vtos %v3378
    %v3380 = vrcp.pop 2.0
    %s3381 = vtos %v3380
    %s3382 = smul.f32 %s3379, %s3381
    %s3383 = sadd.f32 %s3357, %s3382
    %v3384 = vstv %s3383
    %vm3385 = vcmask 0
    %3386 = vst.msk [vmem:[#allocation5] sm:$0x1] %vm3385, %v3384
    // Predicated region
    $region14: #{tpu_custom_call.1} parent=1 // pred_check
      _
    $region15: #{tpu_custom_call.1} parent=1 // pred_check_branch
      %3388 = sbr.rel (0) target = $region17
    $region16: #{tpu_custom_call.1} parent=1 // pred_region
      %s3390 = ssub.s32 16, 16
      %3391 = vsyncadd [#allocation4], %s3390
      %s3393 = sshll.u32 [#allocation5], 4
      %s3394 = int_to_ptr.vmem [resolvable:$true] %s3393
      %3396 = dma.vmem_to_hbm [thread:$0]  %s3394, 16, %s2, [#allocation4]
    $region17: #{tpu_custom_call.1} parent=1 // pred_fallthru
      _
    // Predicated region
    $region18: #{tpu_custom_call.1} parent=1 // pred_check
      _
    $region19: #{tpu_custom_call.1} parent=1 // pred_check_branch
      %3398 = sbr.rel (0) target = $region21
    $region20: #{tpu_custom_call.1} parent=1 // pred_region
      %3399 = dma.done [#allocation4], 16
    $region21: #{tpu_custom_call.1} parent=1 // pred_fallthru
      _
    %3400 = vsyncpa [#allocation3], 1
    %3401 = vsyncpa [#allocation4], 1

</llo_original>
